<compile_context>
chip_gen: v7x
topology: tpu7x:2x2x1
jax: 0.10.0
libtpu: 0.0.40
codegen_flags: <defaults>
</compile_context>

<pallas_src>
import functools

import jax
import jax.numpy as jnp
from jax import lax
from jax.experimental import pallas as pl
from jax.experimental.pallas import tpu as pltpu


LANE = 128
SUBLANE = 8


def _round_up(n, m):
    return ((n + m - 1) // m) * m


def _pack_gate_cols(w, h, hp):
    """(..., 4*h) in PyTorch gate order [i,f,g,o] -> (..., 4*hp) in [i,f,o,g],
    each gate zero-padded to hp lanes (exact: padded pre-activations are 0)."""
    lead = w.shape[:-1]
    w4 = w.reshape(lead + (4, h))
    w4 = jnp.take(w4, jnp.array([0, 1, 3, 2]), axis=-2)   # [i,f,g,o]->[i,f,o,g]
    if hp != h:
        pad = [(0, 0)] * (w4.ndim - 1) + [(0, hp - h)]
        w4 = jnp.pad(w4, pad)
    return w4.reshape(lead + (4 * hp,))


def _pad_rows(w, h, hp):
    """(h, X) -> (hp, X): zero-pad input rows."""
    if hp == h:
        return w
    return jnp.pad(w, ((0, hp - h), (0, 0)))


# ----------------------------------------------------------------------------
# Fused multi-layer LSTM recurrence kernel (single invocation, no grid).
#   gx0_ref : (T, Bp, 4*Hp)   layer-0 x@W_ih + b, time-major (precomputed, XLA)
#   wih_ref : (max(L-1,1), Hp, 4*Hp)   input-proj weights for layers 1..L-1
#   b_ref   : (max(L-1,1), 1, 4*Hp)    biases for layers 1..L-1
#   whh_ref : (L, Hp, 4*Hp)            recurrent weights, all layers
#   hT_ref  : (L, Bp, Hp)              OUTPUT: final hidden state per layer
#   seq_ref : (T or 1, Bp, Hp)         VMEM scratch: hidden seq of current layer
#   gx_ref  : (T or 1, Bp, 4*Hp)       VMEM scratch: gate pre-acts, layers >= 1
# ----------------------------------------------------------------------------
def _lstm_fused_kernel(gx0_ref, wih_ref, b_ref, whh_ref, hT_ref,
                       seq_ref, gx_ref, *,
                       num_layers, hidden_pad, seq_len, batch_pad):
    hp = hidden_pad

    def make_step(gx_src_ref, whh_view, store_seq):
        def step(t, carry):
            h, c = carry
            gates = gx_src_ref[t] + jnp.dot(
                h, whh_view[...], preferred_element_type=jnp.float32)
            # Gate layout [i, f, o, g]: the three sigmoid gates are one
            # contiguous 3*Hp slice; sigmoid(x) = 0.5*tanh(0.5*x) + 0.5
            # (single EUP push instead of exp + reciprocal per gate).
            sig = 0.5 * jnp.tanh(0.5 * gates[:, 0:3 * hp]) + 0.5
            i_g = sig[:, 0 * hp:1 * hp]
            f_g = sig[:, 1 * hp:2 * hp]
            o_g = sig[:, 2 * hp:3 * hp]
            g_g = jnp.tanh(gates[:, 3 * hp:4 * hp])
            c_new = f_g * c + i_g * g_g
            h_new = o_g * jnp.tanh(c_new)
            if store_seq:
                seq_ref[t] = h_new           # lane/sublane-dense VMEM store
            return h_new, c_new
        return step

    for layer in range(num_layers):
        whh_view = whh_ref.at[layer]         # static slice -> zero-cost view
        if layer == 0:
            gx_src = gx0_ref
        else:
            # Fused inter-layer input projection: one (T*Bp, Hp) x (Hp, 4Hp)
            # MXU matmul into VMEM scratch (no HBM round-trip between layers).
            seq_flat = seq_ref[...].reshape(seq_len * batch_pad, hp)
            gx = jnp.dot(seq_flat, wih_ref[layer - 1],
                         preferred_element_type=jnp.float32) + b_ref[layer - 1]
            gx_ref[...] = gx.reshape(seq_len, batch_pad, 4 * hp)
            gx_src = gx_ref

        # Last layer: only h_T is consumed downstream -> skip the seq stores.
        store_seq = layer < num_layers - 1
        step = make_step(gx_src, whh_view, store_seq)
        init = (jnp.zeros((batch_pad, hp), jnp.float32),
                jnp.zeros((batch_pad, hp), jnp.float32))

        if seq_len <= 32:
            # Fully unrolled: h/c stay in vregs, LLO sees the whole chain.
            carry = init
            for t in range(seq_len):
                carry = step(t, carry)
            h_fin, _ = carry
        else:
            # Partial unroll gives cross-step scheduling visibility without
            # blowing up vreg pressure.
            h_fin, _ = lax.fori_loop(0, seq_len, step, init, unroll=4)

        hT_ref[layer] = h_fin


def _lstm_fused(gx0, w_ih_stack, b_stack, w_hh_stack, *,
                num_layers, hidden_pad, seq_len, batch_pad):
    kernel = functools.partial(_lstm_fused_kernel,
                               num_layers=num_layers, hidden_pad=hidden_pad,
                               seq_len=seq_len, batch_pad=batch_pad)
    scr_t = seq_len if num_layers > 1 else 1   # scratches unused when L == 1
    return pl.pallas_call(
        kernel,
        out_shape=jax.ShapeDtypeStruct((num_layers, batch_pad, hidden_pad),
                                       jnp.float32),
        in_specs=[pl.BlockSpec(memory_space=pltpu.MemorySpace.VMEM)] * 4,
        out_specs=pl.BlockSpec(memory_space=pltpu.MemorySpace.VMEM),
        scratch_shapes=[
            pltpu.VMEM((scr_t, batch_pad, hidden_pad), jnp.float32),
            pltpu.VMEM((scr_t, batch_pad, 4 * hidden_pad), jnp.float32),
        ],
    )(gx0, w_ih_stack, b_stack, w_hh_stack)


# ----------------------------------------------------------------------------
# Parameters (PyTorch nn.LSTM / nn.Linear shapes, stored transposed for x @ W).
# ----------------------------------------------------------------------------
def init_params(key, num_classes, input_size, hidden_size, num_layers):
    params = {"layers": []}
    k_lstm = 1.0 / jnp.sqrt(jnp.float32(hidden_size))
    for layer in range(num_layers):
        in_dim = input_size if layer == 0 else hidden_size
        key, k1, k2, k3, k4 = jax.random.split(key, 5)
        w_ih = jax.random.uniform(k1, (in_dim, 4 * hidden_size),
                                  minval=-k_lstm, maxval=k_lstm, dtype=jnp.float32)
        w_hh = jax.random.uniform(k2, (hidden_size, 4 * hidden_size),
                                  minval=-k_lstm, maxval=k_lstm, dtype=jnp.float32)
        b_ih = jax.random.uniform(k3, (4 * hidden_size,),
                                  minval=-k_lstm, maxval=k_lstm, dtype=jnp.float32)
        b_hh = jax.random.uniform(k4, (4 * hidden_size,),
                                  minval=-k_lstm, maxval=k_lstm, dtype=jnp.float32)
        params["layers"].append(
            dict(w_ih=w_ih, w_hh=w_hh, b=(b_ih + b_hh)[None, :]))
    k_fc = 1.0 / jnp.sqrt(jnp.float32(hidden_size))
    key, k1, k2 = jax.random.split(key, 3)
    params["fc_w"] = jax.random.uniform(k1, (hidden_size, num_classes),
                                        minval=-k_fc, maxval=k_fc, dtype=jnp.float32)
    params["fc_b"] = jax.random.uniform(k2, (num_classes,),
                                        minval=-k_fc, maxval=k_fc,
                                        dtype=jnp.float32)[None, :]
    return params


# ----------------------------------------------------------------------------
# Full module forward: LSTM(num_classes, input_size, hidden_size, num_layers)
# ----------------------------------------------------------------------------
def lstm_forward(params, x, hidden_size):
    """x: (batch, seq, input_size) -> (num_layers*batch, num_classes)."""
    x = x.astype(jnp.float32)
    B, T, I = x.shape
    H = hidden_size
    Hp = _round_up(H, LANE)       # per-gate padded hidden size (lane aligned)
    Bp = _round_up(B, SUBLANE)    # fill sublanes / MXU rows (padded rows exact)
    L = len(params["layers"])

    # ---- Layer-0 input projection: transpose the SMALL x (B*T*I elems), then
    # one large (T*Bp, I) x (I, 4Hp) matmul in plain XLA (no gx transpose).
    xt = jnp.transpose(x, (1, 0, 2))                                 # (T, B, I)
    if Bp != B:
        xt = jnp.pad(xt, ((0, 0), (0, Bp - B), (0, 0)))
    lp0 = params["layers"][0]
    w_ih0 = _pack_gate_cols(lp0["w_ih"], H, Hp)                      # (I, 4Hp)
    b0 = _pack_gate_cols(lp0["b"], H, Hp)                            # (1, 4Hp)
    gx0 = (xt.reshape(T * Bp, I) @ w_ih0 + b0).reshape(T, Bp, 4 * Hp)

    # ---- Stacked, gate-packed weights for the fused kernel.
    w_hh_stack = jnp.stack([
        _pack_gate_cols(_pad_rows(lp["w_hh"], H, Hp), H, Hp)
        for lp in params["layers"]])                                 # (L, Hp, 4Hp)
    if L > 1:
        w_ih_stack = jnp.stack([
            _pack_gate_cols(_pad_rows(lp["w_ih"], H, Hp), H, Hp)
            for lp in params["layers"][1:]])                         # (L-1, Hp, 4Hp)
        b_stack = jnp.stack([
            _pack_gate_cols(lp["b"], H, Hp)
            for lp in params["layers"][1:]])                         # (L-1, 1, 4Hp)
    else:
        w_ih_stack = jnp.zeros((1, Hp, 4 * Hp), jnp.float32)
        b_stack = jnp.zeros((1, 1, 4 * Hp), jnp.float32)

    hT = _lstm_fused(gx0, w_ih_stack, b_stack, w_hh_stack,
                     num_layers=L, hidden_pad=Hp, seq_len=T, batch_pad=Bp)

    # (L, Bp, Hp) -> drop batch/hidden padding -> (L*B, H), layer-major
    # like PyTorch h_out.view(-1, H).
    h_out = hT[:, :B, :H].reshape(L * B, H)
    # Final FC is tiny: plain XLA (a pallas_call here is pure launch overhead).
    return h_out @ params["fc_w"] + params["fc_b"]


if __name__ == "__main__":
    num_classes, input_size, hidden_size, num_layers = 4, 8, 32, 2
    batch, seq_len = 2, 8

    key = jax.random.PRNGKey(0)
    key, pkey, xkey = jax.random.split(key, 3)
    params = init_params(pkey, num_classes, input_size, hidden_size, num_layers)
    x = jax.random.normal(xkey, (batch, seq_len, input_size), dtype=jnp.float32)

    fwd = jax.jit(lambda p, xx: lstm_forward(p, xx, hidden_size))
    out = jax.block_until_ready(fwd(params, x))
    assert out.shape == (num_layers * batch, num_classes), out.shape
    print("KERNEL_OK")
</pallas_src>

<mosaic_0001>
module attributes {stable_mosaic.version = 11 : i64} {
  func.func @_lstm_fused_kernel(%arg0: memref<8x8x512xf32, #tpu.memory_space<vmem>>, %arg1: memref<1x128x512xf32, #tpu.memory_space<vmem>>, %arg2: memref<1x1x512xf32, #tpu.memory_space<vmem>>, %arg3: memref<2x128x512xf32, #tpu.memory_space<vmem>>, %arg4: memref<2x8x128xf32, #tpu.memory_space<vmem>>, %arg5: memref<8x8x128xf32, #tpu.memory_space<vmem>>, %arg6: memref<8x8x512xf32, #tpu.memory_space<vmem>>) attributes {dimension_semantics = [], scalar_prefetch = 0 : i64, scratch_operands = 2 : i64, tpu.core_type = #tpu.core_type<tc>} {
    %cst = arith.constant 0.000000e+00 : f32
    %0 = vector.broadcast %cst : f32 to vector<8x128xf32>
    %cst_0 = arith.constant 0.000000e+00 : f32
    %1 = vector.broadcast %cst_0 : f32 to vector<8x128xf32>
    %c0 = arith.constant 0 : index
    %c0_1 = arith.constant 0 : index
    %c0_2 = arith.constant 0 : index
    %2 = vector.load %arg0[%c0, %c0_1, %c0_2] : memref<8x8x512xf32, #tpu.memory_space<vmem>>, vector<1x8x512xf32>
    %3 = vector.shape_cast %2 : vector<1x8x512xf32> to vector<8x512xf32>
    %c0_3 = arith.constant 0 : index
    %c0_4 = arith.constant 0 : index
    %c0_5 = arith.constant 0 : index
    %4 = vector.load %arg3[%c0_3, %c0_4, %c0_5] : memref<2x128x512xf32, #tpu.memory_space<vmem>>, vector<1x128x512xf32>
    %5 = vector.shape_cast %4 : vector<1x128x512xf32> to vector<128x512xf32>
    %cst_6 = arith.constant dense<0.000000e+00> : vector<8x512xf32>
    %6 = tpu.matmul %0, %5, %cst_6 {dimension_numbers = #tpu.dot_dimension_numbers<[1], [0], [0], [1], [0, 0, 1, 1], [], []>} : vector<8x128xf32>, vector<128x512xf32>, vector<8x512xf32> -> vector<8x512xf32>
    %7 = arith.addf %3, %6 : vector<8x512xf32>
    %8 = vector.extract_strided_slice %7 {offsets = [0, 0], sizes = [8, 384], strides = [1, 1]} : vector<8x512xf32> to vector<8x384xf32>
    %cst_7 = arith.constant 5.000000e-01 : f32
    %9 = vector.broadcast %cst_7 : f32 to vector<8x384xf32>
    %10 = arith.mulf %9, %8 : vector<8x384xf32>
    %11 = math.tanh %10 : vector<8x384xf32>
    %cst_8 = arith.constant 5.000000e-01 : f32
    %12 = vector.broadcast %cst_8 : f32 to vector<8x384xf32>
    %13 = arith.mulf %12, %11 : vector<8x384xf32>
    %cst_9 = arith.constant 5.000000e-01 : f32
    %14 = vector.broadcast %cst_9 : f32 to vector<8x384xf32>
    %15 = arith.addf %13, %14 : vector<8x384xf32>
    %16 = vector.extract_strided_slice %15 {offsets = [0, 0], sizes = [8, 128], strides = [1, 1]} : vector<8x384xf32> to vector<8x128xf32>
    %17 = vector.extract_strided_slice %15 {offsets = [0, 128], sizes = [8, 128], strides = [1, 1]} : vector<8x384xf32> to vector<8x128xf32>
    %18 = vector.extract_strided_slice %15 {offsets = [0, 256], sizes = [8, 128], strides = [1, 1]} : vector<8x384xf32> to vector<8x128xf32>
    %19 = vector.extract_strided_slice %7 {offsets = [0, 384], sizes = [8, 128], strides = [1, 1]} : vector<8x512xf32> to vector<8x128xf32>
    %20 = math.tanh %19 : vector<8x128xf32>
    %21 = arith.mulf %17, %1 : vector<8x128xf32>
    %22 = arith.mulf %16, %20 : vector<8x128xf32>
    %23 = arith.addf %21, %22 : vector<8x128xf32>
    %24 = math.tanh %23 : vector<8x128xf32>
    %25 = arith.mulf %18, %24 : vector<8x128xf32>
    %c0_10 = arith.constant 0 : index
    %c0_11 = arith.constant 0 : index
    %c0_12 = arith.constant 0 : index
    %26 = vector.load %arg5[%c0_10, %c0_11, %c0_12] : memref<8x8x128xf32, #tpu.memory_space<vmem>>, vector<1x8x128xf32>
    %27 = vector.shape_cast %26 : vector<1x8x128xf32> to vector<8x128xf32>
    %28 = vector.shape_cast %25 : vector<8x128xf32> to vector<1x8x128xf32>
    tpu.vector_store %arg5[%c0_10, %c0_11, %c0_12], %28 {strides = array<i32>} : memref<8x8x128xf32, #tpu.memory_space<vmem>>, vector<1x8x128xf32>,
    %c1 = arith.constant 1 : index
    %c0_13 = arith.constant 0 : index
    %c0_14 = arith.constant 0 : index
    %29 = vector.load %arg0[%c1, %c0_13, %c0_14] : memref<8x8x512xf32, #tpu.memory_space<vmem>>, vector<1x8x512xf32>
    %30 = vector.shape_cast %29 : vector<1x8x512xf32> to vector<8x512xf32>
    %c0_15 = arith.constant 0 : index
    %c0_16 = arith.constant 0 : index
    %c0_17 = arith.constant 0 : index
    %31 = vector.load %arg3[%c0_15, %c0_16, %c0_17] : memref<2x128x512xf32, #tpu.memory_space<vmem>>, vector<1x128x512xf32>
    %32 = vector.shape_cast %31 : vector<1x128x512xf32> to vector<128x512xf32>
    %cst_18 = arith.constant dense<0.000000e+00> : vector<8x512xf32>
    %33 = tpu.matmul %25, %32, %cst_18 {dimension_numbers = #tpu.dot_dimension_numbers<[1], [0], [0], [1], [0, 0, 1, 1], [], []>} : vector<8x128xf32>, vector<128x512xf32>, vector<8x512xf32> -> vector<8x512xf32>
    %34 = arith.addf %30, %33 : vector<8x512xf32>
    %35 = vector.extract_strided_slice %34 {offsets = [0, 0], sizes = [8, 384], strides = [1, 1]} : vector<8x512xf32> to vector<8x384xf32>
    %cst_19 = arith.constant 5.000000e-01 : f32
    %36 = vector.broadcast %cst_19 : f32 to vector<8x384xf32>
    %37 = arith.mulf %36, %35 : vector<8x384xf32>
    %38 = math.tanh %37 : vector<8x384xf32>
    %cst_20 = arith.constant 5.000000e-01 : f32
    %39 = vector.broadcast %cst_20 : f32 to vector<8x384xf32>
    %40 = arith.mulf %39, %38 : vector<8x384xf32>
    %cst_21 = arith.constant 5.000000e-01 : f32
    %41 = vector.broadcast %cst_21 : f32 to vector<8x384xf32>
    %42 = arith.addf %40, %41 : vector<8x384xf32>
    %43 = vector.extract_strided_slice %42 {offsets = [0, 0], sizes = [8, 128], strides = [1, 1]} : vector<8x384xf32> to vector<8x128xf32>
    %44 = vector.extract_strided_slice %42 {offsets = [0, 128], sizes = [8, 128], strides = [1, 1]} : vector<8x384xf32> to vector<8x128xf32>
    %45 = vector.extract_strided_slice %42 {offsets = [0, 256], sizes = [8, 128], strides = [1, 1]} : vector<8x384xf32> to vector<8x128xf32>
    %46 = vector.extract_strided_slice %34 {offsets = [0, 384], sizes = [8, 128], strides = [1, 1]} : vector<8x512xf32> to vector<8x128xf32>
    %47 = math.tanh %46 : vector<8x128xf32>
    %48 = arith.mulf %44, %23 : vector<8x128xf32>
    %49 = arith.mulf %43, %47 : vector<8x128xf32>
    %50 = arith.addf %48, %49 : vector<8x128xf32>
    %51 = math.tanh %50 : vector<8x128xf32>
    %52 = arith.mulf %45, %51 : vector<8x128xf32>
    %c1_22 = arith.constant 1 : index
    %c0_23 = arith.constant 0 : index
    %c0_24 = arith.constant 0 : index
    %53 = vector.load %arg5[%c1_22, %c0_23, %c0_24] : memref<8x8x128xf32, #tpu.memory_space<vmem>>, vector<1x8x128xf32>
    %54 = vector.shape_cast %53 : vector<1x8x128xf32> to vector<8x128xf32>
    %55 = vector.shape_cast %52 : vector<8x128xf32> to vector<1x8x128xf32>
    tpu.vector_store %arg5[%c1_22, %c0_23, %c0_24], %55 {strides = array<i32>} : memref<8x8x128xf32, #tpu.memory_space<vmem>>, vector<1x8x128xf32>,
    %c2 = arith.constant 2 : index
    %c0_25 = arith.constant 0 : index
    %c0_26 = arith.constant 0 : index
    %56 = vector.load %arg0[%c2, %c0_25, %c0_26] : memref<8x8x512xf32, #tpu.memory_space<vmem>>, vector<1x8x512xf32>
    %57 = vector.shape_cast %56 : vector<1x8x512xf32> to vector<8x512xf32>
    %c0_27 = arith.constant 0 : index
    %c0_28 = arith.constant 0 : index
    %c0_29 = arith.constant 0 : index
    %58 = vector.load %arg3[%c0_27, %c0_28, %c0_29] : memref<2x128x512xf32, #tpu.memory_space<vmem>>, vector<1x128x512xf32>
    %59 = vector.shape_cast %58 : vector<1x128x512xf32> to vector<128x512xf32>
    %cst_30 = arith.constant dense<0.000000e+00> : vector<8x512xf32>
    %60 = tpu.matmul %52, %59, %cst_30 {dimension_numbers = #tpu.dot_dimension_numbers<[1], [0], [0], [1], [0, 0, 1, 1], [], []>} : vector<8x128xf32>, vector<128x512xf32>, vector<8x512xf32> -> vector<8x512xf32>
    %61 = arith.addf %57, %60 : vector<8x512xf32>
    %62 = vector.extract_strided_slice %61 {offsets = [0, 0], sizes = [8, 384], strides = [1, 1]} : vector<8x512xf32> to vector<8x384xf32>
    %cst_31 = arith.constant 5.000000e-01 : f32
    %63 = vector.broadcast %cst_31 : f32 to vector<8x384xf32>
    %64 = arith.mulf %63, %62 : vector<8x384xf32>
    %65 = math.tanh %64 : vector<8x384xf32>
    %cst_32 = arith.constant 5.000000e-01 : f32
    %66 = vector.broadcast %cst_32 : f32 to vector<8x384xf32>
    %67 = arith.mulf %66, %65 : vector<8x384xf32>
    %cst_33 = arith.constant 5.000000e-01 : f32
    %68 = vector.broadcast %cst_33 : f32 to vector<8x384xf32>
    %69 = arith.addf %67, %68 : vector<8x384xf32>
    %70 = vector.extract_strided_slice %69 {offsets = [0, 0], sizes = [8, 128], strides = [1, 1]} : vector<8x384xf32> to vector<8x128xf32>
    %71 = vector.extract_strided_slice %69 {offsets = [0, 128], sizes = [8, 128], strides = [1, 1]} : vector<8x384xf32> to vector<8x128xf32>
    %72 = vector.extract_strided_slice %69 {offsets = [0, 256], sizes = [8, 128], strides = [1, 1]} : vector<8x384xf32> to vector<8x128xf32>
    %73 = vector.extract_strided_slice %61 {offsets = [0, 384], sizes = [8, 128], strides = [1, 1]} : vector<8x512xf32> to vector<8x128xf32>
    %74 = math.tanh %73 : vector<8x128xf32>
    %75 = arith.mulf %71, %50 : vector<8x128xf32>
    %76 = arith.mulf %70, %74 : vector<8x128xf32>
    %77 = arith.addf %75, %76 : vector<8x128xf32>
    %78 = math.tanh %77 : vector<8x128xf32>
    %79 = arith.mulf %72, %78 : vector<8x128xf32>
    %c2_34 = arith.constant 2 : index
    %c0_35 = arith.constant 0 : index
    %c0_36 = arith.constant 0 : index
    %80 = vector.load %arg5[%c2_34, %c0_35, %c0_36] : memref<8x8x128xf32, #tpu.memory_space<vmem>>, vector<1x8x128xf32>
    %81 = vector.shape_cast %80 : vector<1x8x128xf32> to vector<8x128xf32>
    %82 = vector.shape_cast %79 : vector<8x128xf32> to vector<1x8x128xf32>
    tpu.vector_store %arg5[%c2_34, %c0_35, %c0_36], %82 {strides = array<i32>} : memref<8x8x128xf32, #tpu.memory_space<vmem>>, vector<1x8x128xf32>,
    %c3 = arith.constant 3 : index
    %c0_37 = arith.constant 0 : index
    %c0_38 = arith.constant 0 : index
    %83 = vector.load %arg0[%c3, %c0_37, %c0_38] : memref<8x8x512xf32, #tpu.memory_space<vmem>>, vector<1x8x512xf32>
    %84 = vector.shape_cast %83 : vector<1x8x512xf32> to vector<8x512xf32>
    %c0_39 = arith.constant 0 : index
    %c0_40 = arith.constant 0 : index
    %c0_41 = arith.constant 0 : index
    %85 = vector.load %arg3[%c0_39, %c0_40, %c0_41] : memref<2x128x512xf32, #tpu.memory_space<vmem>>, vector<1x128x512xf32>
    %86 = vector.shape_cast %85 : vector<1x128x512xf32> to vector<128x512xf32>
    %cst_42 = arith.constant dense<0.000000e+00> : vector<8x512xf32>
    %87 = tpu.matmul %79, %86, %cst_42 {dimension_numbers = #tpu.dot_dimension_numbers<[1], [0], [0], [1], [0, 0, 1, 1], [], []>} : vector<8x128xf32>, vector<128x512xf32>, vector<8x512xf32> -> vector<8x512xf32>
    %88 = arith.addf %84, %87 : vector<8x512xf32>
    %89 = vector.extract_strided_slice %88 {offsets = [0, 0], sizes = [8, 384], strides = [1, 1]} : vector<8x512xf32> to vector<8x384xf32>
    %cst_43 = arith.constant 5.000000e-01 : f32
    %90 = vector.broadcast %cst_43 : f32 to vector<8x384xf32>
    %91 = arith.mulf %90, %89 : vector<8x384xf32>
    %92 = math.tanh %91 : vector<8x384xf32>
    %cst_44 = arith.constant 5.000000e-01 : f32
    %93 = vector.broadcast %cst_44 : f32 to vector<8x384xf32>
    %94 = arith.mulf %93, %92 : vector<8x384xf32>
    %cst_45 = arith.constant 5.000000e-01 : f32
    %95 = vector.broadcast %cst_45 : f32 to vector<8x384xf32>
    %96 = arith.addf %94, %95 : vector<8x384xf32>
    %97 = vector.extract_strided_slice %96 {offsets = [0, 0], sizes = [8, 128], strides = [1, 1]} : vector<8x384xf32> to vector<8x128xf32>
    %98 = vector.extract_strided_slice %96 {offsets = [0, 128], sizes = [8, 128], strides = [1, 1]} : vector<8x384xf32> to vector<8x128xf32>
    %99 = vector.extract_strided_slice %96 {offsets = [0, 256], sizes = [8, 128], strides = [1, 1]} : vector<8x384xf32> to vector<8x128xf32>
    %100 = vector.extract_strided_slice %88 {offsets = [0, 384], sizes = [8, 128], strides = [1, 1]} : vector<8x512xf32> to vector<8x128xf32>
    %101 = math.tanh %100 : vector<8x128xf32>
    %102 = arith.mulf %98, %77 : vector<8x128xf32>
    %103 = arith.mulf %97, %101 : vector<8x128xf32>
    %104 = arith.addf %102, %103 : vector<8x128xf32>
    %105 = math.tanh %104 : vector<8x128xf32>
    %106 = arith.mulf %99, %105 : vector<8x128xf32>
    %c3_46 = arith.constant 3 : index
    %c0_47 = arith.constant 0 : index
    %c0_48 = arith.constant 0 : index
    %107 = vector.load %arg5[%c3_46, %c0_47, %c0_48] : memref<8x8x128xf32, #tpu.memory_space<vmem>>, vector<1x8x128xf32>
    %108 = vector.shape_cast %107 : vector<1x8x128xf32> to vector<8x128xf32>
    %109 = vector.shape_cast %106 : vector<8x128xf32> to vector<1x8x128xf32>
    tpu.vector_store %arg5[%c3_46, %c0_47, %c0_48], %109 {strides = array<i32>} : memref<8x8x128xf32, #tpu.memory_space<vmem>>, vector<1x8x128xf32>,
    %c4 = arith.constant 4 : index
    %c0_49 = arith.constant 0 : index
    %c0_50 = arith.constant 0 : index
    %110 = vector.load %arg0[%c4, %c0_49, %c0_50] : memref<8x8x512xf32, #tpu.memory_space<vmem>>, vector<1x8x512xf32>
    %111 = vector.shape_cast %110 : vector<1x8x512xf32> to vector<8x512xf32>
    %c0_51 = arith.constant 0 : index
    %c0_52 = arith.constant 0 : index
    %c0_53 = arith.constant 0 : index
    %112 = vector.load %arg3[%c0_51, %c0_52, %c0_53] : memref<2x128x512xf32, #tpu.memory_space<vmem>>, vector<1x128x512xf32>
    %113 = vector.shape_cast %112 : vector<1x128x512xf32> to vector<128x512xf32>
    %cst_54 = arith.constant dense<0.000000e+00> : vector<8x512xf32>
    %114 = tpu.matmul %106, %113, %cst_54 {dimension_numbers = #tpu.dot_dimension_numbers<[1], [0], [0], [1], [0, 0, 1, 1], [], []>} : vector<8x128xf32>, vector<128x512xf32>, vector<8x512xf32> -> vector<8x512xf32>
    %115 = arith.addf %111, %114 : vector<8x512xf32>
    %116 = vector.extract_strided_slice %115 {offsets = [0, 0], sizes = [8, 384], strides = [1, 1]} : vector<8x512xf32> to vector<8x384xf32>
    %cst_55 = arith.constant 5.000000e-01 : f32
    %117 = vector.broadcast %cst_55 : f32 to vector<8x384xf32>
    %118 = arith.mulf %117, %116 : vector<8x384xf32>
    %119 = math.tanh %118 : vector<8x384xf32>
    %cst_56 = arith.constant 5.000000e-01 : f32
    %120 = vector.broadcast %cst_56 : f32 to vector<8x384xf32>
    %121 = arith.mulf %120, %119 : vector<8x384xf32>
    %cst_57 = arith.constant 5.000000e-01 : f32
    %122 = vector.broadcast %cst_57 : f32 to vector<8x384xf32>
    %123 = arith.addf %121, %122 : vector<8x384xf32>
    %124 = vector.extract_strided_slice %123 {offsets = [0, 0], sizes = [8, 128], strides = [1, 1]} : vector<8x384xf32> to vector<8x128xf32>
    %125 = vector.extract_strided_slice %123 {offsets = [0, 128], sizes = [8, 128], strides = [1, 1]} : vector<8x384xf32> to vector<8x128xf32>
    %126 = vector.extract_strided_slice %123 {offsets = [0, 256], sizes = [8, 128], strides = [1, 1]} : vector<8x384xf32> to vector<8x128xf32>
    %127 = vector.extract_strided_slice %115 {offsets = [0, 384], sizes = [8, 128], strides = [1, 1]} : vector<8x512xf32> to vector<8x128xf32>
    %128 = math.tanh %127 : vector<8x128xf32>
    %129 = arith.mulf %125, %104 : vector<8x128xf32>
    %130 = arith.mulf %124, %128 : vector<8x128xf32>
    %131 = arith.addf %129, %130 : vector<8x128xf32>
    %132 = math.tanh %131 : vector<8x128xf32>
    %133 = arith.mulf %126, %132 : vector<8x128xf32>
    %c4_58 = arith.constant 4 : index
    %c0_59 = arith.constant 0 : index
    %c0_60 = arith.constant 0 : index
    %134 = vector.load %arg5[%c4_58, %c0_59, %c0_60] : memref<8x8x128xf32, #tpu.memory_space<vmem>>, vector<1x8x128xf32>
    %135 = vector.shape_cast %134 : vector<1x8x128xf32> to vector<8x128xf32>
    %136 = vector.shape_cast %133 : vector<8x128xf32> to vector<1x8x128xf32>
    tpu.vector_store %arg5[%c4_58, %c0_59, %c0_60], %136 {strides = array<i32>} : memref<8x8x128xf32, #tpu.memory_space<vmem>>, vector<1x8x128xf32>,
    %c5 = arith.constant 5 : index
    %c0_61 = arith.constant 0 : index
    %c0_62 = arith.constant 0 : index
    %137 = vector.load %arg0[%c5, %c0_61, %c0_62] : memref<8x8x512xf32, #tpu.memory_space<vmem>>, vector<1x8x512xf32>
    %138 = vector.shape_cast %137 : vector<1x8x512xf32> to vector<8x512xf32>
    %c0_63 = arith.constant 0 : index
    %c0_64 = arith.constant 0 : index
    %c0_65 = arith.constant 0 : index
    %139 = vector.load %arg3[%c0_63, %c0_64, %c0_65] : memref<2x128x512xf32, #tpu.memory_space<vmem>>, vector<1x128x512xf32>
    %140 = vector.shape_cast %139 : vector<1x128x512xf32> to vector<128x512xf32>
    %cst_66 = arith.constant dense<0.000000e+00> : vector<8x512xf32>
    %141 = tpu.matmul %133, %140, %cst_66 {dimension_numbers = #tpu.dot_dimension_numbers<[1], [0], [0], [1], [0, 0, 1, 1], [], []>} : vector<8x128xf32>, vector<128x512xf32>, vector<8x512xf32> -> vector<8x512xf32>
    %142 = arith.addf %138, %141 : vector<8x512xf32>
    %143 = vector.extract_strided_slice %142 {offsets = [0, 0], sizes = [8, 384], strides = [1, 1]} : vector<8x512xf32> to vector<8x384xf32>
    %cst_67 = arith.constant 5.000000e-01 : f32
    %144 = vector.broadcast %cst_67 : f32 to vector<8x384xf32>
    %145 = arith.mulf %144, %143 : vector<8x384xf32>
    %146 = math.tanh %145 : vector<8x384xf32>
    %cst_68 = arith.constant 5.000000e-01 : f32
    %147 = vector.broadcast %cst_68 : f32 to vector<8x384xf32>
    %148 = arith.mulf %147, %146 : vector<8x384xf32>
    %cst_69 = arith.constant 5.000000e-01 : f32
    %149 = vector.broadcast %cst_69 : f32 to vector<8x384xf32>
    %150 = arith.addf %148, %149 : vector<8x384xf32>
    %151 = vector.extract_strided_slice %150 {offsets = [0, 0], sizes = [8, 128], strides = [1, 1]} : vector<8x384xf32> to vector<8x128xf32>
    %152 = vector.extract_strided_slice %150 {offsets = [0, 128], sizes = [8, 128], strides = [1, 1]} : vector<8x384xf32> to vector<8x128xf32>
    %153 = vector.extract_strided_slice %150 {offsets = [0, 256], sizes = [8, 128], strides = [1, 1]} : vector<8x384xf32> to vector<8x128xf32>
    %154 = vector.extract_strided_slice %142 {offsets = [0, 384], sizes = [8, 128], strides = [1, 1]} : vector<8x512xf32> to vector<8x128xf32>
    %155 = math.tanh %154 : vector<8x128xf32>
    %156 = arith.mulf %152, %131 : vector<8x128xf32>
    %157 = arith.mulf %151, %155 : vector<8x128xf32>
    %158 = arith.addf %156, %157 : vector<8x128xf32>
    %159 = math.tanh %158 : vector<8x128xf32>
    %160 = arith.mulf %153, %159 : vector<8x128xf32>
    %c5_70 = arith.constant 5 : index
    %c0_71 = arith.constant 0 : index
    %c0_72 = arith.constant 0 : index
    %161 = vector.load %arg5[%c5_70, %c0_71, %c0_72] : memref<8x8x128xf32, #tpu.memory_space<vmem>>, vector<1x8x128xf32>
    %162 = vector.shape_cast %161 : vector<1x8x128xf32> to vector<8x128xf32>
    %163 = vector.shape_cast %160 : vector<8x128xf32> to vector<1x8x128xf32>
    tpu.vector_store %arg5[%c5_70, %c0_71, %c0_72], %163 {strides = array<i32>} : memref<8x8x128xf32, #tpu.memory_space<vmem>>, vector<1x8x128xf32>,
    %c6 = arith.constant 6 : index
    %c0_73 = arith.constant 0 : index
    %c0_74 = arith.constant 0 : index
    %164 = vector.load %arg0[%c6, %c0_73, %c0_74] : memref<8x8x512xf32, #tpu.memory_space<vmem>>, vector<1x8x512xf32>
    %165 = vector.shape_cast %164 : vector<1x8x512xf32> to vector<8x512xf32>
    %c0_75 = arith.constant 0 : index
    %c0_76 = arith.constant 0 : index
    %c0_77 = arith.constant 0 : index
    %166 = vector.load %arg3[%c0_75, %c0_76, %c0_77] : memref<2x128x512xf32, #tpu.memory_space<vmem>>, vector<1x128x512xf32>
    %167 = vector.shape_cast %166 : vector<1x128x512xf32> to vector<128x512xf32>
    %cst_78 = arith.constant dense<0.000000e+00> : vector<8x512xf32>
    %168 = tpu.matmul %160, %167, %cst_78 {dimension_numbers = #tpu.dot_dimension_numbers<[1], [0], [0], [1], [0, 0, 1, 1], [], []>} : vector<8x128xf32>, vector<128x512xf32>, vector<8x512xf32> -> vector<8x512xf32>
    %169 = arith.addf %165, %168 : vector<8x512xf32>
    %170 = vector.extract_strided_slice %169 {offsets = [0, 0], sizes = [8, 384], strides = [1, 1]} : vector<8x512xf32> to vector<8x384xf32>
    %cst_79 = arith.constant 5.000000e-01 : f32
    %171 = vector.broadcast %cst_79 : f32 to vector<8x384xf32>
    %172 = arith.mulf %171, %170 : vector<8x384xf32>
    %173 = math.tanh %172 : vector<8x384xf32>
    %cst_80 = arith.constant 5.000000e-01 : f32
    %174 = vector.broadcast %cst_80 : f32 to vector<8x384xf32>
    %175 = arith.mulf %174, %173 : vector<8x384xf32>
    %cst_81 = arith.constant 5.000000e-01 : f32
    %176 = vector.broadcast %cst_81 : f32 to vector<8x384xf32>
    %177 = arith.addf %175, %176 : vector<8x384xf32>
    %178 = vector.extract_strided_slice %177 {offsets = [0, 0], sizes = [8, 128], strides = [1, 1]} : vector<8x384xf32> to vector<8x128xf32>
    %179 = vector.extract_strided_slice %177 {offsets = [0, 128], sizes = [8, 128], strides = [1, 1]} : vector<8x384xf32> to vector<8x128xf32>
    %180 = vector.extract_strided_slice %177 {offsets = [0, 256], sizes = [8, 128], strides = [1, 1]} : vector<8x384xf32> to vector<8x128xf32>
    %181 = vector.extract_strided_slice %169 {offsets = [0, 384], sizes = [8, 128], strides = [1, 1]} : vector<8x512xf32> to vector<8x128xf32>
    %182 = math.tanh %181 : vector<8x128xf32>
    %183 = arith.mulf %179, %158 : vector<8x128xf32>
    %184 = arith.mulf %178, %182 : vector<8x128xf32>
    %185 = arith.addf %183, %184 : vector<8x128xf32>
    %186 = math.tanh %185 : vector<8x128xf32>
    %187 = arith.mulf %180, %186 : vector<8x128xf32>
    %c6_82 = arith.constant 6 : index
    %c0_83 = arith.constant 0 : index
    %c0_84 = arith.constant 0 : index
    %188 = vector.load %arg5[%c6_82, %c0_83, %c0_84] : memref<8x8x128xf32, #tpu.memory_space<vmem>>, vector<1x8x128xf32>
    %189 = vector.shape_cast %188 : vector<1x8x128xf32> to vector<8x128xf32>
    %190 = vector.shape_cast %187 : vector<8x128xf32> to vector<1x8x128xf32>
    tpu.vector_store %arg5[%c6_82, %c0_83, %c0_84], %190 {strides = array<i32>} : memref<8x8x128xf32, #tpu.memory_space<vmem>>, vector<1x8x128xf32>,
    %c7 = arith.constant 7 : index
    %c0_85 = arith.constant 0 : index
    %c0_86 = arith.constant 0 : index
    %191 = vector.load %arg0[%c7, %c0_85, %c0_86] : memref<8x8x512xf32, #tpu.memory_space<vmem>>, vector<1x8x512xf32>
    %192 = vector.shape_cast %191 : vector<1x8x512xf32> to vector<8x512xf32>
    %c0_87 = arith.constant 0 : index
    %c0_88 = arith.constant 0 : index
    %c0_89 = arith.constant 0 : index
    %193 = vector.load %arg3[%c0_87, %c0_88, %c0_89] : memref<2x128x512xf32, #tpu.memory_space<vmem>>, vector<1x128x512xf32>
    %194 = vector.shape_cast %193 : vector<1x128x512xf32> to vector<128x512xf32>
    %cst_90 = arith.constant dense<0.000000e+00> : vector<8x512xf32>
    %195 = tpu.matmul %187, %194, %cst_90 {dimension_numbers = #tpu.dot_dimension_numbers<[1], [0], [0], [1], [0, 0, 1, 1], [], []>} : vector<8x128xf32>, vector<128x512xf32>, vector<8x512xf32> -> vector<8x512xf32>
    %196 = arith.addf %192, %195 : vector<8x512xf32>
    %197 = vector.extract_strided_slice %196 {offsets = [0, 0], sizes = [8, 384], strides = [1, 1]} : vector<8x512xf32> to vector<8x384xf32>
    %cst_91 = arith.constant 5.000000e-01 : f32
    %198 = vector.broadcast %cst_91 : f32 to vector<8x384xf32>
    %199 = arith.mulf %198, %197 : vector<8x384xf32>
    %200 = math.tanh %199 : vector<8x384xf32>
    %cst_92 = arith.constant 5.000000e-01 : f32
    %201 = vector.broadcast %cst_92 : f32 to vector<8x384xf32>
    %202 = arith.mulf %201, %200 : vector<8x384xf32>
    %cst_93 = arith.constant 5.000000e-01 : f32
    %203 = vector.broadcast %cst_93 : f32 to vector<8x384xf32>
    %204 = arith.addf %202, %203 : vector<8x384xf32>
    %205 = vector.extract_strided_slice %204 {offsets = [0, 0], sizes = [8, 128], strides = [1, 1]} : vector<8x384xf32> to vector<8x128xf32>
    %206 = vector.extract_strided_slice %204 {offsets = [0, 128], sizes = [8, 128], strides = [1, 1]} : vector<8x384xf32> to vector<8x128xf32>
    %207 = vector.extract_strided_slice %204 {offsets = [0, 256], sizes = [8, 128], strides = [1, 1]} : vector<8x384xf32> to vector<8x128xf32>
    %208 = vector.extract_strided_slice %196 {offsets = [0, 384], sizes = [8, 128], strides = [1, 1]} : vector<8x512xf32> to vector<8x128xf32>
    %209 = math.tanh %208 : vector<8x128xf32>
    %210 = arith.mulf %206, %185 : vector<8x128xf32>
    %211 = arith.mulf %205, %209 : vector<8x128xf32>
    %212 = arith.addf %210, %211 : vector<8x128xf32>
    %213 = math.tanh %212 : vector<8x128xf32>
    %214 = arith.mulf %207, %213 : vector<8x128xf32>
    %c7_94 = arith.constant 7 : index
    %c0_95 = arith.constant 0 : index
    %c0_96 = arith.constant 0 : index
    %215 = vector.load %arg5[%c7_94, %c0_95, %c0_96] : memref<8x8x128xf32, #tpu.memory_space<vmem>>, vector<1x8x128xf32>
    %216 = vector.shape_cast %215 : vector<1x8x128xf32> to vector<8x128xf32>
    %217 = vector.shape_cast %214 : vector<8x128xf32> to vector<1x8x128xf32>
    tpu.vector_store %arg5[%c7_94, %c0_95, %c0_96], %217 {strides = array<i32>} : memref<8x8x128xf32, #tpu.memory_space<vmem>>, vector<1x8x128xf32>,
    %c0_97 = arith.constant 0 : index
    %c0_98 = arith.constant 0 : index
    %c0_99 = arith.constant 0 : index
    %218 = vector.load %arg4[%c0_97, %c0_98, %c0_99] : memref<2x8x128xf32, #tpu.memory_space<vmem>>, vector<1x8x128xf32>
    %219 = vector.shape_cast %218 : vector<1x8x128xf32> to vector<8x128xf32>
    %220 = vector.shape_cast %214 : vector<8x128xf32> to vector<1x8x128xf32>
    tpu.vector_store %arg4[%c0_97, %c0_98, %c0_99], %220 {strides = array<i32>} : memref<2x8x128xf32, #tpu.memory_space<vmem>>, vector<1x8x128xf32>,
    %c0_100 = arith.constant 0 : index
    %c0_101 = arith.constant 0 : index
    %c0_102 = arith.constant 0 : index
    %221 = vector.load %arg5[%c0_100, %c0_101, %c0_102] : memref<8x8x128xf32, #tpu.memory_space<vmem>>, vector<8x8x128xf32>
    %222 = vector.shape_cast %221 : vector<8x8x128xf32> to vector<64x128xf32>
    %c0_103 = arith.constant 0 : index
    %c0_104 = arith.constant 0 : index
    %c0_105 = arith.constant 0 : index
    %223 = vector.load %arg1[%c0_103, %c0_104, %c0_105] : memref<1x128x512xf32, #tpu.memory_space<vmem>>, vector<1x128x512xf32>
    %224 = vector.shape_cast %223 : vector<1x128x512xf32> to vector<128x512xf32>
    %cst_106 = arith.constant dense<0.000000e+00> : vector<64x512xf32>
    %225 = tpu.matmul %222, %224, %cst_106 {dimension_numbers = #tpu.dot_dimension_numbers<[1], [0], [0], [1], [0, 0, 1, 1], [], []>} : vector<64x128xf32>, vector<128x512xf32>, vector<64x512xf32> -> vector<64x512xf32>
    %c0_107 = arith.constant 0 : index
    %c0_108 = arith.constant 0 : index
    %c0_109 = arith.constant 0 : index
    %226 = vector.load %arg2[%c0_107, %c0_108, %c0_109] : memref<1x1x512xf32, #tpu.memory_space<vmem>>, vector<1x1x512xf32>
    %227 = vector.shape_cast %226 : vector<1x1x512xf32> to vector<1x512xf32>
    %228 = vector.broadcast %227 : vector<1x512xf32> to vector<64x512xf32>
    %229 = arith.addf %225, %228 : vector<64x512xf32>
    %230 = vector.shape_cast %229 : vector<64x512xf32> to vector<8x8x512xf32>
    %c0_110 = arith.constant 0 : index
    %c0_111 = arith.constant 0 : index
    %c0_112 = arith.constant 0 : index
    %231 = vector.load %arg6[%c0_110, %c0_111, %c0_112] : memref<8x8x512xf32, #tpu.memory_space<vmem>>, vector<8x8x512xf32>
    tpu.vector_store %arg6[%c0_110, %c0_111, %c0_112], %230 {strides = array<i32>} : memref<8x8x512xf32, #tpu.memory_space<vmem>>, vector<8x8x512xf32>,
    %cst_113 = arith.constant 0.000000e+00 : f32
    %232 = vector.broadcast %cst_113 : f32 to vector<8x128xf32>
    %cst_114 = arith.constant 0.000000e+00 : f32
    %233 = vector.broadcast %cst_114 : f32 to vector<8x128xf32>
    %c0_115 = arith.constant 0 : index
    %c0_116 = arith.constant 0 : index
    %c0_117 = arith.constant 0 : index
    %234 = vector.load %arg6[%c0_115, %c0_116, %c0_117] : memref<8x8x512xf32, #tpu.memory_space<vmem>>, vector<1x8x512xf32>
    %235 = vector.shape_cast %234 : vector<1x8x512xf32> to vector<8x512xf32>
    %c1_118 = arith.constant 1 : index
    %c0_119 = arith.constant 0 : index
    %c0_120 = arith.constant 0 : index
    %236 = vector.load %arg3[%c1_118, %c0_119, %c0_120] : memref<2x128x512xf32, #tpu.memory_space<vmem>>, vector<1x128x512xf32>
    %237 = vector.shape_cast %236 : vector<1x128x512xf32> to vector<128x512xf32>
    %cst_121 = arith.constant dense<0.000000e+00> : vector<8x512xf32>
    %238 = tpu.matmul %232, %237, %cst_121 {dimension_numbers = #tpu.dot_dimension_numbers<[1], [0], [0], [1], [0, 0, 1, 1], [], []>} : vector<8x128xf32>, vector<128x512xf32>, vector<8x512xf32> -> vector<8x512xf32>
    %239 = arith.addf %235, %238 : vector<8x512xf32>
    %240 = vector.extract_strided_slice %239 {offsets = [0, 0], sizes = [8, 384], strides = [1, 1]} : vector<8x512xf32> to vector<8x384xf32>
    %cst_122 = arith.constant 5.000000e-01 : f32
    %241 = vector.broadcast %cst_122 : f32 to vector<8x384xf32>
    %242 = arith.mulf %241, %240 : vector<8x384xf32>
    %243 = math.tanh %242 : vector<8x384xf32>
    %cst_123 = arith.constant 5.000000e-01 : f32
    %244 = vector.broadcast %cst_123 : f32 to vector<8x384xf32>
    %245 = arith.mulf %244, %243 : vector<8x384xf32>
    %cst_124 = arith.constant 5.000000e-01 : f32
    %246 = vector.broadcast %cst_124 : f32 to vector<8x384xf32>
    %247 = arith.addf %245, %246 : vector<8x384xf32>
    %248 = vector.extract_strided_slice %247 {offsets = [0, 0], sizes = [8, 128], strides = [1, 1]} : vector<8x384xf32> to vector<8x128xf32>
    %249 = vector.extract_strided_slice %247 {offsets = [0, 128], sizes = [8, 128], strides = [1, 1]} : vector<8x384xf32> to vector<8x128xf32>
    %250 = vector.extract_strided_slice %247 {offsets = [0, 256], sizes = [8, 128], strides = [1, 1]} : vector<8x384xf32> to vector<8x128xf32>
    %251 = vector.extract_strided_slice %239 {offsets = [0, 384], sizes = [8, 128], strides = [1, 1]} : vector<8x512xf32> to vector<8x128xf32>
    %252 = math.tanh %251 : vector<8x128xf32>
    %253 = arith.mulf %249, %233 : vector<8x128xf32>
    %254 = arith.mulf %248, %252 : vector<8x128xf32>
    %255 = arith.addf %253, %254 : vector<8x128xf32>
    %256 = math.tanh %255 : vector<8x128xf32>
    %257 = arith.mulf %250, %256 : vector<8x128xf32>
    %c1_125 = arith.constant 1 : index
    %c0_126 = arith.constant 0 : index
    %c0_127 = arith.constant 0 : index
    %258 = vector.load %arg6[%c1_125, %c0_126, %c0_127] : memref<8x8x512xf32, #tpu.memory_space<vmem>>, vector<1x8x512xf32>
    %259 = vector.shape_cast %258 : vector<1x8x512xf32> to vector<8x512xf32>
    %c1_128 = arith.constant 1 : index
    %c0_129 = arith.constant 0 : index
    %c0_130 = arith.constant 0 : index
    %260 = vector.load %arg3[%c1_128, %c0_129, %c0_130] : memref<2x128x512xf32, #tpu.memory_space<vmem>>, vector<1x128x512xf32>
    %261 = vector.shape_cast %260 : vector<1x128x512xf32> to vector<128x512xf32>
    %cst_131 = arith.constant dense<0.000000e+00> : vector<8x512xf32>
    %262 = tpu.matmul %257, %261, %cst_131 {dimension_numbers = #tpu.dot_dimension_numbers<[1], [0], [0], [1], [0, 0, 1, 1], [], []>} : vector<8x128xf32>, vector<128x512xf32>, vector<8x512xf32> -> vector<8x512xf32>
    %263 = arith.addf %259, %262 : vector<8x512xf32>
    %264 = vector.extract_strided_slice %263 {offsets = [0, 0], sizes = [8, 384], strides = [1, 1]} : vector<8x512xf32> to vector<8x384xf32>
    %cst_132 = arith.constant 5.000000e-01 : f32
    %265 = vector.broadcast %cst_132 : f32 to vector<8x384xf32>
    %266 = arith.mulf %265, %264 : vector<8x384xf32>
    %267 = math.tanh %266 : vector<8x384xf32>
    %cst_133 = arith.constant 5.000000e-01 : f32
    %268 = vector.broadcast %cst_133 : f32 to vector<8x384xf32>
    %269 = arith.mulf %268, %267 : vector<8x384xf32>
    %cst_134 = arith.constant 5.000000e-01 : f32
    %270 = vector.broadcast %cst_134 : f32 to vector<8x384xf32>
    %271 = arith.addf %269, %270 : vector<8x384xf32>
    %272 = vector.extract_strided_slice %271 {offsets = [0, 0], sizes = [8, 128], strides = [1, 1]} : vector<8x384xf32> to vector<8x128xf32>
    %273 = vector.extract_strided_slice %271 {offsets = [0, 128], sizes = [8, 128], strides = [1, 1]} : vector<8x384xf32> to vector<8x128xf32>
    %274 = vector.extract_strided_slice %271 {offsets = [0, 256], sizes = [8, 128], strides = [1, 1]} : vector<8x384xf32> to vector<8x128xf32>
    %275 = vector.extract_strided_slice %263 {offsets = [0, 384], sizes = [8, 128], strides = [1, 1]} : vector<8x512xf32> to vector<8x128xf32>
    %276 = math.tanh %275 : vector<8x128xf32>
    %277 = arith.mulf %273, %255 : vector<8x128xf32>
    %278 = arith.mulf %272, %276 : vector<8x128xf32>
    %279 = arith.addf %277, %278 : vector<8x128xf32>
    %280 = math.tanh %279 : vector<8x128xf32>
    %281 = arith.mulf %274, %280 : vector<8x128xf32>
    %c2_135 = arith.constant 2 : index
    %c0_136 = arith.constant 0 : index
    %c0_137 = arith.constant 0 : index
    %282 = vector.load %arg6[%c2_135, %c0_136, %c0_137] : memref<8x8x512xf32, #tpu.memory_space<vmem>>, vector<1x8x512xf32>
    %283 = vector.shape_cast %282 : vector<1x8x512xf32> to vector<8x512xf32>
    %c1_138 = arith.constant 1 : index
    %c0_139 = arith.constant 0 : index
    %c0_140 = arith.constant 0 : index
    %284 = vector.load %arg3[%c1_138, %c0_139, %c0_140] : memref<2x128x512xf32, #tpu.memory_space<vmem>>, vector<1x128x512xf32>
    %285 = vector.shape_cast %284 : vector<1x128x512xf32> to vector<128x512xf32>
    %cst_141 = arith.constant dense<0.000000e+00> : vector<8x512xf32>
    %286 = tpu.matmul %281, %285, %cst_141 {dimension_numbers = #tpu.dot_dimension_numbers<[1], [0], [0], [1], [0, 0, 1, 1], [], []>} : vector<8x128xf32>, vector<128x512xf32>, vector<8x512xf32> -> vector<8x512xf32>
    %287 = arith.addf %283, %286 : vector<8x512xf32>
    %288 = vector.extract_strided_slice %287 {offsets = [0, 0], sizes = [8, 384], strides = [1, 1]} : vector<8x512xf32> to vector<8x384xf32>
    %cst_142 = arith.constant 5.000000e-01 : f32
    %289 = vector.broadcast %cst_142 : f32 to vector<8x384xf32>
    %290 = arith.mulf %289, %288 : vector<8x384xf32>
    %291 = math.tanh %290 : vector<8x384xf32>
    %cst_143 = arith.constant 5.000000e-01 : f32
    %292 = vector.broadcast %cst_143 : f32 to vector<8x384xf32>
    %293 = arith.mulf %292, %291 : vector<8x384xf32>
    %cst_144 = arith.constant 5.000000e-01 : f32
    %294 = vector.broadcast %cst_144 : f32 to vector<8x384xf32>
    %295 = arith.addf %293, %294 : vector<8x384xf32>
    %296 = vector.extract_strided_slice %295 {offsets = [0, 0], sizes = [8, 128], strides = [1, 1]} : vector<8x384xf32> to vector<8x128xf32>
    %297 = vector.extract_strided_slice %295 {offsets = [0, 128], sizes = [8, 128], strides = [1, 1]} : vector<8x384xf32> to vector<8x128xf32>
    %298 = vector.extract_strided_slice %295 {offsets = [0, 256], sizes = [8, 128], strides = [1, 1]} : vector<8x384xf32> to vector<8x128xf32>
    %299 = vector.extract_strided_slice %287 {offsets = [0, 384], sizes = [8, 128], strides = [1, 1]} : vector<8x512xf32> to vector<8x128xf32>
    %300 = math.tanh %299 : vector<8x128xf32>
    %301 = arith.mulf %297, %279 : vector<8x128xf32>
    %302 = arith.mulf %296, %300 : vector<8x128xf32>
    %303 = arith.addf %301, %302 : vector<8x128xf32>
    %304 = math.tanh %303 : vector<8x128xf32>
    %305 = arith.mulf %298, %304 : vector<8x128xf32>
    %c3_145 = arith.constant 3 : index
    %c0_146 = arith.constant 0 : index
    %c0_147 = arith.constant 0 : index
    %306 = vector.load %arg6[%c3_145, %c0_146, %c0_147] : memref<8x8x512xf32, #tpu.memory_space<vmem>>, vector<1x8x512xf32>
    %307 = vector.shape_cast %306 : vector<1x8x512xf32> to vector<8x512xf32>
    %c1_148 = arith.constant 1 : index
    %c0_149 = arith.constant 0 : index
    %c0_150 = arith.constant 0 : index
    %308 = vector.load %arg3[%c1_148, %c0_149, %c0_150] : memref<2x128x512xf32, #tpu.memory_space<vmem>>, vector<1x128x512xf32>
    %309 = vector.shape_cast %308 : vector<1x128x512xf32> to vector<128x512xf32>
    %cst_151 = arith.constant dense<0.000000e+00> : vector<8x512xf32>
    %310 = tpu.matmul %305, %309, %cst_151 {dimension_numbers = #tpu.dot_dimension_numbers<[1], [0], [0], [1], [0, 0, 1, 1], [], []>} : vector<8x128xf32>, vector<128x512xf32>, vector<8x512xf32> -> vector<8x512xf32>
    %311 = arith.addf %307, %310 : vector<8x512xf32>
    %312 = vector.extract_strided_slice %311 {offsets = [0, 0], sizes = [8, 384], strides = [1, 1]} : vector<8x512xf32> to vector<8x384xf32>
    %cst_152 = arith.constant 5.000000e-01 : f32
    %313 = vector.broadcast %cst_152 : f32 to vector<8x384xf32>
    %314 = arith.mulf %313, %312 : vector<8x384xf32>
    %315 = math.tanh %314 : vector<8x384xf32>
    %cst_153 = arith.constant 5.000000e-01 : f32
    %316 = vector.broadcast %cst_153 : f32 to vector<8x384xf32>
    %317 = arith.mulf %316, %315 : vector<8x384xf32>
    %cst_154 = arith.constant 5.000000e-01 : f32
    %318 = vector.broadcast %cst_154 : f32 to vector<8x384xf32>
    %319 = arith.addf %317, %318 : vector<8x384xf32>
    %320 = vector.extract_strided_slice %319 {offsets = [0, 0], sizes = [8, 128], strides = [1, 1]} : vector<8x384xf32> to vector<8x128xf32>
    %321 = vector.extract_strided_slice %319 {offsets = [0, 128], sizes = [8, 128], strides = [1, 1]} : vector<8x384xf32> to vector<8x128xf32>
    %322 = vector.extract_strided_slice %319 {offsets = [0, 256], sizes = [8, 128], strides = [1, 1]} : vector<8x384xf32> to vector<8x128xf32>
    %323 = vector.extract_strided_slice %311 {offsets = [0, 384], sizes = [8, 128], strides = [1, 1]} : vector<8x512xf32> to vector<8x128xf32>
    %324 = math.tanh %323 : vector<8x128xf32>
    %325 = arith.mulf %321, %303 : vector<8x128xf32>
    %326 = arith.mulf %320, %324 : vector<8x128xf32>
    %327 = arith.addf %325, %326 : vector<8x128xf32>
    %328 = math.tanh %327 : vector<8x128xf32>
    %329 = arith.mulf %322, %328 : vector<8x128xf32>
    %c4_155 = arith.constant 4 : index
    %c0_156 = arith.constant 0 : index
    %c0_157 = arith.constant 0 : index
    %330 = vector.load %arg6[%c4_155, %c0_156, %c0_157] : memref<8x8x512xf32, #tpu.memory_space<vmem>>, vector<1x8x512xf32>
    %331 = vector.shape_cast %330 : vector<1x8x512xf32> to vector<8x512xf32>
    %c1_158 = arith.constant 1 : index
    %c0_159 = arith.constant 0 : index
    %c0_160 = arith.constant 0 : index
    %332 = vector.load %arg3[%c1_158, %c0_159, %c0_160] : memref<2x128x512xf32, #tpu.memory_space<vmem>>, vector<1x128x512xf32>
    %333 = vector.shape_cast %332 : vector<1x128x512xf32> to vector<128x512xf32>
    %cst_161 = arith.constant dense<0.000000e+00> : vector<8x512xf32>
    %334 = tpu.matmul %329, %333, %cst_161 {dimension_numbers = #tpu.dot_dimension_numbers<[1], [0], [0], [1], [0, 0, 1, 1], [], []>} : vector<8x128xf32>, vector<128x512xf32>, vector<8x512xf32> -> vector<8x512xf32>
    %335 = arith.addf %331, %334 : vector<8x512xf32>
    %336 = vector.extract_strided_slice %335 {offsets = [0, 0], sizes = [8, 384], strides = [1, 1]} : vector<8x512xf32> to vector<8x384xf32>
    %cst_162 = arith.constant 5.000000e-01 : f32
    %337 = vector.broadcast %cst_162 : f32 to vector<8x384xf32>
    %338 = arith.mulf %337, %336 : vector<8x384xf32>
    %339 = math.tanh %338 : vector<8x384xf32>
    %cst_163 = arith.constant 5.000000e-01 : f32
    %340 = vector.broadcast %cst_163 : f32 to vector<8x384xf32>
    %341 = arith.mulf %340, %339 : vector<8x384xf32>
    %cst_164 = arith.constant 5.000000e-01 : f32
    %342 = vector.broadcast %cst_164 : f32 to vector<8x384xf32>
    %343 = arith.addf %341, %342 : vector<8x384xf32>
    %344 = vector.extract_strided_slice %343 {offsets = [0, 0], sizes = [8, 128], strides = [1, 1]} : vector<8x384xf32> to vector<8x128xf32>
    %345 = vector.extract_strided_slice %343 {offsets = [0, 128], sizes = [8, 128], strides = [1, 1]} : vector<8x384xf32> to vector<8x128xf32>
    %346 = vector.extract_strided_slice %343 {offsets = [0, 256], sizes = [8, 128], strides = [1, 1]} : vector<8x384xf32> to vector<8x128xf32>
    %347 = vector.extract_strided_slice %335 {offsets = [0, 384], sizes = [8, 128], strides = [1, 1]} : vector<8x512xf32> to vector<8x128xf32>
    %348 = math.tanh %347 : vector<8x128xf32>
    %349 = arith.mulf %345, %327 : vector<8x128xf32>
    %350 = arith.mulf %344, %348 : vector<8x128xf32>
    %351 = arith.addf %349, %350 : vector<8x128xf32>
    %352 = math.tanh %351 : vector<8x128xf32>
    %353 = arith.mulf %346, %352 : vector<8x128xf32>
    %c5_165 = arith.constant 5 : index
    %c0_166 = arith.constant 0 : index
    %c0_167 = arith.constant 0 : index
    %354 = vector.load %arg6[%c5_165, %c0_166, %c0_167] : memref<8x8x512xf32, #tpu.memory_space<vmem>>, vector<1x8x512xf32>
    %355 = vector.shape_cast %354 : vector<1x8x512xf32> to vector<8x512xf32>
    %c1_168 = arith.constant 1 : index
    %c0_169 = arith.constant 0 : index
    %c0_170 = arith.constant 0 : index
    %356 = vector.load %arg3[%c1_168, %c0_169, %c0_170] : memref<2x128x512xf32, #tpu.memory_space<vmem>>, vector<1x128x512xf32>
    %357 = vector.shape_cast %356 : vector<1x128x512xf32> to vector<128x512xf32>
    %cst_171 = arith.constant dense<0.000000e+00> : vector<8x512xf32>
    %358 = tpu.matmul %353, %357, %cst_171 {dimension_numbers = #tpu.dot_dimension_numbers<[1], [0], [0], [1], [0, 0, 1, 1], [], []>} : vector<8x128xf32>, vector<128x512xf32>, vector<8x512xf32> -> vector<8x512xf32>
    %359 = arith.addf %355, %358 : vector<8x512xf32>
    %360 = vector.extract_strided_slice %359 {offsets = [0, 0], sizes = [8, 384], strides = [1, 1]} : vector<8x512xf32> to vector<8x384xf32>
    %cst_172 = arith.constant 5.000000e-01 : f32
    %361 = vector.broadcast %cst_172 : f32 to vector<8x384xf32>
    %362 = arith.mulf %361, %360 : vector<8x384xf32>
    %363 = math.tanh %362 : vector<8x384xf32>
    %cst_173 = arith.constant 5.000000e-01 : f32
    %364 = vector.broadcast %cst_173 : f32 to vector<8x384xf32>
    %365 = arith.mulf %364, %363 : vector<8x384xf32>
    %cst_174 = arith.constant 5.000000e-01 : f32
    %366 = vector.broadcast %cst_174 : f32 to vector<8x384xf32>
    %367 = arith.addf %365, %366 : vector<8x384xf32>
    %368 = vector.extract_strided_slice %367 {offsets = [0, 0], sizes = [8, 128], strides = [1, 1]} : vector<8x384xf32> to vector<8x128xf32>
    %369 = vector.extract_strided_slice %367 {offsets = [0, 128], sizes = [8, 128], strides = [1, 1]} : vector<8x384xf32> to vector<8x128xf32>
    %370 = vector.extract_strided_slice %367 {offsets = [0, 256], sizes = [8, 128], strides = [1, 1]} : vector<8x384xf32> to vector<8x128xf32>
    %371 = vector.extract_strided_slice %359 {offsets = [0, 384], sizes = [8, 128], strides = [1, 1]} : vector<8x512xf32> to vector<8x128xf32>
    %372 = math.tanh %371 : vector<8x128xf32>
    %373 = arith.mulf %369, %351 : vector<8x128xf32>
    %374 = arith.mulf %368, %372 : vector<8x128xf32>
    %375 = arith.addf %373, %374 : vector<8x128xf32>
    %376 = math.tanh %375 : vector<8x128xf32>
    %377 = arith.mulf %370, %376 : vector<8x128xf32>
    %c6_175 = arith.constant 6 : index
    %c0_176 = arith.constant 0 : index
    %c0_177 = arith.constant 0 : index
    %378 = vector.load %arg6[%c6_175, %c0_176, %c0_177] : memref<8x8x512xf32, #tpu.memory_space<vmem>>, vector<1x8x512xf32>
    %379 = vector.shape_cast %378 : vector<1x8x512xf32> to vector<8x512xf32>
    %c1_178 = arith.constant 1 : index
    %c0_179 = arith.constant 0 : index
    %c0_180 = arith.constant 0 : index
    %380 = vector.load %arg3[%c1_178, %c0_179, %c0_180] : memref<2x128x512xf32, #tpu.memory_space<vmem>>, vector<1x128x512xf32>
    %381 = vector.shape_cast %380 : vector<1x128x512xf32> to vector<128x512xf32>
    %cst_181 = arith.constant dense<0.000000e+00> : vector<8x512xf32>
    %382 = tpu.matmul %377, %381, %cst_181 {dimension_numbers = #tpu.dot_dimension_numbers<[1], [0], [0], [1], [0, 0, 1, 1], [], []>} : vector<8x128xf32>, vector<128x512xf32>, vector<8x512xf32> -> vector<8x512xf32>
    %383 = arith.addf %379, %382 : vector<8x512xf32>
    %384 = vector.extract_strided_slice %383 {offsets = [0, 0], sizes = [8, 384], strides = [1, 1]} : vector<8x512xf32> to vector<8x384xf32>
    %cst_182 = arith.constant 5.000000e-01 : f32
    %385 = vector.broadcast %cst_182 : f32 to vector<8x384xf32>
    %386 = arith.mulf %385, %384 : vector<8x384xf32>
    %387 = math.tanh %386 : vector<8x384xf32>
    %cst_183 = arith.constant 5.000000e-01 : f32
    %388 = vector.broadcast %cst_183 : f32 to vector<8x384xf32>
    %389 = arith.mulf %388, %387 : vector<8x384xf32>
    %cst_184 = arith.constant 5.000000e-01 : f32
    %390 = vector.broadcast %cst_184 : f32 to vector<8x384xf32>
    %391 = arith.addf %389, %390 : vector<8x384xf32>
    %392 = vector.extract_strided_slice %391 {offsets = [0, 0], sizes = [8, 128], strides = [1, 1]} : vector<8x384xf32> to vector<8x128xf32>
    %393 = vector.extract_strided_slice %391 {offsets = [0, 128], sizes = [8, 128], strides = [1, 1]} : vector<8x384xf32> to vector<8x128xf32>
    %394 = vector.extract_strided_slice %391 {offsets = [0, 256], sizes = [8, 128], strides = [1, 1]} : vector<8x384xf32> to vector<8x128xf32>
    %395 = vector.extract_strided_slice %383 {offsets = [0, 384], sizes = [8, 128], strides = [1, 1]} : vector<8x512xf32> to vector<8x128xf32>
    %396 = math.tanh %395 : vector<8x128xf32>
    %397 = arith.mulf %393, %375 : vector<8x128xf32>
    %398 = arith.mulf %392, %396 : vector<8x128xf32>
    %399 = arith.addf %397, %398 : vector<8x128xf32>
    %400 = math.tanh %399 : vector<8x128xf32>
    %401 = arith.mulf %394, %400 : vector<8x128xf32>
    %c7_185 = arith.constant 7 : index
    %c0_186 = arith.constant 0 : index
    %c0_187 = arith.constant 0 : index
    %402 = vector.load %arg6[%c7_185, %c0_186, %c0_187] : memref<8x8x512xf32, #tpu.memory_space<vmem>>, vector<1x8x512xf32>
    %403 = vector.shape_cast %402 : vector<1x8x512xf32> to vector<8x512xf32>
    %c1_188 = arith.constant 1 : index
    %c0_189 = arith.constant 0 : index
    %c0_190 = arith.constant 0 : index
    %404 = vector.load %arg3[%c1_188, %c0_189, %c0_190] : memref<2x128x512xf32, #tpu.memory_space<vmem>>, vector<1x128x512xf32>
    %405 = vector.shape_cast %404 : vector<1x128x512xf32> to vector<128x512xf32>
    %cst_191 = arith.constant dense<0.000000e+00> : vector<8x512xf32>
    %406 = tpu.matmul %401, %405, %cst_191 {dimension_numbers = #tpu.dot_dimension_numbers<[1], [0], [0], [1], [0, 0, 1, 1], [], []>} : vector<8x128xf32>, vector<128x512xf32>, vector<8x512xf32> -> vector<8x512xf32>
    %407 = arith.addf %403, %406 : vector<8x512xf32>
    %408 = vector.extract_strided_slice %407 {offsets = [0, 0], sizes = [8, 384], strides = [1, 1]} : vector<8x512xf32> to vector<8x384xf32>
    %cst_192 = arith.constant 5.000000e-01 : f32
    %409 = vector.broadcast %cst_192 : f32 to vector<8x384xf32>
    %410 = arith.mulf %409, %408 : vector<8x384xf32>
    %411 = math.tanh %410 : vector<8x384xf32>
    %cst_193 = arith.constant 5.000000e-01 : f32
    %412 = vector.broadcast %cst_193 : f32 to vector<8x384xf32>
    %413 = arith.mulf %412, %411 : vector<8x384xf32>
    %cst_194 = arith.constant 5.000000e-01 : f32
    %414 = vector.broadcast %cst_194 : f32 to vector<8x384xf32>
    %415 = arith.addf %413, %414 : vector<8x384xf32>
    %416 = vector.extract_strided_slice %415 {offsets = [0, 0], sizes = [8, 128], strides = [1, 1]} : vector<8x384xf32> to vector<8x128xf32>
    %417 = vector.extract_strided_slice %415 {offsets = [0, 128], sizes = [8, 128], strides = [1, 1]} : vector<8x384xf32> to vector<8x128xf32>
    %418 = vector.extract_strided_slice %415 {offsets = [0, 256], sizes = [8, 128], strides = [1, 1]} : vector<8x384xf32> to vector<8x128xf32>
    %419 = vector.extract_strided_slice %407 {offsets = [0, 384], sizes = [8, 128], strides = [1, 1]} : vector<8x512xf32> to vector<8x128xf32>
    %420 = math.tanh %419 : vector<8x128xf32>
    %421 = arith.mulf %417, %399 : vector<8x128xf32>
    %422 = arith.mulf %416, %420 : vector<8x128xf32>
    %423 = arith.addf %421, %422 : vector<8x128xf32>
    %424 = math.tanh %423 : vector<8x128xf32>
    %425 = arith.mulf %418, %424 : vector<8x128xf32>
    %c1_195 = arith.constant 1 : index
    %c0_196 = arith.constant 0 : index
    %c0_197 = arith.constant 0 : index
    %426 = vector.load %arg4[%c1_195, %c0_196, %c0_197] : memref<2x8x128xf32, #tpu.memory_space<vmem>>, vector<1x8x128xf32>
    %427 = vector.shape_cast %426 : vector<1x8x128xf32> to vector<8x128xf32>
    %428 = vector.shape_cast %425 : vector<8x128xf32> to vector<1x8x128xf32>
    tpu.vector_store %arg4[%c1_195, %c0_196, %c0_197], %428 {strides = array<i32>} : memref<2x8x128xf32, #tpu.memory_space<vmem>>, vector<1x8x128xf32>,
    return
  }
}

</mosaic_0001>

<llo_original>
// kernel: _lambda_.1
$region0: #{_lambda_.1}
  #allocation0 [shape = 'u32[]', space=smem, size = 0x4, offset = 0x4, fixed_abs, tag = 'smem constant byte address 0x4 - core index']
  #allocation1 [shape = 'u32[144,128]{1,0:T(1,128)}', space=vmem, size = 0x12000, scoped, tag = 'internal scratch']
  #allocation2 [shape = 'f32[8,8,128]{2,1,0:T(8,128)}', space=vmem, size = 0x8000, scoped, tag = 'scratch operand']
  #allocation3 [shape = 'f32[8,8,512]{2,1,0:T(8,128)}', space=vmem, size = 0x20000, scoped, tag = 'scratch operand']
  %s0 = inlined_call_operand.vmem [shape: f32[8,8,512], index: 0, kind: input, shape index: {}]
  %s1 = inlined_call_operand.vmem [shape: f32[1,128,512], index: 1, kind: input, shape index: {}]
  %s2 = inlined_call_operand.vmem [shape: f32[1,1,512], index: 2, kind: input, shape index: {}]
  %s3 = inlined_call_operand.vmem [shape: f32[2,128,512], index: 3, kind: input, shape index: {}]
  %s4 = inlined_call_operand.vmem [shape: f32[2,8,128], index: 4, kind: output, shape index: {}]
  %s5 = sld [smem:[#allocation0]]
  $region26: #{_lambda_.1} parent=0
    _
  %s7 = ssub.s32 1, %s5
  %s8 = scalar_select 0, %s7, %s5
  // Predicated region
  $region2: #{_lambda_.1} parent=0 // pred_check
    _
  $region3: #{_lambda_.1} parent=0 // pred_check_branch
    %10 = sbr.rel (0) target = $region5
  $region4: #{_lambda_.1} parent=0 // pred_region
    _
  $region5: #{_lambda_.1} parent=0 // pred_fallthru
    _
  // Predicated region
  $region6: #{_lambda_.1} parent=0 // pred_check
    _
  $region7: #{_lambda_.1} parent=0 // pred_check_branch
    %12 = sbr.rel (0) target = $region9
  $region8: #{_lambda_.1} parent=0 // pred_region
    _
  $region9: #{_lambda_.1} parent=0 // pred_fallthru
    _
  // Predicated region
  $region10: #{_lambda_.1} parent=0 // pred_check
    _
  $region11: #{_lambda_.1} parent=0 // pred_check_branch
    %14 = sbr.rel (0) target = $region13
  $region12: #{_lambda_.1} parent=0 // pred_region
    _
  $region13: #{_lambda_.1} parent=0 // pred_fallthru
    _
  // Predicated region
  $region14: #{_lambda_.1} parent=0 // pred_check
    _
  $region15: #{_lambda_.1} parent=0 // pred_check_branch
    %16 = sbr.rel (0) target = $region17
  $region16: #{_lambda_.1} parent=0 // pred_region
    _
  $region17: #{_lambda_.1} parent=0 // pred_fallthru
    _
  %v17 = vld [vmem:[%s0] sm:$0xff]
  %v18 = vld [vmem:[%s0 + $0x8] sm:$0xff]
  %v19 = vld [vmem:[%s0 + $0x10] sm:$0xff]
  %v20 = vld [vmem:[%s0 + $0x18] sm:$0xff]
  %v21 = vld [vmem:[%s3] sm:$0xff]
  %v22 = vld [vmem:[%s3 + $0x8] sm:$0xff]
  %v23 = vld [vmem:[%s3 + $0x10] sm:$0xff]
  %v24 = vld [vmem:[%s3 + $0x18] sm:$0xff]
  %v25 = vld [vmem:[%s3 + $0x20] sm:$0xff]
  %v26 = vld [vmem:[%s3 + $0x28] sm:$0xff]
  %v27 = vld [vmem:[%s3 + $0x30] sm:$0xff]
  %v28 = vld [vmem:[%s3 + $0x38] sm:$0xff]
  %v29 = vld [vmem:[%s3 + $0x40] sm:$0xff]
  %v30 = vld [vmem:[%s3 + $0x48] sm:$0xff]
  %v31 = vld [vmem:[%s3 + $0x50] sm:$0xff]
  %v32 = vld [vmem:[%s3 + $0x58] sm:$0xff]
  %v33 = vld [vmem:[%s3 + $0x60] sm:$0xff]
  %v34 = vld [vmem:[%s3 + $0x68] sm:$0xff]
  %v35 = vld [vmem:[%s3 + $0x70] sm:$0xff]
  %v36 = vld [vmem:[%s3 + $0x78] sm:$0xff]
  %v37 = vld [vmem:[%s3 + $0x80] sm:$0xff]
  %v38 = vld [vmem:[%s3 + $0x88] sm:$0xff]
  %v39 = vld [vmem:[%s3 + $0x90] sm:$0xff]
  %v40 = vld [vmem:[%s3 + $0x98] sm:$0xff]
  %v41 = vld [vmem:[%s3 + $0xa0] sm:$0xff]
  %v42 = vld [vmem:[%s3 + $0xa8] sm:$0xff]
  %v43 = vld [vmem:[%s3 + $0xb0] sm:$0xff]
  %v44 = vld [vmem:[%s3 + $0xb8] sm:$0xff]
  %v45 = vld [vmem:[%s3 + $0xc0] sm:$0xff]
  %v46 = vld [vmem:[%s3 + $0xc8] sm:$0xff]
  %v47 = vld [vmem:[%s3 + $0xd0] sm:$0xff]
  %v48 = vld [vmem:[%s3 + $0xd8] sm:$0xff]
  %v49 = vld [vmem:[%s3 + $0xe0] sm:$0xff]
  %v50 = vld [vmem:[%s3 + $0xe8] sm:$0xff]
  %v51 = vld [vmem:[%s3 + $0xf0] sm:$0xff]
  %v52 = vld [vmem:[%s3 + $0xf8] sm:$0xff]
  %v53 = vld [vmem:[%s3 + $0x100] sm:$0xff]
  %v54 = vld [vmem:[%s3 + $0x108] sm:$0xff]
  %v55 = vld [vmem:[%s3 + $0x110] sm:$0xff]
  %v56 = vld [vmem:[%s3 + $0x118] sm:$0xff]
  %v57 = vld [vmem:[%s3 + $0x120] sm:$0xff]
  %v58 = vld [vmem:[%s3 + $0x128] sm:$0xff]
  %v59 = vld [vmem:[%s3 + $0x130] sm:$0xff]
  %v60 = vld [vmem:[%s3 + $0x138] sm:$0xff]
  %v61 = vld [vmem:[%s3 + $0x140] sm:$0xff]
  %v62 = vld [vmem:[%s3 + $0x148] sm:$0xff]
  %v63 = vld [vmem:[%s3 + $0x150] sm:$0xff]
  %v64 = vld [vmem:[%s3 + $0x158] sm:$0xff]
  %v65 = vld [vmem:[%s3 + $0x160] sm:$0xff]
  %v66 = vld [vmem:[%s3 + $0x168] sm:$0xff]
  %v67 = vld [vmem:[%s3 + $0x170] sm:$0xff]
  %v68 = vld [vmem:[%s3 + $0x178] sm:$0xff]
  %v69 = vld [vmem:[%s3 + $0x180] sm:$0xff]
  %v70 = vld [vmem:[%s3 + $0x188] sm:$0xff]
  %v71 = vld [vmem:[%s3 + $0x190] sm:$0xff]
  %v72 = vld [vmem:[%s3 + $0x198] sm:$0xff]
  %v73 = vld [vmem:[%s3 + $0x1a0] sm:$0xff]
  %v74 = vld [vmem:[%s3 + $0x1a8] sm:$0xff]
  %v75 = vld [vmem:[%s3 + $0x1b0] sm:$0xff]
  %v76 = vld [vmem:[%s3 + $0x1b8] sm:$0xff]
  %v77 = vld [vmem:[%s3 + $0x1c0] sm:$0xff]
  %v78 = vld [vmem:[%s3 + $0x1c8] sm:$0xff]
  %v79 = vld [vmem:[%s3 + $0x1d0] sm:$0xff]
  %v80 = vld [vmem:[%s3 + $0x1d8] sm:$0xff]
  %v81 = vld [vmem:[%s3 + $0x1e0] sm:$0xff]
  %v82 = vld [vmem:[%s3 + $0x1e8] sm:$0xff]
  %v83 = vld [vmem:[%s3 + $0x1f0] sm:$0xff]
  %v84 = vld [vmem:[%s3 + $0x1f8] sm:$0xff]
  %85 = vmatprep.subr.mxu0 %v22
  %86 = vmatpush1.msra.mxu0 %v21
  %87 = vmatprep.subr.mxu0 %v26
  %88 = vmatpush1.msra.mxu0 %v25
  %89 = vmatprep.subr.mxu0 %v30
  %90 = vmatpush1.msra.mxu0 %v29
  %91 = vmatprep.subr.mxu0 %v34
  %92 = vmatpush1.msra.mxu0 %v33
  %93 = vmatprep.subr.mxu0 %v38
  %94 = vmatpush1.msra.mxu0 %v37
  %95 = vmatprep.subr.mxu0 %v42
  %96 = vmatpush1.msra.mxu0 %v41
  %97 = vmatprep.subr.mxu0 %v46
  %98 = vmatpush1.msra.mxu0 %v45
  %99 = vmatprep.subr.mxu0 %v50
  %100 = vmatpush1.msra.mxu0 %v49
  %101 = vmatprep.subr.mxu0 %v54
  %102 = vmatpush1.msra.mxu0 %v53
  %103 = vmatprep.subr.mxu0 %v58
  %104 = vmatpush1.msra.mxu0 %v57
  %105 = vmatprep.subr.mxu0 %v62
  %106 = vmatpush1.msra.mxu0 %v61
  %107 = vmatprep.subr.mxu0 %v66
  %108 = vmatpush1.msra.mxu0 %v65
  %109 = vmatprep.subr.mxu0 %v70
  %110 = vmatpush1.msra.mxu0 %v69
  %111 = vmatprep.subr.mxu0 %v74
  %112 = vmatpush1.msra.mxu0 %v73
  %113 = vmatprep.subr.mxu0 %v78
  %114 = vmatpush1.msra.mxu0 %v77
  %115 = vmatprep.subr.mxu0 %v82
  %116 = vmatpush1.msra.mxu0 %v81
  %117 = vmatprep.subr.mxu0 0.0
  %118 = vmatpush1.msra.mxu0 0.0
  %119 = vmatprep.subr.mxu0 0.0
  %120 = vmatpush1.msra.mxu0 0.0
  %121 = vmatprep.subr.mxu0 0.0
  %122 = vmatpush1.msra.mxu0 0.0
  %123 = vmatprep.subr.mxu0 0.0
  %124 = vmatpush1.msra.mxu0 0.0
  %125 = vmatprep.subr.mxu0 0.0
  %126 = vmatpush1.msra.mxu0 0.0
  %127 = vmatprep.subr.mxu0 0.0
  %128 = vmatpush1.msra.mxu0 0.0
  %129 = vmatprep.subr.mxu0 0.0
  %130 = vmatpush1.msra.mxu0 0.0
  %131 = vmatprep.subr.mxu0 0.0
  %132 = vmatpush1.msra.mxu0 0.0
  %133 = vmatprep.subr.mxu0 0.0
  %134 = vmatpush1.msra.mxu0 0.0
  %135 = vmatprep.subr.mxu0 0.0
  %136 = vmatpush1.msra.mxu0 0.0
  %137 = vmatprep.subr.mxu0 0.0
  %138 = vmatpush1.msra.mxu0 0.0
  %139 = vmatprep.subr.mxu0 0.0
  %140 = vmatpush1.msra.mxu0 0.0
  %141 = vmatprep.subr.mxu0 0.0
  %142 = vmatpush1.msra.mxu0 0.0
  %143 = vmatprep.subr.mxu0 0.0
  %144 = vmatpush1.msra.mxu0 0.0
  %145 = vmatprep.subr.mxu0 0.0
  %146 = vmatpush1.msra.mxu0 0.0
  %147 = vmatprep.subr.mxu0 0.0
  %148 = vmatpush1.msra.mxu0 0.0
  %149 = vmatprep.mubr.f32.mxu0 0.0
  %150 = vmatmul.mubr.f32.gmra.mrb[0].mxu0 0.0
  %v151 = vpop.f32.mrb[0].mxu0
  %v152 = vadd.f32 0.0, %v151
  %v153 = vpop.f32.mrb[0].mxu0
  %v154 = vadd.f32 0.0, %v153
  %155 = vdwg.mxu0
  %156 = vmatprep.subr.mxu0 %v24
  %157 = vmatpush1.msra.mxu0 %v23
  %158 = vmatprep.subr.mxu0 %v28
  %159 = vmatpush1.msra.mxu0 %v27
  %160 = vmatprep.subr.mxu0 %v32
  %161 = vmatpush1.msra.mxu0 %v31
  %162 = vmatprep.subr.mxu0 %v36
  %163 = vmatpush1.msra.mxu0 %v35
  %164 = vmatprep.subr.mxu0 %v40
  %165 = vmatpush1.msra.mxu0 %v39
  %166 = vmatprep.subr.mxu0 %v44
  %167 = vmatpush1.msra.mxu0 %v43
  %168 = vmatprep.subr.mxu0 %v48
  %169 = vmatpush1.msra.mxu0 %v47
  %170 = vmatprep.subr.mxu0 %v52
  %171 = vmatpush1.msra.mxu0 %v51
  %172 = vmatprep.subr.mxu0 %v56
  %173 = vmatpush1.msra.mxu0 %v55
  %174 = vmatprep.subr.mxu0 %v60
  %175 = vmatpush1.msra.mxu0 %v59
  %176 = vmatprep.subr.mxu0 %v64
  %177 = vmatpush1.msra.mxu0 %v63
  %178 = vmatprep.subr.mxu0 %v68
  %179 = vmatpush1.msra.mxu0 %v67
  %180 = vmatprep.subr.mxu0 %v72
  %181 = vmatpush1.msra.mxu0 %v71
  %182 = vmatprep.subr.mxu0 %v76
  %183 = vmatpush1.msra.mxu0 %v75
  %184 = vmatprep.subr.mxu0 %v80
  %185 = vmatpush1.msra.mxu0 %v79
  %186 = vmatprep.subr.mxu0 %v84
  %187 = vmatpush1.msra.mxu0 %v83
  %188 = vmatprep.subr.mxu0 0.0
  %189 = vmatpush1.msra.mxu0 0.0
  %190 = vmatprep.subr.mxu0 0.0
  %191 = vmatpush1.msra.mxu0 0.0
  %192 = vmatprep.subr.mxu0 0.0
  %193 = vmatpush1.msra.mxu0 0.0
  %194 = vmatprep.subr.mxu0 0.0
  %195 = vmatpush1.msra.mxu0 0.0
  %196 = vmatprep.subr.mxu0 0.0
  %197 = vmatpush1.msra.mxu0 0.0
  %198 = vmatprep.subr.mxu0 0.0
  %199 = vmatpush1.msra.mxu0 0.0
  %200 = vmatprep.subr.mxu0 0.0
  %201 = vmatpush1.msra.mxu0 0.0
  %202 = vmatprep.subr.mxu0 0.0
  %203 = vmatpush1.msra.mxu0 0.0
  %204 = vmatprep.subr.mxu0 0.0
  %205 = vmatpush1.msra.mxu0 0.0
  %206 = vmatprep.subr.mxu0 0.0
  %207 = vmatpush1.msra.mxu0 0.0
  %208 = vmatprep.subr.mxu0 0.0
  %209 = vmatpush1.msra.mxu0 0.0
  %210 = vmatprep.subr.mxu0 0.0
  %211 = vmatpush1.msra.mxu0 0.0
  %212 = vmatprep.subr.mxu0 0.0
  %213 = vmatpush1.msra.mxu0 0.0
  %214 = vmatprep.subr.mxu0 0.0
  %215 = vmatpush1.msra.mxu0 0.0
  %216 = vmatprep.subr.mxu0 0.0
  %217 = vmatpush1.msra.mxu0 0.0
  %218 = vmatprep.subr.mxu0 0.0
  %219 = vmatpush1.msra.mxu0 0.0
  %220 = vmatprep.mubr.f32.mxu0 0.0
  %221 = vmatmul.mubr.f32.gmra.mrb[0].mxu0 0.0
  %v222 = vpop.f32.mrb[0].mxu0
  %v223 = vadd.f32 0.0, %v222
  %v224 = vpop.f32.mrb[0].mxu0
  %v225 = vadd.f32 0.0, %v224
  %226 = vdwg.mxu0
  %v227 = vadd.f32 %v17, %v152
  %v228 = vadd.f32 %v18, %v154
  %v229 = vadd.f32 %v19, %v223
  %v230 = vadd.f32 %v20, %v225
  %v231 = vmul.f32 %v227, 0.5
  %v232 = vmul.f32 %v228, 0.5
  %v233 = vmul.f32 %v229, 0.5
  %v234 = vtanh.pop %v231
  %v235 = vtanh.pop %v232
  %v236 = vtanh.pop %v233
  %v237 = vmul.f32 %v234, 0.5
  %v238 = vmul.f32 %v235, 0.5
  %v239 = vmul.f32 %v236, 0.5
  %v240 = vadd.f32 %v237, 0.5
  %v241 = vadd.f32 %v238, 0.5
  %v242 = vadd.f32 %v239, 0.5
  %v243 = vtanh.pop %v230
  %v244 = vmul.f32 %v241, 0.0
  %v245 = vmul.f32 %v240, %v243
  %v246 = vadd.f32 %v244, %v245
  %v247 = vtanh.pop %v246
  %v248 = vmul.f32 %v242, %v247
  %249 = vst [vmem:[#allocation2] sm:$0xff] %v248
  %s250 = scalar_lea.vmem %s0, 32
  %v251 = vld [vmem:[%s250] sm:$0xff]
  %v252 = vld [vmem:[%s250 + $0x8] sm:$0xff]
  %v253 = vld [vmem:[%s250 + $0x10] sm:$0xff]
  %v254 = vld [vmem:[%s250 + $0x18] sm:$0xff]
  %v255 = vld [vmem:[%s3] sm:$0xff]
  %v256 = vld [vmem:[%s3 + $0x8] sm:$0xff]
  %v257 = vld [vmem:[%s3 + $0x10] sm:$0xff]
  %v258 = vld [vmem:[%s3 + $0x18] sm:$0xff]
  %v259 = vld [vmem:[%s3 + $0x20] sm:$0xff]
  %v260 = vld [vmem:[%s3 + $0x28] sm:$0xff]
  %v261 = vld [vmem:[%s3 + $0x30] sm:$0xff]
  %v262 = vld [vmem:[%s3 + $0x38] sm:$0xff]
  %v263 = vld [vmem:[%s3 + $0x40] sm:$0xff]
  %v264 = vld [vmem:[%s3 + $0x48] sm:$0xff]
  %v265 = vld [vmem:[%s3 + $0x50] sm:$0xff]
  %v266 = vld [vmem:[%s3 + $0x58] sm:$0xff]
  %v267 = vld [vmem:[%s3 + $0x60] sm:$0xff]
  %v268 = vld [vmem:[%s3 + $0x68] sm:$0xff]
  %v269 = vld [vmem:[%s3 + $0x70] sm:$0xff]
  %v270 = vld [vmem:[%s3 + $0x78] sm:$0xff]
  %v271 = vld [vmem:[%s3 + $0x80] sm:$0xff]
  %v272 = vld [vmem:[%s3 + $0x88] sm:$0xff]
  %v273 = vld [vmem:[%s3 + $0x90] sm:$0xff]
  %v274 = vld [vmem:[%s3 + $0x98] sm:$0xff]
  %v275 = vld [vmem:[%s3 + $0xa0] sm:$0xff]
  %v276 = vld [vmem:[%s3 + $0xa8] sm:$0xff]
  %v277 = vld [vmem:[%s3 + $0xb0] sm:$0xff]
  %v278 = vld [vmem:[%s3 + $0xb8] sm:$0xff]
  %v279 = vld [vmem:[%s3 + $0xc0] sm:$0xff]
  %v280 = vld [vmem:[%s3 + $0xc8] sm:$0xff]
  %v281 = vld [vmem:[%s3 + $0xd0] sm:$0xff]
  %v282 = vld [vmem:[%s3 + $0xd8] sm:$0xff]
  %v283 = vld [vmem:[%s3 + $0xe0] sm:$0xff]
  %v284 = vld [vmem:[%s3 + $0xe8] sm:$0xff]
  %v285 = vld [vmem:[%s3 + $0xf0] sm:$0xff]
  %v286 = vld [vmem:[%s3 + $0xf8] sm:$0xff]
  %v287 = vld [vmem:[%s3 + $0x100] sm:$0xff]
  %v288 = vld [vmem:[%s3 + $0x108] sm:$0xff]
  %v289 = vld [vmem:[%s3 + $0x110] sm:$0xff]
  %v290 = vld [vmem:[%s3 + $0x118] sm:$0xff]
  %v291 = vld [vmem:[%s3 + $0x120] sm:$0xff]
  %v292 = vld [vmem:[%s3 + $0x128] sm:$0xff]
  %v293 = vld [vmem:[%s3 + $0x130] sm:$0xff]
  %v294 = vld [vmem:[%s3 + $0x138] sm:$0xff]
  %v295 = vld [vmem:[%s3 + $0x140] sm:$0xff]
  %v296 = vld [vmem:[%s3 + $0x148] sm:$0xff]
  %v297 = vld [vmem:[%s3 + $0x150] sm:$0xff]
  %v298 = vld [vmem:[%s3 + $0x158] sm:$0xff]
  %v299 = vld [vmem:[%s3 + $0x160] sm:$0xff]
  %v300 = vld [vmem:[%s3 + $0x168] sm:$0xff]
  %v301 = vld [vmem:[%s3 + $0x170] sm:$0xff]
  %v302 = vld [vmem:[%s3 + $0x178] sm:$0xff]
  %v303 = vld [vmem:[%s3 + $0x180] sm:$0xff]
  %v304 = vld [vmem:[%s3 + $0x188] sm:$0xff]
  %v305 = vld [vmem:[%s3 + $0x190] sm:$0xff]
  %v306 = vld [vmem:[%s3 + $0x198] sm:$0xff]
  %v307 = vld [vmem:[%s3 + $0x1a0] sm:$0xff]
  %v308 = vld [vmem:[%s3 + $0x1a8] sm:$0xff]
  %v309 = vld [vmem:[%s3 + $0x1b0] sm:$0xff]
  %v310 = vld [vmem:[%s3 + $0x1b8] sm:$0xff]
  %v311 = vld [vmem:[%s3 + $0x1c0] sm:$0xff]
  %v312 = vld [vmem:[%s3 + $0x1c8] sm:$0xff]
  %v313 = vld [vmem:[%s3 + $0x1d0] sm:$0xff]
  %v314 = vld [vmem:[%s3 + $0x1d8] sm:$0xff]
  %v315 = vld [vmem:[%s3 + $0x1e0] sm:$0xff]
  %v316 = vld [vmem:[%s3 + $0x1e8] sm:$0xff]
  %v317 = vld [vmem:[%s3 + $0x1f0] sm:$0xff]
  %v318 = vld [vmem:[%s3 + $0x1f8] sm:$0xff]
  %319 = vmatprep.subr.mxu0 %v256
  %320 = vmatpush1.msra.mxu0 %v255
  %321 = vmatprep.subr.mxu0 %v260
  %322 = vmatpush1.msra.mxu0 %v259
  %323 = vmatprep.subr.mxu0 %v264
  %324 = vmatpush1.msra.mxu0 %v263
  %325 = vmatprep.subr.mxu0 %v268
  %326 = vmatpush1.msra.mxu0 %v267
  %327 = vmatprep.subr.mxu0 %v272
  %328 = vmatpush1.msra.mxu0 %v271
  %329 = vmatprep.subr.mxu0 %v276
  %330 = vmatpush1.msra.mxu0 %v275
  %331 = vmatprep.subr.mxu0 %v280
  %332 = vmatpush1.msra.mxu0 %v279
  %333 = vmatprep.subr.mxu0 %v284
  %334 = vmatpush1.msra.mxu0 %v283
  %335 = vmatprep.subr.mxu0 %v288
  %336 = vmatpush1.msra.mxu0 %v287
  %337 = vmatprep.subr.mxu0 %v292
  %338 = vmatpush1.msra.mxu0 %v291
  %339 = vmatprep.subr.mxu0 %v296
  %340 = vmatpush1.msra.mxu0 %v295
  %341 = vmatprep.subr.mxu0 %v300
  %342 = vmatpush1.msra.mxu0 %v299
  %343 = vmatprep.subr.mxu0 %v304
  %344 = vmatpush1.msra.mxu0 %v303
  %345 = vmatprep.subr.mxu0 %v308
  %346 = vmatpush1.msra.mxu0 %v307
  %347 = vmatprep.subr.mxu0 %v312
  %348 = vmatpush1.msra.mxu0 %v311
  %349 = vmatprep.subr.mxu0 %v316
  %350 = vmatpush1.msra.mxu0 %v315
  %351 = vmatprep.subr.mxu0 0.0
  %352 = vmatpush1.msra.mxu0 0.0
  %353 = vmatprep.subr.mxu0 0.0
  %354 = vmatpush1.msra.mxu0 0.0
  %355 = vmatprep.subr.mxu0 0.0
  %356 = vmatpush1.msra.mxu0 0.0
  %357 = vmatprep.subr.mxu0 0.0
  %358 = vmatpush1.msra.mxu0 0.0
  %359 = vmatprep.subr.mxu0 0.0
  %360 = vmatpush1.msra.mxu0 0.0
  %361 = vmatprep.subr.mxu0 0.0
  %362 = vmatpush1.msra.mxu0 0.0
  %363 = vmatprep.subr.mxu0 0.0
  %364 = vmatpush1.msra.mxu0 0.0
  %365 = vmatprep.subr.mxu0 0.0
  %366 = vmatpush1.msra.mxu0 0.0
  %367 = vmatprep.subr.mxu0 0.0
  %368 = vmatpush1.msra.mxu0 0.0
  %369 = vmatprep.subr.mxu0 0.0
  %370 = vmatpush1.msra.mxu0 0.0
  %371 = vmatprep.subr.mxu0 0.0
  %372 = vmatpush1.msra.mxu0 0.0
  %373 = vmatprep.subr.mxu0 0.0
  %374 = vmatpush1.msra.mxu0 0.0
  %375 = vmatprep.subr.mxu0 0.0
  %376 = vmatpush1.msra.mxu0 0.0
  %377 = vmatprep.subr.mxu0 0.0
  %378 = vmatpush1.msra.mxu0 0.0
  %379 = vmatprep.subr.mxu0 0.0
  %380 = vmatpush1.msra.mxu0 0.0
  %381 = vmatprep.subr.mxu0 0.0
  %382 = vmatpush1.msra.mxu0 0.0
  %383 = vmatprep.mubr.f32.mxu0 0.0
  %384 = vmatmul.mubr.f32.gmra.mrb[0].mxu0 %v248
  %v385 = vpop.f32.mrb[0].mxu0
  %v386 = vadd.f32 0.0, %v385
  %v387 = vpop.f32.mrb[0].mxu0
  %v388 = vadd.f32 0.0, %v387
  %389 = vdwg.mxu0
  %390 = vmatprep.subr.mxu0 %v258
  %391 = vmatpush1.msra.mxu0 %v257
  %392 = vmatprep.subr.mxu0 %v262
  %393 = vmatpush1.msra.mxu0 %v261
  %394 = vmatprep.subr.mxu0 %v266
  %395 = vmatpush1.msra.mxu0 %v265
  %396 = vmatprep.subr.mxu0 %v270
  %397 = vmatpush1.msra.mxu0 %v269
  %398 = vmatprep.subr.mxu0 %v274
  %399 = vmatpush1.msra.mxu0 %v273
  %400 = vmatprep.subr.mxu0 %v278
  %401 = vmatpush1.msra.mxu0 %v277
  %402 = vmatprep.subr.mxu0 %v282
  %403 = vmatpush1.msra.mxu0 %v281
  %404 = vmatprep.subr.mxu0 %v286
  %405 = vmatpush1.msra.mxu0 %v285
  %406 = vmatprep.subr.mxu0 %v290
  %407 = vmatpush1.msra.mxu0 %v289
  %408 = vmatprep.subr.mxu0 %v294
  %409 = vmatpush1.msra.mxu0 %v293
  %410 = vmatprep.subr.mxu0 %v298
  %411 = vmatpush1.msra.mxu0 %v297
  %412 = vmatprep.subr.mxu0 %v302
  %413 = vmatpush1.msra.mxu0 %v301
  %414 = vmatprep.subr.mxu0 %v306
  %415 = vmatpush1.msra.mxu0 %v305
  %416 = vmatprep.subr.mxu0 %v310
  %417 = vmatpush1.msra.mxu0 %v309
  %418 = vmatprep.subr.mxu0 %v314
  %419 = vmatpush1.msra.mxu0 %v313
  %420 = vmatprep.subr.mxu0 %v318
  %421 = vmatpush1.msra.mxu0 %v317
  %422 = vmatprep.subr.mxu0 0.0
  %423 = vmatpush1.msra.mxu0 0.0
  %424 = vmatprep.subr.mxu0 0.0
  %425 = vmatpush1.msra.mxu0 0.0
  %426 = vmatprep.subr.mxu0 0.0
  %427 = vmatpush1.msra.mxu0 0.0
  %428 = vmatprep.subr.mxu0 0.0
  %429 = vmatpush1.msra.mxu0 0.0
  %430 = vmatprep.subr.mxu0 0.0
  %431 = vmatpush1.msra.mxu0 0.0
  %432 = vmatprep.subr.mxu0 0.0
  %433 = vmatpush1.msra.mxu0 0.0
  %434 = vmatprep.subr.mxu0 0.0
  %435 = vmatpush1.msra.mxu0 0.0
  %436 = vmatprep.subr.mxu0 0.0
  %437 = vmatpush1.msra.mxu0 0.0
  %438 = vmatprep.subr.mxu0 0.0
  %439 = vmatpush1.msra.mxu0 0.0
  %440 = vmatprep.subr.mxu0 0.0
  %441 = vmatpush1.msra.mxu0 0.0
  %442 = vmatprep.subr.mxu0 0.0
  %443 = vmatpush1.msra.mxu0 0.0
  %444 = vmatprep.subr.mxu0 0.0
  %445 = vmatpush1.msra.mxu0 0.0
  %446 = vmatprep.subr.mxu0 0.0
  %447 = vmatpush1.msra.mxu0 0.0
  %448 = vmatprep.subr.mxu0 0.0
  %449 = vmatpush1.msra.mxu0 0.0
  %450 = vmatprep.subr.mxu0 0.0
  %451 = vmatpush1.msra.mxu0 0.0
  %452 = vmatprep.subr.mxu0 0.0
  %453 = vmatpush1.msra.mxu0 0.0
  %454 = vmatprep.mubr.f32.mxu0 0.0
  %455 = vmatmul.mubr.f32.gmra.mrb[0].mxu0 %v248
  %v456 = vpop.f32.mrb[0].mxu0
  %v457 = vadd.f32 0.0, %v456
  %v458 = vpop.f32.mrb[0].mxu0
  %v459 = vadd.f32 0.0, %v458
  %460 = vdwg.mxu0
  %v461 = vadd.f32 %v251, %v386
  %v462 = vadd.f32 %v252, %v388
  %v463 = vadd.f32 %v253, %v457
  %v464 = vadd.f32 %v254, %v459
  %v465 = vmul.f32 %v461, 0.5
  %v466 = vmul.f32 %v462, 0.5
  %v467 = vmul.f32 %v463, 0.5
  %v468 = vtanh.pop %v465
  %v469 = vtanh.pop %v466
  %v470 = vtanh.pop %v467
  %v471 = vmul.f32 %v468, 0.5
  %v472 = vmul.f32 %v469, 0.5
  %v473 = vmul.f32 %v470, 0.5
  %v474 = vadd.f32 %v471, 0.5
  %v475 = vadd.f32 %v472, 0.5
  %v476 = vadd.f32 %v473, 0.5
  %v477 = vtanh.pop %v464
  %v478 = vmul.f32 %v475, %v246
  %v479 = vmul.f32 %v474, %v477
  %v480 = vadd.f32 %v478, %v479
  %v481 = vtanh.pop %v480
  %v482 = vmul.f32 %v476, %v481
  %s483 = scalar_lea.vmem [#allocation2], 8
  %484 = vst [vmem:[%s483] sm:$0xff] %v482
  %s485 = scalar_lea.vmem %s0, 64
  %v486 = vld [vmem:[%s485] sm:$0xff]
  %v487 = vld [vmem:[%s485 + $0x8] sm:$0xff]
  %v488 = vld [vmem:[%s485 + $0x10] sm:$0xff]
  %v489 = vld [vmem:[%s485 + $0x18] sm:$0xff]
  %v490 = vld [vmem:[%s3] sm:$0xff]
  %v491 = vld [vmem:[%s3 + $0x8] sm:$0xff]
  %v492 = vld [vmem:[%s3 + $0x10] sm:$0xff]
  %v493 = vld [vmem:[%s3 + $0x18] sm:$0xff]
  %v494 = vld [vmem:[%s3 + $0x20] sm:$0xff]
  %v495 = vld [vmem:[%s3 + $0x28] sm:$0xff]
  %v496 = vld [vmem:[%s3 + $0x30] sm:$0xff]
  %v497 = vld [vmem:[%s3 + $0x38] sm:$0xff]
  %v498 = vld [vmem:[%s3 + $0x40] sm:$0xff]
  %v499 = vld [vmem:[%s3 + $0x48] sm:$0xff]
  %v500 = vld [vmem:[%s3 + $0x50] sm:$0xff]
  %v501 = vld [vmem:[%s3 + $0x58] sm:$0xff]
  %v502 = vld [vmem:[%s3 + $0x60] sm:$0xff]
  %v503 = vld [vmem:[%s3 + $0x68] sm:$0xff]
  %v504 = vld [vmem:[%s3 + $0x70] sm:$0xff]
  %v505 = vld [vmem:[%s3 + $0x78] sm:$0xff]
  %v506 = vld [vmem:[%s3 + $0x80] sm:$0xff]
  %v507 = vld [vmem:[%s3 + $0x88] sm:$0xff]
  %v508 = vld [vmem:[%s3 + $0x90] sm:$0xff]
  %v509 = vld [vmem:[%s3 + $0x98] sm:$0xff]
  %v510 = vld [vmem:[%s3 + $0xa0] sm:$0xff]
  %v511 = vld [vmem:[%s3 + $0xa8] sm:$0xff]
  %v512 = vld [vmem:[%s3 + $0xb0] sm:$0xff]
  %v513 = vld [vmem:[%s3 + $0xb8] sm:$0xff]
  %v514 = vld [vmem:[%s3 + $0xc0] sm:$0xff]
  %v515 = vld [vmem:[%s3 + $0xc8] sm:$0xff]
  %v516 = vld [vmem:[%s3 + $0xd0] sm:$0xff]
  %v517 = vld [vmem:[%s3 + $0xd8] sm:$0xff]
  %v518 = vld [vmem:[%s3 + $0xe0] sm:$0xff]
  %v519 = vld [vmem:[%s3 + $0xe8] sm:$0xff]
  %v520 = vld [vmem:[%s3 + $0xf0] sm:$0xff]
  %v521 = vld [vmem:[%s3 + $0xf8] sm:$0xff]
  %v522 = vld [vmem:[%s3 + $0x100] sm:$0xff]
  %v523 = vld [vmem:[%s3 + $0x108] sm:$0xff]
  %v524 = vld [vmem:[%s3 + $0x110] sm:$0xff]
  %v525 = vld [vmem:[%s3 + $0x118] sm:$0xff]
  %v526 = vld [vmem:[%s3 + $0x120] sm:$0xff]
  %v527 = vld [vmem:[%s3 + $0x128] sm:$0xff]
  %v528 = vld [vmem:[%s3 + $0x130] sm:$0xff]
  %v529 = vld [vmem:[%s3 + $0x138] sm:$0xff]
  %v530 = vld [vmem:[%s3 + $0x140] sm:$0xff]
  %v531 = vld [vmem:[%s3 + $0x148] sm:$0xff]
  %v532 = vld [vmem:[%s3 + $0x150] sm:$0xff]
  %v533 = vld [vmem:[%s3 + $0x158] sm:$0xff]
  %v534 = vld [vmem:[%s3 + $0x160] sm:$0xff]
  %v535 = vld [vmem:[%s3 + $0x168] sm:$0xff]
  %v536 = vld [vmem:[%s3 + $0x170] sm:$0xff]
  %v537 = vld [vmem:[%s3 + $0x178] sm:$0xff]
  %v538 = vld [vmem:[%s3 + $0x180] sm:$0xff]
  %v539 = vld [vmem:[%s3 + $0x188] sm:$0xff]
  %v540 = vld [vmem:[%s3 + $0x190] sm:$0xff]
  %v541 = vld [vmem:[%s3 + $0x198] sm:$0xff]
  %v542 = vld [vmem:[%s3 + $0x1a0] sm:$0xff]
  %v543 = vld [vmem:[%s3 + $0x1a8] sm:$0xff]
  %v544 = vld [vmem:[%s3 + $0x1b0] sm:$0xff]
  %v545 = vld [vmem:[%s3 + $0x1b8] sm:$0xff]
  %v546 = vld [vmem:[%s3 + $0x1c0] sm:$0xff]
  %v547 = vld [vmem:[%s3 + $0x1c8] sm:$0xff]
  %v548 = vld [vmem:[%s3 + $0x1d0] sm:$0xff]
  %v549 = vld [vmem:[%s3 + $0x1d8] sm:$0xff]
  %v550 = vld [vmem:[%s3 + $0x1e0] sm:$0xff]
  %v551 = vld [vmem:[%s3 + $0x1e8] sm:$0xff]
  %v552 = vld [vmem:[%s3 + $0x1f0] sm:$0xff]
  %v553 = vld [vmem:[%s3 + $0x1f8] sm:$0xff]
  %554 = vmatprep.subr.mxu0 %v491
  %555 = vmatpush1.msra.mxu0 %v490
  %556 = vmatprep.subr.mxu0 %v495
  %557 = vmatpush1.msra.mxu0 %v494
  %558 = vmatprep.subr.mxu0 %v499
  %559 = vmatpush1.msra.mxu0 %v498
  %560 = vmatprep.subr.mxu0 %v503
  %561 = vmatpush1.msra.mxu0 %v502
  %562 = vmatprep.subr.mxu0 %v507
  %563 = vmatpush1.msra.mxu0 %v506
  %564 = vmatprep.subr.mxu0 %v511
  %565 = vmatpush1.msra.mxu0 %v510
  %566 = vmatprep.subr.mxu0 %v515
  %567 = vmatpush1.msra.mxu0 %v514
  %568 = vmatprep.subr.mxu0 %v519
  %569 = vmatpush1.msra.mxu0 %v518
  %570 = vmatprep.subr.mxu0 %v523
  %571 = vmatpush1.msra.mxu0 %v522
  %572 = vmatprep.subr.mxu0 %v527
  %573 = vmatpush1.msra.mxu0 %v526
  %574 = vmatprep.subr.mxu0 %v531
  %575 = vmatpush1.msra.mxu0 %v530
  %576 = vmatprep.subr.mxu0 %v535
  %577 = vmatpush1.msra.mxu0 %v534
  %578 = vmatprep.subr.mxu0 %v539
  %579 = vmatpush1.msra.mxu0 %v538
  %580 = vmatprep.subr.mxu0 %v543
  %581 = vmatpush1.msra.mxu0 %v542
  %582 = vmatprep.subr.mxu0 %v547
  %583 = vmatpush1.msra.mxu0 %v546
  %584 = vmatprep.subr.mxu0 %v551
  %585 = vmatpush1.msra.mxu0 %v550
  %586 = vmatprep.subr.mxu0 0.0
  %587 = vmatpush1.msra.mxu0 0.0
  %588 = vmatprep.subr.mxu0 0.0
  %589 = vmatpush1.msra.mxu0 0.0
  %590 = vmatprep.subr.mxu0 0.0
  %591 = vmatpush1.msra.mxu0 0.0
  %592 = vmatprep.subr.mxu0 0.0
  %593 = vmatpush1.msra.mxu0 0.0
  %594 = vmatprep.subr.mxu0 0.0
  %595 = vmatpush1.msra.mxu0 0.0
  %596 = vmatprep.subr.mxu0 0.0
  %597 = vmatpush1.msra.mxu0 0.0
  %598 = vmatprep.subr.mxu0 0.0
  %599 = vmatpush1.msra.mxu0 0.0
  %600 = vmatprep.subr.mxu0 0.0
  %601 = vmatpush1.msra.mxu0 0.0
  %602 = vmatprep.subr.mxu0 0.0
  %603 = vmatpush1.msra.mxu0 0.0
  %604 = vmatprep.subr.mxu0 0.0
  %605 = vmatpush1.msra.mxu0 0.0
  %606 = vmatprep.subr.mxu0 0.0
  %607 = vmatpush1.msra.mxu0 0.0
  %608 = vmatprep.subr.mxu0 0.0
  %609 = vmatpush1.msra.mxu0 0.0
  %610 = vmatprep.subr.mxu0 0.0
  %611 = vmatpush1.msra.mxu0 0.0
  %612 = vmatprep.subr.mxu0 0.0
  %613 = vmatpush1.msra.mxu0 0.0
  %614 = vmatprep.subr.mxu0 0.0
  %615 = vmatpush1.msra.mxu0 0.0
  %616 = vmatprep.subr.mxu0 0.0
  %617 = vmatpush1.msra.mxu0 0.0
  %618 = vmatprep.mubr.f32.mxu0 0.0
  %619 = vmatmul.mubr.f32.gmra.mrb[0].mxu0 %v482
  %v620 = vpop.f32.mrb[0].mxu0
  %v621 = vadd.f32 0.0, %v620
  %v622 = vpop.f32.mrb[0].mxu0
  %v623 = vadd.f32 0.0, %v622
  %624 = vdwg.mxu0
  %625 = vmatprep.subr.mxu0 %v493
  %626 = vmatpush1.msra.mxu0 %v492
  %627 = vmatprep.subr.mxu0 %v497
  %628 = vmatpush1.msra.mxu0 %v496
  %629 = vmatprep.subr.mxu0 %v501
  %630 = vmatpush1.msra.mxu0 %v500
  %631 = vmatprep.subr.mxu0 %v505
  %632 = vmatpush1.msra.mxu0 %v504
  %633 = vmatprep.subr.mxu0 %v509
  %634 = vmatpush1.msra.mxu0 %v508
  %635 = vmatprep.subr.mxu0 %v513
  %636 = vmatpush1.msra.mxu0 %v512
  %637 = vmatprep.subr.mxu0 %v517
  %638 = vmatpush1.msra.mxu0 %v516
  %639 = vmatprep.subr.mxu0 %v521
  %640 = vmatpush1.msra.mxu0 %v520
  %641 = vmatprep.subr.mxu0 %v525
  %642 = vmatpush1.msra.mxu0 %v524
  %643 = vmatprep.subr.mxu0 %v529
  %644 = vmatpush1.msra.mxu0 %v528
  %645 = vmatprep.subr.mxu0 %v533
  %646 = vmatpush1.msra.mxu0 %v532
  %647 = vmatprep.subr.mxu0 %v537
  %648 = vmatpush1.msra.mxu0 %v536
  %649 = vmatprep.subr.mxu0 %v541
  %650 = vmatpush1.msra.mxu0 %v540
  %651 = vmatprep.subr.mxu0 %v545
  %652 = vmatpush1.msra.mxu0 %v544
  %653 = vmatprep.subr.mxu0 %v549
  %654 = vmatpush1.msra.mxu0 %v548
  %655 = vmatprep.subr.mxu0 %v553
  %656 = vmatpush1.msra.mxu0 %v552
  %657 = vmatprep.subr.mxu0 0.0
  %658 = vmatpush1.msra.mxu0 0.0
  %659 = vmatprep.subr.mxu0 0.0
  %660 = vmatpush1.msra.mxu0 0.0
  %661 = vmatprep.subr.mxu0 0.0
  %662 = vmatpush1.msra.mxu0 0.0
  %663 = vmatprep.subr.mxu0 0.0
  %664 = vmatpush1.msra.mxu0 0.0
  %665 = vmatprep.subr.mxu0 0.0
  %666 = vmatpush1.msra.mxu0 0.0
  %667 = vmatprep.subr.mxu0 0.0
  %668 = vmatpush1.msra.mxu0 0.0
  %669 = vmatprep.subr.mxu0 0.0
  %670 = vmatpush1.msra.mxu0 0.0
  %671 = vmatprep.subr.mxu0 0.0
  %672 = vmatpush1.msra.mxu0 0.0
  %673 = vmatprep.subr.mxu0 0.0
  %674 = vmatpush1.msra.mxu0 0.0
  %675 = vmatprep.subr.mxu0 0.0
  %676 = vmatpush1.msra.mxu0 0.0
  %677 = vmatprep.subr.mxu0 0.0
  %678 = vmatpush1.msra.mxu0 0.0
  %679 = vmatprep.subr.mxu0 0.0
  %680 = vmatpush1.msra.mxu0 0.0
  %681 = vmatprep.subr.mxu0 0.0
  %682 = vmatpush1.msra.mxu0 0.0
  %683 = vmatprep.subr.mxu0 0.0
  %684 = vmatpush1.msra.mxu0 0.0
  %685 = vmatprep.subr.mxu0 0.0
  %686 = vmatpush1.msra.mxu0 0.0
  %687 = vmatprep.subr.mxu0 0.0
  %688 = vmatpush1.msra.mxu0 0.0
  %689 = vmatprep.mubr.f32.mxu0 0.0
  %690 = vmatmul.mubr.f32.gmra.mrb[0].mxu0 %v482
  %v691 = vpop.f32.mrb[0].mxu0
  %v692 = vadd.f32 0.0, %v691
  %v693 = vpop.f32.mrb[0].mxu0
  %v694 = vadd.f32 0.0, %v693
  %695 = vdwg.mxu0
  %v696 = vadd.f32 %v486, %v621
  %v697 = vadd.f32 %v487, %v623
  %v698 = vadd.f32 %v488, %v692
  %v699 = vadd.f32 %v489, %v694
  %v700 = vmul.f32 %v696, 0.5
  %v701 = vmul.f32 %v697, 0.5
  %v702 = vmul.f32 %v698, 0.5
  %v703 = vtanh.pop %v700
  %v704 = vtanh.pop %v701
  %v705 = vtanh.pop %v702
  %v706 = vmul.f32 %v703, 0.5
  %v707 = vmul.f32 %v704, 0.5
  %v708 = vmul.f32 %v705, 0.5
  %v709 = vadd.f32 %v706, 0.5
  %v710 = vadd.f32 %v707, 0.5
  %v711 = vadd.f32 %v708, 0.5
  %v712 = vtanh.pop %v699
  %v713 = vmul.f32 %v710, %v480
  %v714 = vmul.f32 %v709, %v712
  %v715 = vadd.f32 %v713, %v714
  %v716 = vtanh.pop %v715
  %v717 = vmul.f32 %v711, %v716
  %s718 = scalar_lea.vmem [#allocation2], 16
  %719 = vst [vmem:[%s718] sm:$0xff] %v717
  %s720 = scalar_lea.vmem %s0, 96
  %v721 = vld [vmem:[%s720] sm:$0xff]
  %v722 = vld [vmem:[%s720 + $0x8] sm:$0xff]
  %v723 = vld [vmem:[%s720 + $0x10] sm:$0xff]
  %v724 = vld [vmem:[%s720 + $0x18] sm:$0xff]
  %v725 = vld [vmem:[%s3] sm:$0xff]
  %v726 = vld [vmem:[%s3 + $0x8] sm:$0xff]
  %v727 = vld [vmem:[%s3 + $0x10] sm:$0xff]
  %v728 = vld [vmem:[%s3 + $0x18] sm:$0xff]
  %v729 = vld [vmem:[%s3 + $0x20] sm:$0xff]
  %v730 = vld [vmem:[%s3 + $0x28] sm:$0xff]
  %v731 = vld [vmem:[%s3 + $0x30] sm:$0xff]
  %v732 = vld [vmem:[%s3 + $0x38] sm:$0xff]
  %v733 = vld [vmem:[%s3 + $0x40] sm:$0xff]
  %v734 = vld [vmem:[%s3 + $0x48] sm:$0xff]
  %v735 = vld [vmem:[%s3 + $0x50] sm:$0xff]
  %v736 = vld [vmem:[%s3 + $0x58] sm:$0xff]
  %v737 = vld [vmem:[%s3 + $0x60] sm:$0xff]
  %v738 = vld [vmem:[%s3 + $0x68] sm:$0xff]
  %v739 = vld [vmem:[%s3 + $0x70] sm:$0xff]
  %v740 = vld [vmem:[%s3 + $0x78] sm:$0xff]
  %v741 = vld [vmem:[%s3 + $0x80] sm:$0xff]
  %v742 = vld [vmem:[%s3 + $0x88] sm:$0xff]
  %v743 = vld [vmem:[%s3 + $0x90] sm:$0xff]
  %v744 = vld [vmem:[%s3 + $0x98] sm:$0xff]
  %v745 = vld [vmem:[%s3 + $0xa0] sm:$0xff]
  %v746 = vld [vmem:[%s3 + $0xa8] sm:$0xff]
  %v747 = vld [vmem:[%s3 + $0xb0] sm:$0xff]
  %v748 = vld [vmem:[%s3 + $0xb8] sm:$0xff]
  %v749 = vld [vmem:[%s3 + $0xc0] sm:$0xff]
  %v750 = vld [vmem:[%s3 + $0xc8] sm:$0xff]
  %v751 = vld [vmem:[%s3 + $0xd0] sm:$0xff]
  %v752 = vld [vmem:[%s3 + $0xd8] sm:$0xff]
  %v753 = vld [vmem:[%s3 + $0xe0] sm:$0xff]
  %v754 = vld [vmem:[%s3 + $0xe8] sm:$0xff]
  %v755 = vld [vmem:[%s3 + $0xf0] sm:$0xff]
  %v756 = vld [vmem:[%s3 + $0xf8] sm:$0xff]
  %v757 = vld [vmem:[%s3 + $0x100] sm:$0xff]
  %v758 = vld [vmem:[%s3 + $0x108] sm:$0xff]
  %v759 = vld [vmem:[%s3 + $0x110] sm:$0xff]
  %v760 = vld [vmem:[%s3 + $0x118] sm:$0xff]
  %v761 = vld [vmem:[%s3 + $0x120] sm:$0xff]
  %v762 = vld [vmem:[%s3 + $0x128] sm:$0xff]
  %v763 = vld [vmem:[%s3 + $0x130] sm:$0xff]
  %v764 = vld [vmem:[%s3 + $0x138] sm:$0xff]
  %v765 = vld [vmem:[%s3 + $0x140] sm:$0xff]
  %v766 = vld [vmem:[%s3 + $0x148] sm:$0xff]
  %v767 = vld [vmem:[%s3 + $0x150] sm:$0xff]
  %v768 = vld [vmem:[%s3 + $0x158] sm:$0xff]
  %v769 = vld [vmem:[%s3 + $0x160] sm:$0xff]
  %v770 = vld [vmem:[%s3 + $0x168] sm:$0xff]
  %v771 = vld [vmem:[%s3 + $0x170] sm:$0xff]
  %v772 = vld [vmem:[%s3 + $0x178] sm:$0xff]
  %v773 = vld [vmem:[%s3 + $0x180] sm:$0xff]
  %v774 = vld [vmem:[%s3 + $0x188] sm:$0xff]
  %v775 = vld [vmem:[%s3 + $0x190] sm:$0xff]
  %v776 = vld [vmem:[%s3 + $0x198] sm:$0xff]
  %v777 = vld [vmem:[%s3 + $0x1a0] sm:$0xff]
  %v778 = vld [vmem:[%s3 + $0x1a8] sm:$0xff]
  %v779 = vld [vmem:[%s3 + $0x1b0] sm:$0xff]
  %v780 = vld [vmem:[%s3 + $0x1b8] sm:$0xff]
  %v781 = vld [vmem:[%s3 + $0x1c0] sm:$0xff]
  %v782 = vld [vmem:[%s3 + $0x1c8] sm:$0xff]
  %v783 = vld [vmem:[%s3 + $0x1d0] sm:$0xff]
  %v784 = vld [vmem:[%s3 + $0x1d8] sm:$0xff]
  %v785 = vld [vmem:[%s3 + $0x1e0] sm:$0xff]
  %v786 = vld [vmem:[%s3 + $0x1e8] sm:$0xff]
  %v787 = vld [vmem:[%s3 + $0x1f0] sm:$0xff]
  %v788 = vld [vmem:[%s3 + $0x1f8] sm:$0xff]
  %789 = vmatprep.subr.mxu0 %v726
  %790 = vmatpush1.msra.mxu0 %v725
  %791 = vmatprep.subr.mxu0 %v730
  %792 = vmatpush1.msra.mxu0 %v729
  %793 = vmatprep.subr.mxu0 %v734
  %794 = vmatpush1.msra.mxu0 %v733
  %795 = vmatprep.subr.mxu0 %v738
  %796 = vmatpush1.msra.mxu0 %v737
  %797 = vmatprep.subr.mxu0 %v742
  %798 = vmatpush1.msra.mxu0 %v741
  %799 = vmatprep.subr.mxu0 %v746
  %800 = vmatpush1.msra.mxu0 %v745
  %801 = vmatprep.subr.mxu0 %v750
  %802 = vmatpush1.msra.mxu0 %v749
  %803 = vmatprep.subr.mxu0 %v754
  %804 = vmatpush1.msra.mxu0 %v753
  %805 = vmatprep.subr.mxu0 %v758
  %806 = vmatpush1.msra.mxu0 %v757
  %807 = vmatprep.subr.mxu0 %v762
  %808 = vmatpush1.msra.mxu0 %v761
  %809 = vmatprep.subr.mxu0 %v766
  %810 = vmatpush1.msra.mxu0 %v765
  %811 = vmatprep.subr.mxu0 %v770
  %812 = vmatpush1.msra.mxu0 %v769
  %813 = vmatprep.subr.mxu0 %v774
  %814 = vmatpush1.msra.mxu0 %v773
  %815 = vmatprep.subr.mxu0 %v778
  %816 = vmatpush1.msra.mxu0 %v777
  %817 = vmatprep.subr.mxu0 %v782
  %818 = vmatpush1.msra.mxu0 %v781
  %819 = vmatprep.subr.mxu0 %v786
  %820 = vmatpush1.msra.mxu0 %v785
  %821 = vmatprep.subr.mxu0 0.0
  %822 = vmatpush1.msra.mxu0 0.0
  %823 = vmatprep.subr.mxu0 0.0
  %824 = vmatpush1.msra.mxu0 0.0
  %825 = vmatprep.subr.mxu0 0.0
  %826 = vmatpush1.msra.mxu0 0.0
  %827 = vmatprep.subr.mxu0 0.0
  %828 = vmatpush1.msra.mxu0 0.0
  %829 = vmatprep.subr.mxu0 0.0
  %830 = vmatpush1.msra.mxu0 0.0
  %831 = vmatprep.subr.mxu0 0.0
  %832 = vmatpush1.msra.mxu0 0.0
  %833 = vmatprep.subr.mxu0 0.0
  %834 = vmatpush1.msra.mxu0 0.0
  %835 = vmatprep.subr.mxu0 0.0
  %836 = vmatpush1.msra.mxu0 0.0
  %837 = vmatprep.subr.mxu0 0.0
  %838 = vmatpush1.msra.mxu0 0.0
  %839 = vmatprep.subr.mxu0 0.0
  %840 = vmatpush1.msra.mxu0 0.0
  %841 = vmatprep.subr.mxu0 0.0
  %842 = vmatpush1.msra.mxu0 0.0
  %843 = vmatprep.subr.mxu0 0.0
  %844 = vmatpush1.msra.mxu0 0.0
  %845 = vmatprep.subr.mxu0 0.0
  %846 = vmatpush1.msra.mxu0 0.0
  %847 = vmatprep.subr.mxu0 0.0
  %848 = vmatpush1.msra.mxu0 0.0
  %849 = vmatprep.subr.mxu0 0.0
  %850 = vmatpush1.msra.mxu0 0.0
  %851 = vmatprep.subr.mxu0 0.0
  %852 = vmatpush1.msra.mxu0 0.0
  %853 = vmatprep.mubr.f32.mxu0 0.0
  %854 = vmatmul.mubr.f32.gmra.mrb[0].mxu0 %v717
  %v855 = vpop.f32.mrb[0].mxu0
  %v856 = vadd.f32 0.0, %v855
  %v857 = vpop.f32.mrb[0].mxu0
  %v858 = vadd.f32 0.0, %v857
  %859 = vdwg.mxu0
  %860 = vmatprep.subr.mxu0 %v728
  %861 = vmatpush1.msra.mxu0 %v727
  %862 = vmatprep.subr.mxu0 %v732
  %863 = vmatpush1.msra.mxu0 %v731
  %864 = vmatprep.subr.mxu0 %v736
  %865 = vmatpush1.msra.mxu0 %v735
  %866 = vmatprep.subr.mxu0 %v740
  %867 = vmatpush1.msra.mxu0 %v739
  %868 = vmatprep.subr.mxu0 %v744
  %869 = vmatpush1.msra.mxu0 %v743
  %870 = vmatprep.subr.mxu0 %v748
  %871 = vmatpush1.msra.mxu0 %v747
  %872 = vmatprep.subr.mxu0 %v752
  %873 = vmatpush1.msra.mxu0 %v751
  %874 = vmatprep.subr.mxu0 %v756
  %875 = vmatpush1.msra.mxu0 %v755
  %876 = vmatprep.subr.mxu0 %v760
  %877 = vmatpush1.msra.mxu0 %v759
  %878 = vmatprep.subr.mxu0 %v764
  %879 = vmatpush1.msra.mxu0 %v763
  %880 = vmatprep.subr.mxu0 %v768
  %881 = vmatpush1.msra.mxu0 %v767
  %882 = vmatprep.subr.mxu0 %v772
  %883 = vmatpush1.msra.mxu0 %v771
  %884 = vmatprep.subr.mxu0 %v776
  %885 = vmatpush1.msra.mxu0 %v775
  %886 = vmatprep.subr.mxu0 %v780
  %887 = vmatpush1.msra.mxu0 %v779
  %888 = vmatprep.subr.mxu0 %v784
  %889 = vmatpush1.msra.mxu0 %v783
  %890 = vmatprep.subr.mxu0 %v788
  %891 = vmatpush1.msra.mxu0 %v787
  %892 = vmatprep.subr.mxu0 0.0
  %893 = vmatpush1.msra.mxu0 0.0
  %894 = vmatprep.subr.mxu0 0.0
  %895 = vmatpush1.msra.mxu0 0.0
  %896 = vmatprep.subr.mxu0 0.0
  %897 = vmatpush1.msra.mxu0 0.0
  %898 = vmatprep.subr.mxu0 0.0
  %899 = vmatpush1.msra.mxu0 0.0
  %900 = vmatprep.subr.mxu0 0.0
  %901 = vmatpush1.msra.mxu0 0.0
  %902 = vmatprep.subr.mxu0 0.0
  %903 = vmatpush1.msra.mxu0 0.0
  %904 = vmatprep.subr.mxu0 0.0
  %905 = vmatpush1.msra.mxu0 0.0
  %906 = vmatprep.subr.mxu0 0.0
  %907 = vmatpush1.msra.mxu0 0.0
  %908 = vmatprep.subr.mxu0 0.0
  %909 = vmatpush1.msra.mxu0 0.0
  %910 = vmatprep.subr.mxu0 0.0
  %911 = vmatpush1.msra.mxu0 0.0
  %912 = vmatprep.subr.mxu0 0.0
  %913 = vmatpush1.msra.mxu0 0.0
  %914 = vmatprep.subr.mxu0 0.0
  %915 = vmatpush1.msra.mxu0 0.0
  %916 = vmatprep.subr.mxu0 0.0
  %917 = vmatpush1.msra.mxu0 0.0
  %918 = vmatprep.subr.mxu0 0.0
  %919 = vmatpush1.msra.mxu0 0.0
  %920 = vmatprep.subr.mxu0 0.0
  %921 = vmatpush1.msra.mxu0 0.0
  %922 = vmatprep.subr.mxu0 0.0
  %923 = vmatpush1.msra.mxu0 0.0
  %924 = vmatprep.mubr.f32.mxu0 0.0
  %925 = vmatmul.mubr.f32.gmra.mrb[0].mxu0 %v717
  %v926 = vpop.f32.mrb[0].mxu0
  %v927 = vadd.f32 0.0, %v926
  %v928 = vpop.f32.mrb[0].mxu0
  %v929 = vadd.f32 0.0, %v928
  %930 = vdwg.mxu0
  %v931 = vadd.f32 %v721, %v856
  %v932 = vadd.f32 %v722, %v858
  %v933 = vadd.f32 %v723, %v927
  %v934 = vadd.f32 %v724, %v929
  %v935 = vmul.f32 %v931, 0.5
  %v936 = vmul.f32 %v932, 0.5
  %v937 = vmul.f32 %v933, 0.5
  %v938 = vtanh.pop %v935
  %v939 = vtanh.pop %v936
  %v940 = vtanh.pop %v937
  %v941 = vmul.f32 %v938, 0.5
  %v942 = vmul.f32 %v939, 0.5
  %v943 = vmul.f32 %v940, 0.5
  %v944 = vadd.f32 %v941, 0.5
  %v945 = vadd.f32 %v942, 0.5
  %v946 = vadd.f32 %v943, 0.5
  %v947 = vtanh.pop %v934
  %v948 = vmul.f32 %v945, %v715
  %v949 = vmul.f32 %v944, %v947
  %v950 = vadd.f32 %v948, %v949
  %v951 = vtanh.pop %v950
  %v952 = vmul.f32 %v946, %v951
  %s953 = scalar_lea.vmem [#allocation2], 24
  %954 = vst [vmem:[%s953] sm:$0xff] %v952
  %s955 = scalar_lea.vmem %s0, 128
  %v956 = vld [vmem:[%s955] sm:$0xff]
  %v957 = vld [vmem:[%s955 + $0x8] sm:$0xff]
  %v958 = vld [vmem:[%s955 + $0x10] sm:$0xff]
  %v959 = vld [vmem:[%s955 + $0x18] sm:$0xff]
  %v960 = vld [vmem:[%s3] sm:$0xff]
  %v961 = vld [vmem:[%s3 + $0x8] sm:$0xff]
  %v962 = vld [vmem:[%s3 + $0x10] sm:$0xff]
  %v963 = vld [vmem:[%s3 + $0x18] sm:$0xff]
  %v964 = vld [vmem:[%s3 + $0x20] sm:$0xff]
  %v965 = vld [vmem:[%s3 + $0x28] sm:$0xff]
  %v966 = vld [vmem:[%s3 + $0x30] sm:$0xff]
  %v967 = vld [vmem:[%s3 + $0x38] sm:$0xff]
  %v968 = vld [vmem:[%s3 + $0x40] sm:$0xff]
  %v969 = vld [vmem:[%s3 + $0x48] sm:$0xff]
  %v970 = vld [vmem:[%s3 + $0x50] sm:$0xff]
  %v971 = vld [vmem:[%s3 + $0x58] sm:$0xff]
  %v972 = vld [vmem:[%s3 + $0x60] sm:$0xff]
  %v973 = vld [vmem:[%s3 + $0x68] sm:$0xff]
  %v974 = vld [vmem:[%s3 + $0x70] sm:$0xff]
  %v975 = vld [vmem:[%s3 + $0x78] sm:$0xff]
  %v976 = vld [vmem:[%s3 + $0x80] sm:$0xff]
  %v977 = vld [vmem:[%s3 + $0x88] sm:$0xff]
  %v978 = vld [vmem:[%s3 + $0x90] sm:$0xff]
  %v979 = vld [vmem:[%s3 + $0x98] sm:$0xff]
  %v980 = vld [vmem:[%s3 + $0xa0] sm:$0xff]
  %v981 = vld [vmem:[%s3 + $0xa8] sm:$0xff]
  %v982 = vld [vmem:[%s3 + $0xb0] sm:$0xff]
  %v983 = vld [vmem:[%s3 + $0xb8] sm:$0xff]
  %v984 = vld [vmem:[%s3 + $0xc0] sm:$0xff]
  %v985 = vld [vmem:[%s3 + $0xc8] sm:$0xff]
  %v986 = vld [vmem:[%s3 + $0xd0] sm:$0xff]
  %v987 = vld [vmem:[%s3 + $0xd8] sm:$0xff]
  %v988 = vld [vmem:[%s3 + $0xe0] sm:$0xff]
  %v989 = vld [vmem:[%s3 + $0xe8] sm:$0xff]
  %v990 = vld [vmem:[%s3 + $0xf0] sm:$0xff]
  %v991 = vld [vmem:[%s3 + $0xf8] sm:$0xff]
  %v992 = vld [vmem:[%s3 + $0x100] sm:$0xff]
  %v993 = vld [vmem:[%s3 + $0x108] sm:$0xff]
  %v994 = vld [vmem:[%s3 + $0x110] sm:$0xff]
  %v995 = vld [vmem:[%s3 + $0x118] sm:$0xff]
  %v996 = vld [vmem:[%s3 + $0x120] sm:$0xff]
  %v997 = vld [vmem:[%s3 + $0x128] sm:$0xff]
  %v998 = vld [vmem:[%s3 + $0x130] sm:$0xff]
  %v999 = vld [vmem:[%s3 + $0x138] sm:$0xff]
  %v1000 = vld [vmem:[%s3 + $0x140] sm:$0xff]
  %v1001 = vld [vmem:[%s3 + $0x148] sm:$0xff]
  %v1002 = vld [vmem:[%s3 + $0x150] sm:$0xff]
  %v1003 = vld [vmem:[%s3 + $0x158] sm:$0xff]
  %v1004 = vld [vmem:[%s3 + $0x160] sm:$0xff]
  %v1005 = vld [vmem:[%s3 + $0x168] sm:$0xff]
  %v1006 = vld [vmem:[%s3 + $0x170] sm:$0xff]
  %v1007 = vld [vmem:[%s3 + $0x178] sm:$0xff]
  %v1008 = vld [vmem:[%s3 + $0x180] sm:$0xff]
  %v1009 = vld [vmem:[%s3 + $0x188] sm:$0xff]
  %v1010 = vld [vmem:[%s3 + $0x190] sm:$0xff]
  %v1011 = vld [vmem:[%s3 + $0x198] sm:$0xff]
  %v1012 = vld [vmem:[%s3 + $0x1a0] sm:$0xff]
  %v1013 = vld [vmem:[%s3 + $0x1a8] sm:$0xff]
  %v1014 = vld [vmem:[%s3 + $0x1b0] sm:$0xff]
  %v1015 = vld [vmem:[%s3 + $0x1b8] sm:$0xff]
  %v1016 = vld [vmem:[%s3 + $0x1c0] sm:$0xff]
  %v1017 = vld [vmem:[%s3 + $0x1c8] sm:$0xff]
  %v1018 = vld [vmem:[%s3 + $0x1d0] sm:$0xff]
  %v1019 = vld [vmem:[%s3 + $0x1d8] sm:$0xff]
  %v1020 = vld [vmem:[%s3 + $0x1e0] sm:$0xff]
  %v1021 = vld [vmem:[%s3 + $0x1e8] sm:$0xff]
  %v1022 = vld [vmem:[%s3 + $0x1f0] sm:$0xff]
  %v1023 = vld [vmem:[%s3 + $0x1f8] sm:$0xff]
  %1024 = vmatprep.subr.mxu0 %v961
  %1025 = vmatpush1.msra.mxu0 %v960
  %1026 = vmatprep.subr.mxu0 %v965
  %1027 = vmatpush1.msra.mxu0 %v964
  %1028 = vmatprep.subr.mxu0 %v969
  %1029 = vmatpush1.msra.mxu0 %v968
  %1030 = vmatprep.subr.mxu0 %v973
  %1031 = vmatpush1.msra.mxu0 %v972
  %1032 = vmatprep.subr.mxu0 %v977
  %1033 = vmatpush1.msra.mxu0 %v976
  %1034 = vmatprep.subr.mxu0 %v981
  %1035 = vmatpush1.msra.mxu0 %v980
  %1036 = vmatprep.subr.mxu0 %v985
  %1037 = vmatpush1.msra.mxu0 %v984
  %1038 = vmatprep.subr.mxu0 %v989
  %1039 = vmatpush1.msra.mxu0 %v988
  %1040 = vmatprep.subr.mxu0 %v993
  %1041 = vmatpush1.msra.mxu0 %v992
  %1042 = vmatprep.subr.mxu0 %v997
  %1043 = vmatpush1.msra.mxu0 %v996
  %1044 = vmatprep.subr.mxu0 %v1001
  %1045 = vmatpush1.msra.mxu0 %v1000
  %1046 = vmatprep.subr.mxu0 %v1005
  %1047 = vmatpush1.msra.mxu0 %v1004
  %1048 = vmatprep.subr.mxu0 %v1009
  %1049 = vmatpush1.msra.mxu0 %v1008
  %1050 = vmatprep.subr.mxu0 %v1013
  %1051 = vmatpush1.msra.mxu0 %v1012
  %1052 = vmatprep.subr.mxu0 %v1017
  %1053 = vmatpush1.msra.mxu0 %v1016
  %1054 = vmatprep.subr.mxu0 %v1021
  %1055 = vmatpush1.msra.mxu0 %v1020
  %1056 = vmatprep.subr.mxu0 0.0
  %1057 = vmatpush1.msra.mxu0 0.0
  %1058 = vmatprep.subr.mxu0 0.0
  %1059 = vmatpush1.msra.mxu0 0.0
  %1060 = vmatprep.subr.mxu0 0.0
  %1061 = vmatpush1.msra.mxu0 0.0
  %1062 = vmatprep.subr.mxu0 0.0
  %1063 = vmatpush1.msra.mxu0 0.0
  %1064 = vmatprep.subr.mxu0 0.0
  %1065 = vmatpush1.msra.mxu0 0.0
  %1066 = vmatprep.subr.mxu0 0.0
  %1067 = vmatpush1.msra.mxu0 0.0
  %1068 = vmatprep.subr.mxu0 0.0
  %1069 = vmatpush1.msra.mxu0 0.0
  %1070 = vmatprep.subr.mxu0 0.0
  %1071 = vmatpush1.msra.mxu0 0.0
  %1072 = vmatprep.subr.mxu0 0.0
  %1073 = vmatpush1.msra.mxu0 0.0
  %1074 = vmatprep.subr.mxu0 0.0
  %1075 = vmatpush1.msra.mxu0 0.0
  %1076 = vmatprep.subr.mxu0 0.0
  %1077 = vmatpush1.msra.mxu0 0.0
  %1078 = vmatprep.subr.mxu0 0.0
  %1079 = vmatpush1.msra.mxu0 0.0
  %1080 = vmatprep.subr.mxu0 0.0
  %1081 = vmatpush1.msra.mxu0 0.0
  %1082 = vmatprep.subr.mxu0 0.0
  %1083 = vmatpush1.msra.mxu0 0.0
  %1084 = vmatprep.subr.mxu0 0.0
  %1085 = vmatpush1.msra.mxu0 0.0
  %1086 = vmatprep.subr.mxu0 0.0
  %1087 = vmatpush1.msra.mxu0 0.0
  %1088 = vmatprep.mubr.f32.mxu0 0.0
  %1089 = vmatmul.mubr.f32.gmra.mrb[0].mxu0 %v952
  %v1090 = vpop.f32.mrb[0].mxu0
  %v1091 = vadd.f32 0.0, %v1090
  %v1092 = vpop.f32.mrb[0].mxu0
  %v1093 = vadd.f32 0.0, %v1092
  %1094 = vdwg.mxu0
  %1095 = vmatprep.subr.mxu0 %v963
  %1096 = vmatpush1.msra.mxu0 %v962
  %1097 = vmatprep.subr.mxu0 %v967
  %1098 = vmatpush1.msra.mxu0 %v966
  %1099 = vmatprep.subr.mxu0 %v971
  %1100 = vmatpush1.msra.mxu0 %v970
  %1101 = vmatprep.subr.mxu0 %v975
  %1102 = vmatpush1.msra.mxu0 %v974
  %1103 = vmatprep.subr.mxu0 %v979
  %1104 = vmatpush1.msra.mxu0 %v978
  %1105 = vmatprep.subr.mxu0 %v983
  %1106 = vmatpush1.msra.mxu0 %v982
  %1107 = vmatprep.subr.mxu0 %v987
  %1108 = vmatpush1.msra.mxu0 %v986
  %1109 = vmatprep.subr.mxu0 %v991
  %1110 = vmatpush1.msra.mxu0 %v990
  %1111 = vmatprep.subr.mxu0 %v995
  %1112 = vmatpush1.msra.mxu0 %v994
  %1113 = vmatprep.subr.mxu0 %v999
  %1114 = vmatpush1.msra.mxu0 %v998
  %1115 = vmatprep.subr.mxu0 %v1003
  %1116 = vmatpush1.msra.mxu0 %v1002
  %1117 = vmatprep.subr.mxu0 %v1007
  %1118 = vmatpush1.msra.mxu0 %v1006
  %1119 = vmatprep.subr.mxu0 %v1011
  %1120 = vmatpush1.msra.mxu0 %v1010
  %1121 = vmatprep.subr.mxu0 %v1015
  %1122 = vmatpush1.msra.mxu0 %v1014
  %1123 = vmatprep.subr.mxu0 %v1019
  %1124 = vmatpush1.msra.mxu0 %v1018
  %1125 = vmatprep.subr.mxu0 %v1023
  %1126 = vmatpush1.msra.mxu0 %v1022
  %1127 = vmatprep.subr.mxu0 0.0
  %1128 = vmatpush1.msra.mxu0 0.0
  %1129 = vmatprep.subr.mxu0 0.0
  %1130 = vmatpush1.msra.mxu0 0.0
  %1131 = vmatprep.subr.mxu0 0.0
  %1132 = vmatpush1.msra.mxu0 0.0
  %1133 = vmatprep.subr.mxu0 0.0
  %1134 = vmatpush1.msra.mxu0 0.0
  %1135 = vmatprep.subr.mxu0 0.0
  %1136 = vmatpush1.msra.mxu0 0.0
  %1137 = vmatprep.subr.mxu0 0.0
  %1138 = vmatpush1.msra.mxu0 0.0
  %1139 = vmatprep.subr.mxu0 0.0
  %1140 = vmatpush1.msra.mxu0 0.0
  %1141 = vmatprep.subr.mxu0 0.0
  %1142 = vmatpush1.msra.mxu0 0.0
  %1143 = vmatprep.subr.mxu0 0.0
  %1144 = vmatpush1.msra.mxu0 0.0
  %1145 = vmatprep.subr.mxu0 0.0
  %1146 = vmatpush1.msra.mxu0 0.0
  %1147 = vmatprep.subr.mxu0 0.0
  %1148 = vmatpush1.msra.mxu0 0.0
  %1149 = vmatprep.subr.mxu0 0.0
  %1150 = vmatpush1.msra.mxu0 0.0
  %1151 = vmatprep.subr.mxu0 0.0
  %1152 = vmatpush1.msra.mxu0 0.0
  %1153 = vmatprep.subr.mxu0 0.0
  %1154 = vmatpush1.msra.mxu0 0.0
  %1155 = vmatprep.subr.mxu0 0.0
  %1156 = vmatpush1.msra.mxu0 0.0
  %1157 = vmatprep.subr.mxu0 0.0
  %1158 = vmatpush1.msra.mxu0 0.0
  %1159 = vmatprep.mubr.f32.mxu0 0.0
  %1160 = vmatmul.mubr.f32.gmra.mrb[0].mxu0 %v952
  %v1161 = vpop.f32.mrb[0].mxu0
  %v1162 = vadd.f32 0.0, %v1161
  %v1163 = vpop.f32.mrb[0].mxu0
  %v1164 = vadd.f32 0.0, %v1163
  %1165 = vdwg.mxu0
  %v1166 = vadd.f32 %v956, %v1091
  %v1167 = vadd.f32 %v957, %v1093
  %v1168 = vadd.f32 %v958, %v1162
  %v1169 = vadd.f32 %v959, %v1164
  %v1170 = vmul.f32 %v1166, 0.5
  %v1171 = vmul.f32 %v1167, 0.5
  %v1172 = vmul.f32 %v1168, 0.5
  %v1173 = vtanh.pop %v1170
  %v1174 = vtanh.pop %v1171
  %v1175 = vtanh.pop %v1172
  %v1176 = vmul.f32 %v1173, 0.5
  %v1177 = vmul.f32 %v1174, 0.5
  %v1178 = vmul.f32 %v1175, 0.5
  %v1179 = vadd.f32 %v1176, 0.5
  %v1180 = vadd.f32 %v1177, 0.5
  %v1181 = vadd.f32 %v1178, 0.5
  %v1182 = vtanh.pop %v1169
  %v1183 = vmul.f32 %v1180, %v950
  %v1184 = vmul.f32 %v1179, %v1182
  %v1185 = vadd.f32 %v1183, %v1184
  %v1186 = vtanh.pop %v1185
  %v1187 = vmul.f32 %v1181, %v1186
  %s1188 = scalar_lea.vmem [#allocation2], 32
  %1189 = vst [vmem:[%s1188] sm:$0xff] %v1187
  %s1190 = scalar_lea.vmem %s0, 160
  %v1191 = vld [vmem:[%s1190] sm:$0xff]
  %v1192 = vld [vmem:[%s1190 + $0x8] sm:$0xff]
  %v1193 = vld [vmem:[%s1190 + $0x10] sm:$0xff]
  %v1194 = vld [vmem:[%s1190 + $0x18] sm:$0xff]
  %v1195 = vld [vmem:[%s3] sm:$0xff]
  %v1196 = vld [vmem:[%s3 + $0x8] sm:$0xff]
  %v1197 = vld [vmem:[%s3 + $0x10] sm:$0xff]
  %v1198 = vld [vmem:[%s3 + $0x18] sm:$0xff]
  %v1199 = vld [vmem:[%s3 + $0x20] sm:$0xff]
  %v1200 = vld [vmem:[%s3 + $0x28] sm:$0xff]
  %v1201 = vld [vmem:[%s3 + $0x30] sm:$0xff]
  %v1202 = vld [vmem:[%s3 + $0x38] sm:$0xff]
  %v1203 = vld [vmem:[%s3 + $0x40] sm:$0xff]
  %v1204 = vld [vmem:[%s3 + $0x48] sm:$0xff]
  %v1205 = vld [vmem:[%s3 + $0x50] sm:$0xff]
  %v1206 = vld [vmem:[%s3 + $0x58] sm:$0xff]
  %v1207 = vld [vmem:[%s3 + $0x60] sm:$0xff]
  %v1208 = vld [vmem:[%s3 + $0x68] sm:$0xff]
  %v1209 = vld [vmem:[%s3 + $0x70] sm:$0xff]
  %v1210 = vld [vmem:[%s3 + $0x78] sm:$0xff]
  %v1211 = vld [vmem:[%s3 + $0x80] sm:$0xff]
  %v1212 = vld [vmem:[%s3 + $0x88] sm:$0xff]
  %v1213 = vld [vmem:[%s3 + $0x90] sm:$0xff]
  %v1214 = vld [vmem:[%s3 + $0x98] sm:$0xff]
  %v1215 = vld [vmem:[%s3 + $0xa0] sm:$0xff]
  %v1216 = vld [vmem:[%s3 + $0xa8] sm:$0xff]
  %v1217 = vld [vmem:[%s3 + $0xb0] sm:$0xff]
  %v1218 = vld [vmem:[%s3 + $0xb8] sm:$0xff]
  %v1219 = vld [vmem:[%s3 + $0xc0] sm:$0xff]
  %v1220 = vld [vmem:[%s3 + $0xc8] sm:$0xff]
  %v1221 = vld [vmem:[%s3 + $0xd0] sm:$0xff]
  %v1222 = vld [vmem:[%s3 + $0xd8] sm:$0xff]
  %v1223 = vld [vmem:[%s3 + $0xe0] sm:$0xff]
  %v1224 = vld [vmem:[%s3 + $0xe8] sm:$0xff]
  %v1225 = vld [vmem:[%s3 + $0xf0] sm:$0xff]
  %v1226 = vld [vmem:[%s3 + $0xf8] sm:$0xff]
  %v1227 = vld [vmem:[%s3 + $0x100] sm:$0xff]
  %v1228 = vld [vmem:[%s3 + $0x108] sm:$0xff]
  %v1229 = vld [vmem:[%s3 + $0x110] sm:$0xff]
  %v1230 = vld [vmem:[%s3 + $0x118] sm:$0xff]
  %v1231 = vld [vmem:[%s3 + $0x120] sm:$0xff]
  %v1232 = vld [vmem:[%s3 + $0x128] sm:$0xff]
  %v1233 = vld [vmem:[%s3 + $0x130] sm:$0xff]
  %v1234 = vld [vmem:[%s3 + $0x138] sm:$0xff]
  %v1235 = vld [vmem:[%s3 + $0x140] sm:$0xff]
  %v1236 = vld [vmem:[%s3 + $0x148] sm:$0xff]
  %v1237 = vld [vmem:[%s3 + $0x150] sm:$0xff]
  %v1238 = vld [vmem:[%s3 + $0x158] sm:$0xff]
  %v1239 = vld [vmem:[%s3 + $0x160] sm:$0xff]
  %v1240 = vld [vmem:[%s3 + $0x168] sm:$0xff]
  %v1241 = vld [vmem:[%s3 + $0x170] sm:$0xff]
  %v1242 = vld [vmem:[%s3 + $0x178] sm:$0xff]
  %v1243 = vld [vmem:[%s3 + $0x180] sm:$0xff]
  %v1244 = vld [vmem:[%s3 + $0x188] sm:$0xff]
  %v1245 = vld [vmem:[%s3 + $0x190] sm:$0xff]
  %v1246 = vld [vmem:[%s3 + $0x198] sm:$0xff]
  %v1247 = vld [vmem:[%s3 + $0x1a0] sm:$0xff]
  %v1248 = vld [vmem:[%s3 + $0x1a8] sm:$0xff]
  %v1249 = vld [vmem:[%s3 + $0x1b0] sm:$0xff]
  %v1250 = vld [vmem:[%s3 + $0x1b8] sm:$0xff]
  %v1251 = vld [vmem:[%s3 + $0x1c0] sm:$0xff]
  %v1252 = vld [vmem:[%s3 + $0x1c8] sm:$0xff]
  %v1253 = vld [vmem:[%s3 + $0x1d0] sm:$0xff]
  %v1254 = vld [vmem:[%s3 + $0x1d8] sm:$0xff]
  %v1255 = vld [vmem:[%s3 + $0x1e0] sm:$0xff]
  %v1256 = vld [vmem:[%s3 + $0x1e8] sm:$0xff]
  %v1257 = vld [vmem:[%s3 + $0x1f0] sm:$0xff]
  %v1258 = vld [vmem:[%s3 + $0x1f8] sm:$0xff]
  %1259 = vmatprep.subr.mxu0 %v1196
  %1260 = vmatpush1.msra.mxu0 %v1195
  %1261 = vmatprep.subr.mxu0 %v1200
  %1262 = vmatpush1.msra.mxu0 %v1199
  %1263 = vmatprep.subr.mxu0 %v1204
  %1264 = vmatpush1.msra.mxu0 %v1203
  %1265 = vmatprep.subr.mxu0 %v1208
  %1266 = vmatpush1.msra.mxu0 %v1207
  %1267 = vmatprep.subr.mxu0 %v1212
  %1268 = vmatpush1.msra.mxu0 %v1211
  %1269 = vmatprep.subr.mxu0 %v1216
  %1270 = vmatpush1.msra.mxu0 %v1215
  %1271 = vmatprep.subr.mxu0 %v1220
  %1272 = vmatpush1.msra.mxu0 %v1219
  %1273 = vmatprep.subr.mxu0 %v1224
  %1274 = vmatpush1.msra.mxu0 %v1223
  %1275 = vmatprep.subr.mxu0 %v1228
  %1276 = vmatpush1.msra.mxu0 %v1227
  %1277 = vmatprep.subr.mxu0 %v1232
  %1278 = vmatpush1.msra.mxu0 %v1231
  %1279 = vmatprep.subr.mxu0 %v1236
  %1280 = vmatpush1.msra.mxu0 %v1235
  %1281 = vmatprep.subr.mxu0 %v1240
  %1282 = vmatpush1.msra.mxu0 %v1239
  %1283 = vmatprep.subr.mxu0 %v1244
  %1284 = vmatpush1.msra.mxu0 %v1243
  %1285 = vmatprep.subr.mxu0 %v1248
  %1286 = vmatpush1.msra.mxu0 %v1247
  %1287 = vmatprep.subr.mxu0 %v1252
  %1288 = vmatpush1.msra.mxu0 %v1251
  %1289 = vmatprep.subr.mxu0 %v1256
  %1290 = vmatpush1.msra.mxu0 %v1255
  %1291 = vmatprep.subr.mxu0 0.0
  %1292 = vmatpush1.msra.mxu0 0.0
  %1293 = vmatprep.subr.mxu0 0.0
  %1294 = vmatpush1.msra.mxu0 0.0
  %1295 = vmatprep.subr.mxu0 0.0
  %1296 = vmatpush1.msra.mxu0 0.0
  %1297 = vmatprep.subr.mxu0 0.0
  %1298 = vmatpush1.msra.mxu0 0.0
  %1299 = vmatprep.subr.mxu0 0.0
  %1300 = vmatpush1.msra.mxu0 0.0
  %1301 = vmatprep.subr.mxu0 0.0
  %1302 = vmatpush1.msra.mxu0 0.0
  %1303 = vmatprep.subr.mxu0 0.0
  %1304 = vmatpush1.msra.mxu0 0.0
  %1305 = vmatprep.subr.mxu0 0.0
  %1306 = vmatpush1.msra.mxu0 0.0
  %1307 = vmatprep.subr.mxu0 0.0
  %1308 = vmatpush1.msra.mxu0 0.0
  %1309 = vmatprep.subr.mxu0 0.0
  %1310 = vmatpush1.msra.mxu0 0.0
  %1311 = vmatprep.subr.mxu0 0.0
  %1312 = vmatpush1.msra.mxu0 0.0
  %1313 = vmatprep.subr.mxu0 0.0
  %1314 = vmatpush1.msra.mxu0 0.0
  %1315 = vmatprep.subr.mxu0 0.0
  %1316 = vmatpush1.msra.mxu0 0.0
  %1317 = vmatprep.subr.mxu0 0.0
  %1318 = vmatpush1.msra.mxu0 0.0
  %1319 = vmatprep.subr.mxu0 0.0
  %1320 = vmatpush1.msra.mxu0 0.0
  %1321 = vmatprep.subr.mxu0 0.0
  %1322 = vmatpush1.msra.mxu0 0.0
  %1323 = vmatprep.mubr.f32.mxu0 0.0
  %1324 = vmatmul.mubr.f32.gmra.mrb[0].mxu0 %v1187
  %v1325 = vpop.f32.mrb[0].mxu0
  %v1326 = vadd.f32 0.0, %v1325
  %v1327 = vpop.f32.mrb[0].mxu0
  %v1328 = vadd.f32 0.0, %v1327
  %1329 = vdwg.mxu0
  %1330 = vmatprep.subr.mxu0 %v1198
  %1331 = vmatpush1.msra.mxu0 %v1197
  %1332 = vmatprep.subr.mxu0 %v1202
  %1333 = vmatpush1.msra.mxu0 %v1201
  %1334 = vmatprep.subr.mxu0 %v1206
  %1335 = vmatpush1.msra.mxu0 %v1205
  %1336 = vmatprep.subr.mxu0 %v1210
  %1337 = vmatpush1.msra.mxu0 %v1209
  %1338 = vmatprep.subr.mxu0 %v1214
  %1339 = vmatpush1.msra.mxu0 %v1213
  %1340 = vmatprep.subr.mxu0 %v1218
  %1341 = vmatpush1.msra.mxu0 %v1217
  %1342 = vmatprep.subr.mxu0 %v1222
  %1343 = vmatpush1.msra.mxu0 %v1221
  %1344 = vmatprep.subr.mxu0 %v1226
  %1345 = vmatpush1.msra.mxu0 %v1225
  %1346 = vmatprep.subr.mxu0 %v1230
  %1347 = vmatpush1.msra.mxu0 %v1229
  %1348 = vmatprep.subr.mxu0 %v1234
  %1349 = vmatpush1.msra.mxu0 %v1233
  %1350 = vmatprep.subr.mxu0 %v1238
  %1351 = vmatpush1.msra.mxu0 %v1237
  %1352 = vmatprep.subr.mxu0 %v1242
  %1353 = vmatpush1.msra.mxu0 %v1241
  %1354 = vmatprep.subr.mxu0 %v1246
  %1355 = vmatpush1.msra.mxu0 %v1245
  %1356 = vmatprep.subr.mxu0 %v1250
  %1357 = vmatpush1.msra.mxu0 %v1249
  %1358 = vmatprep.subr.mxu0 %v1254
  %1359 = vmatpush1.msra.mxu0 %v1253
  %1360 = vmatprep.subr.mxu0 %v1258
  %1361 = vmatpush1.msra.mxu0 %v1257
  %1362 = vmatprep.subr.mxu0 0.0
  %1363 = vmatpush1.msra.mxu0 0.0
  %1364 = vmatprep.subr.mxu0 0.0
  %1365 = vmatpush1.msra.mxu0 0.0
  %1366 = vmatprep.subr.mxu0 0.0
  %1367 = vmatpush1.msra.mxu0 0.0
  %1368 = vmatprep.subr.mxu0 0.0
  %1369 = vmatpush1.msra.mxu0 0.0
  %1370 = vmatprep.subr.mxu0 0.0
  %1371 = vmatpush1.msra.mxu0 0.0
  %1372 = vmatprep.subr.mxu0 0.0
  %1373 = vmatpush1.msra.mxu0 0.0
  %1374 = vmatprep.subr.mxu0 0.0
  %1375 = vmatpush1.msra.mxu0 0.0
  %1376 = vmatprep.subr.mxu0 0.0
  %1377 = vmatpush1.msra.mxu0 0.0
  %1378 = vmatprep.subr.mxu0 0.0
  %1379 = vmatpush1.msra.mxu0 0.0
  %1380 = vmatprep.subr.mxu0 0.0
  %1381 = vmatpush1.msra.mxu0 0.0
  %1382 = vmatprep.subr.mxu0 0.0
  %1383 = vmatpush1.msra.mxu0 0.0
  %1384 = vmatprep.subr.mxu0 0.0
  %1385 = vmatpush1.msra.mxu0 0.0
  %1386 = vmatprep.subr.mxu0 0.0
  %1387 = vmatpush1.msra.mxu0 0.0
  %1388 = vmatprep.subr.mxu0 0.0
  %1389 = vmatpush1.msra.mxu0 0.0
  %1390 = vmatprep.subr.mxu0 0.0
  %1391 = vmatpush1.msra.mxu0 0.0
  %1392 = vmatprep.subr.mxu0 0.0
  %1393 = vmatpush1.msra.mxu0 0.0
  %1394 = vmatprep.mubr.f32.mxu0 0.0
  %1395 = vmatmul.mubr.f32.gmra.mrb[0].mxu0 %v1187
  %v1396 = vpop.f32.mrb[0].mxu0
  %v1397 = vadd.f32 0.0, %v1396
  %v1398 = vpop.f32.mrb[0].mxu0
  %v1399 = vadd.f32 0.0, %v1398
  %1400 = vdwg.mxu0
  %v1401 = vadd.f32 %v1191, %v1326
  %v1402 = vadd.f32 %v1192, %v1328
  %v1403 = vadd.f32 %v1193, %v1397
  %v1404 = vadd.f32 %v1194, %v1399
  %v1405 = vmul.f32 %v1401, 0.5
  %v1406 = vmul.f32 %v1402, 0.5
  %v1407 = vmul.f32 %v1403, 0.5
  %v1408 = vtanh.pop %v1405
  %v1409 = vtanh.pop %v1406
  %v1410 = vtanh.pop %v1407
  %v1411 = vmul.f32 %v1408, 0.5
  %v1412 = vmul.f32 %v1409, 0.5
  %v1413 = vmul.f32 %v1410, 0.5
  %v1414 = vadd.f32 %v1411, 0.5
  %v1415 = vadd.f32 %v1412, 0.5
  %v1416 = vadd.f32 %v1413, 0.5
  %v1417 = vtanh.pop %v1404
  %v1418 = vmul.f32 %v1415, %v1185
  %v1419 = vmul.f32 %v1414, %v1417
  %v1420 = vadd.f32 %v1418, %v1419
  %v1421 = vtanh.pop %v1420
  %v1422 = vmul.f32 %v1416, %v1421
  %s1423 = scalar_lea.vmem [#allocation2], 40
  %1424 = vst [vmem:[%s1423] sm:$0xff] %v1422
  %s1425 = scalar_lea.vmem %s0, 192
  %v1426 = vld [vmem:[%s1425] sm:$0xff]
  %v1427 = vld [vmem:[%s1425 + $0x8] sm:$0xff]
  %v1428 = vld [vmem:[%s1425 + $0x10] sm:$0xff]
  %v1429 = vld [vmem:[%s1425 + $0x18] sm:$0xff]
  %v1430 = vld [vmem:[%s3] sm:$0xff]
  %v1431 = vld [vmem:[%s3 + $0x8] sm:$0xff]
  %v1432 = vld [vmem:[%s3 + $0x10] sm:$0xff]
  %v1433 = vld [vmem:[%s3 + $0x18] sm:$0xff]
  %v1434 = vld [vmem:[%s3 + $0x20] sm:$0xff]
  %v1435 = vld [vmem:[%s3 + $0x28] sm:$0xff]
  %v1436 = vld [vmem:[%s3 + $0x30] sm:$0xff]
  %v1437 = vld [vmem:[%s3 + $0x38] sm:$0xff]
  %v1438 = vld [vmem:[%s3 + $0x40] sm:$0xff]
  %v1439 = vld [vmem:[%s3 + $0x48] sm:$0xff]
  %v1440 = vld [vmem:[%s3 + $0x50] sm:$0xff]
  %v1441 = vld [vmem:[%s3 + $0x58] sm:$0xff]
  %v1442 = vld [vmem:[%s3 + $0x60] sm:$0xff]
  %v1443 = vld [vmem:[%s3 + $0x68] sm:$0xff]
  %v1444 = vld [vmem:[%s3 + $0x70] sm:$0xff]
  %v1445 = vld [vmem:[%s3 + $0x78] sm:$0xff]
  %v1446 = vld [vmem:[%s3 + $0x80] sm:$0xff]
  %v1447 = vld [vmem:[%s3 + $0x88] sm:$0xff]
  %v1448 = vld [vmem:[%s3 + $0x90] sm:$0xff]
  %v1449 = vld [vmem:[%s3 + $0x98] sm:$0xff]
  %v1450 = vld [vmem:[%s3 + $0xa0] sm:$0xff]
  %v1451 = vld [vmem:[%s3 + $0xa8] sm:$0xff]
  %v1452 = vld [vmem:[%s3 + $0xb0] sm:$0xff]
  %v1453 = vld [vmem:[%s3 + $0xb8] sm:$0xff]
  %v1454 = vld [vmem:[%s3 + $0xc0] sm:$0xff]
  %v1455 = vld [vmem:[%s3 + $0xc8] sm:$0xff]
  %v1456 = vld [vmem:[%s3 + $0xd0] sm:$0xff]
  %v1457 = vld [vmem:[%s3 + $0xd8] sm:$0xff]
  %v1458 = vld [vmem:[%s3 + $0xe0] sm:$0xff]
  %v1459 = vld [vmem:[%s3 + $0xe8] sm:$0xff]
  %v1460 = vld [vmem:[%s3 + $0xf0] sm:$0xff]
  %v1461 = vld [vmem:[%s3 + $0xf8] sm:$0xff]
  %v1462 = vld [vmem:[%s3 + $0x100] sm:$0xff]
  %v1463 = vld [vmem:[%s3 + $0x108] sm:$0xff]
  %v1464 = vld [vmem:[%s3 + $0x110] sm:$0xff]
  %v1465 = vld [vmem:[%s3 + $0x118] sm:$0xff]
  %v1466 = vld [vmem:[%s3 + $0x120] sm:$0xff]
  %v1467 = vld [vmem:[%s3 + $0x128] sm:$0xff]
  %v1468 = vld [vmem:[%s3 + $0x130] sm:$0xff]
  %v1469 = vld [vmem:[%s3 + $0x138] sm:$0xff]
  %v1470 = vld [vmem:[%s3 + $0x140] sm:$0xff]
  %v1471 = vld [vmem:[%s3 + $0x148] sm:$0xff]
  %v1472 = vld [vmem:[%s3 + $0x150] sm:$0xff]
  %v1473 = vld [vmem:[%s3 + $0x158] sm:$0xff]
  %v1474 = vld [vmem:[%s3 + $0x160] sm:$0xff]
  %v1475 = vld [vmem:[%s3 + $0x168] sm:$0xff]
  %v1476 = vld [vmem:[%s3 + $0x170] sm:$0xff]
  %v1477 = vld [vmem:[%s3 + $0x178] sm:$0xff]
  %v1478 = vld [vmem:[%s3 + $0x180] sm:$0xff]
  %v1479 = vld [vmem:[%s3 + $0x188] sm:$0xff]
  %v1480 = vld [vmem:[%s3 + $0x190] sm:$0xff]
  %v1481 = vld [vmem:[%s3 + $0x198] sm:$0xff]
  %v1482 = vld [vmem:[%s3 + $0x1a0] sm:$0xff]
  %v1483 = vld [vmem:[%s3 + $0x1a8] sm:$0xff]
  %v1484 = vld [vmem:[%s3 + $0x1b0] sm:$0xff]
  %v1485 = vld [vmem:[%s3 + $0x1b8] sm:$0xff]
  %v1486 = vld [vmem:[%s3 + $0x1c0] sm:$0xff]
  %v1487 = vld [vmem:[%s3 + $0x1c8] sm:$0xff]
  %v1488 = vld [vmem:[%s3 + $0x1d0] sm:$0xff]
  %v1489 = vld [vmem:[%s3 + $0x1d8] sm:$0xff]
  %v1490 = vld [vmem:[%s3 + $0x1e0] sm:$0xff]
  %v1491 = vld [vmem:[%s3 + $0x1e8] sm:$0xff]
  %v1492 = vld [vmem:[%s3 + $0x1f0] sm:$0xff]
  %v1493 = vld [vmem:[%s3 + $0x1f8] sm:$0xff]
  %1494 = vmatprep.subr.mxu0 %v1431
  %1495 = vmatpush1.msra.mxu0 %v1430
  %1496 = vmatprep.subr.mxu0 %v1435
  %1497 = vmatpush1.msra.mxu0 %v1434
  %1498 = vmatprep.subr.mxu0 %v1439
  %1499 = vmatpush1.msra.mxu0 %v1438
  %1500 = vmatprep.subr.mxu0 %v1443
  %1501 = vmatpush1.msra.mxu0 %v1442
  %1502 = vmatprep.subr.mxu0 %v1447
  %1503 = vmatpush1.msra.mxu0 %v1446
  %1504 = vmatprep.subr.mxu0 %v1451
  %1505 = vmatpush1.msra.mxu0 %v1450
  %1506 = vmatprep.subr.mxu0 %v1455
  %1507 = vmatpush1.msra.mxu0 %v1454
  %1508 = vmatprep.subr.mxu0 %v1459
  %1509 = vmatpush1.msra.mxu0 %v1458
  %1510 = vmatprep.subr.mxu0 %v1463
  %1511 = vmatpush1.msra.mxu0 %v1462
  %1512 = vmatprep.subr.mxu0 %v1467
  %1513 = vmatpush1.msra.mxu0 %v1466
  %1514 = vmatprep.subr.mxu0 %v1471
  %1515 = vmatpush1.msra.mxu0 %v1470
  %1516 = vmatprep.subr.mxu0 %v1475
  %1517 = vmatpush1.msra.mxu0 %v1474
  %1518 = vmatprep.subr.mxu0 %v1479
  %1519 = vmatpush1.msra.mxu0 %v1478
  %1520 = vmatprep.subr.mxu0 %v1483
  %1521 = vmatpush1.msra.mxu0 %v1482
  %1522 = vmatprep.subr.mxu0 %v1487
  %1523 = vmatpush1.msra.mxu0 %v1486
  %1524 = vmatprep.subr.mxu0 %v1491
  %1525 = vmatpush1.msra.mxu0 %v1490
  %1526 = vmatprep.subr.mxu0 0.0
  %1527 = vmatpush1.msra.mxu0 0.0
  %1528 = vmatprep.subr.mxu0 0.0
  %1529 = vmatpush1.msra.mxu0 0.0
  %1530 = vmatprep.subr.mxu0 0.0
  %1531 = vmatpush1.msra.mxu0 0.0
  %1532 = vmatprep.subr.mxu0 0.0
  %1533 = vmatpush1.msra.mxu0 0.0
  %1534 = vmatprep.subr.mxu0 0.0
  %1535 = vmatpush1.msra.mxu0 0.0
  %1536 = vmatprep.subr.mxu0 0.0
  %1537 = vmatpush1.msra.mxu0 0.0
  %1538 = vmatprep.subr.mxu0 0.0
  %1539 = vmatpush1.msra.mxu0 0.0
  %1540 = vmatprep.subr.mxu0 0.0
  %1541 = vmatpush1.msra.mxu0 0.0
  %1542 = vmatprep.subr.mxu0 0.0
  %1543 = vmatpush1.msra.mxu0 0.0
  %1544 = vmatprep.subr.mxu0 0.0
  %1545 = vmatpush1.msra.mxu0 0.0
  %1546 = vmatprep.subr.mxu0 0.0
  %1547 = vmatpush1.msra.mxu0 0.0
  %1548 = vmatprep.subr.mxu0 0.0
  %1549 = vmatpush1.msra.mxu0 0.0
  %1550 = vmatprep.subr.mxu0 0.0
  %1551 = vmatpush1.msra.mxu0 0.0
  %1552 = vmatprep.subr.mxu0 0.0
  %1553 = vmatpush1.msra.mxu0 0.0
  %1554 = vmatprep.subr.mxu0 0.0
  %1555 = vmatpush1.msra.mxu0 0.0
  %1556 = vmatprep.subr.mxu0 0.0
  %1557 = vmatpush1.msra.mxu0 0.0
  %1558 = vmatprep.mubr.f32.mxu0 0.0
  %1559 = vmatmul.mubr.f32.gmra.mrb[0].mxu0 %v1422
  %v1560 = vpop.f32.mrb[0].mxu0
  %v1561 = vadd.f32 0.0, %v1560
  %v1562 = vpop.f32.mrb[0].mxu0
  %v1563 = vadd.f32 0.0, %v1562
  %1564 = vdwg.mxu0
  %1565 = vmatprep.subr.mxu0 %v1433
  %1566 = vmatpush1.msra.mxu0 %v1432
  %1567 = vmatprep.subr.mxu0 %v1437
  %1568 = vmatpush1.msra.mxu0 %v1436
  %1569 = vmatprep.subr.mxu0 %v1441
  %1570 = vmatpush1.msra.mxu0 %v1440
  %1571 = vmatprep.subr.mxu0 %v1445
  %1572 = vmatpush1.msra.mxu0 %v1444
  %1573 = vmatprep.subr.mxu0 %v1449
  %1574 = vmatpush1.msra.mxu0 %v1448
  %1575 = vmatprep.subr.mxu0 %v1453
  %1576 = vmatpush1.msra.mxu0 %v1452
  %1577 = vmatprep.subr.mxu0 %v1457
  %1578 = vmatpush1.msra.mxu0 %v1456
  %1579 = vmatprep.subr.mxu0 %v1461
  %1580 = vmatpush1.msra.mxu0 %v1460
  %1581 = vmatprep.subr.mxu0 %v1465
  %1582 = vmatpush1.msra.mxu0 %v1464
  %1583 = vmatprep.subr.mxu0 %v1469
  %1584 = vmatpush1.msra.mxu0 %v1468
  %1585 = vmatprep.subr.mxu0 %v1473
  %1586 = vmatpush1.msra.mxu0 %v1472
  %1587 = vmatprep.subr.mxu0 %v1477
  %1588 = vmatpush1.msra.mxu0 %v1476
  %1589 = vmatprep.subr.mxu0 %v1481
  %1590 = vmatpush1.msra.mxu0 %v1480
  %1591 = vmatprep.subr.mxu0 %v1485
  %1592 = vmatpush1.msra.mxu0 %v1484
  %1593 = vmatprep.subr.mxu0 %v1489
  %1594 = vmatpush1.msra.mxu0 %v1488
  %1595 = vmatprep.subr.mxu0 %v1493
  %1596 = vmatpush1.msra.mxu0 %v1492
  %1597 = vmatprep.subr.mxu0 0.0
  %1598 = vmatpush1.msra.mxu0 0.0
  %1599 = vmatprep.subr.mxu0 0.0
  %1600 = vmatpush1.msra.mxu0 0.0
  %1601 = vmatprep.subr.mxu0 0.0
  %1602 = vmatpush1.msra.mxu0 0.0
  %1603 = vmatprep.subr.mxu0 0.0
  %1604 = vmatpush1.msra.mxu0 0.0
  %1605 = vmatprep.subr.mxu0 0.0
  %1606 = vmatpush1.msra.mxu0 0.0
  %1607 = vmatprep.subr.mxu0 0.0
  %1608 = vmatpush1.msra.mxu0 0.0
  %1609 = vmatprep.subr.mxu0 0.0
  %1610 = vmatpush1.msra.mxu0 0.0
  %1611 = vmatprep.subr.mxu0 0.0
  %1612 = vmatpush1.msra.mxu0 0.0
  %1613 = vmatprep.subr.mxu0 0.0
  %1614 = vmatpush1.msra.mxu0 0.0
  %1615 = vmatprep.subr.mxu0 0.0
  %1616 = vmatpush1.msra.mxu0 0.0
  %1617 = vmatprep.subr.mxu0 0.0
  %1618 = vmatpush1.msra.mxu0 0.0
  %1619 = vmatprep.subr.mxu0 0.0
  %1620 = vmatpush1.msra.mxu0 0.0
  %1621 = vmatprep.subr.mxu0 0.0
  %1622 = vmatpush1.msra.mxu0 0.0
  %1623 = vmatprep.subr.mxu0 0.0
  %1624 = vmatpush1.msra.mxu0 0.0
  %1625 = vmatprep.subr.mxu0 0.0
  %1626 = vmatpush1.msra.mxu0 0.0
  %1627 = vmatprep.subr.mxu0 0.0
  %1628 = vmatpush1.msra.mxu0 0.0
  %1629 = vmatprep.mubr.f32.mxu0 0.0
  %1630 = vmatmul.mubr.f32.gmra.mrb[0].mxu0 %v1422
  %v1631 = vpop.f32.mrb[0].mxu0
  %v1632 = vadd.f32 0.0, %v1631
  %v1633 = vpop.f32.mrb[0].mxu0
  %v1634 = vadd.f32 0.0, %v1633
  %1635 = vdwg.mxu0
  %v1636 = vadd.f32 %v1426, %v1561
  %v1637 = vadd.f32 %v1427, %v1563
  %v1638 = vadd.f32 %v1428, %v1632
  %v1639 = vadd.f32 %v1429, %v1634
  %v1640 = vmul.f32 %v1636, 0.5
  %v1641 = vmul.f32 %v1637, 0.5
  %v1642 = vmul.f32 %v1638, 0.5
  %v1643 = vtanh.pop %v1640
  %v1644 = vtanh.pop %v1641
  %v1645 = vtanh.pop %v1642
  %v1646 = vmul.f32 %v1643, 0.5
  %v1647 = vmul.f32 %v1644, 0.5
  %v1648 = vmul.f32 %v1645, 0.5
  %v1649 = vadd.f32 %v1646, 0.5
  %v1650 = vadd.f32 %v1647, 0.5
  %v1651 = vadd.f32 %v1648, 0.5
  %v1652 = vtanh.pop %v1639
  %v1653 = vmul.f32 %v1650, %v1420
  %v1654 = vmul.f32 %v1649, %v1652
  %v1655 = vadd.f32 %v1653, %v1654
  %v1656 = vtanh.pop %v1655
  %v1657 = vmul.f32 %v1651, %v1656
  %s1658 = scalar_lea.vmem [#allocation2], 48
  %1659 = vst [vmem:[%s1658] sm:$0xff] %v1657
  %s1660 = scalar_lea.vmem %s0, 224
  %v1661 = vld [vmem:[%s1660] sm:$0xff]
  %v1662 = vld [vmem:[%s1660 + $0x8] sm:$0xff]
  %v1663 = vld [vmem:[%s1660 + $0x10] sm:$0xff]
  %v1664 = vld [vmem:[%s1660 + $0x18] sm:$0xff]
  %v1665 = vld [vmem:[%s3] sm:$0xff]
  %v1666 = vld [vmem:[%s3 + $0x8] sm:$0xff]
  %v1667 = vld [vmem:[%s3 + $0x10] sm:$0xff]
  %v1668 = vld [vmem:[%s3 + $0x18] sm:$0xff]
  %v1669 = vld [vmem:[%s3 + $0x20] sm:$0xff]
  %v1670 = vld [vmem:[%s3 + $0x28] sm:$0xff]
  %v1671 = vld [vmem:[%s3 + $0x30] sm:$0xff]
  %v1672 = vld [vmem:[%s3 + $0x38] sm:$0xff]
  %v1673 = vld [vmem:[%s3 + $0x40] sm:$0xff]
  %v1674 = vld [vmem:[%s3 + $0x48] sm:$0xff]
  %v1675 = vld [vmem:[%s3 + $0x50] sm:$0xff]
  %v1676 = vld [vmem:[%s3 + $0x58] sm:$0xff]
  %v1677 = vld [vmem:[%s3 + $0x60] sm:$0xff]
  %v1678 = vld [vmem:[%s3 + $0x68] sm:$0xff]
  %v1679 = vld [vmem:[%s3 + $0x70] sm:$0xff]
  %v1680 = vld [vmem:[%s3 + $0x78] sm:$0xff]
  %v1681 = vld [vmem:[%s3 + $0x80] sm:$0xff]
  %v1682 = vld [vmem:[%s3 + $0x88] sm:$0xff]
  %v1683 = vld [vmem:[%s3 + $0x90] sm:$0xff]
  %v1684 = vld [vmem:[%s3 + $0x98] sm:$0xff]
  %v1685 = vld [vmem:[%s3 + $0xa0] sm:$0xff]
  %v1686 = vld [vmem:[%s3 + $0xa8] sm:$0xff]
  %v1687 = vld [vmem:[%s3 + $0xb0] sm:$0xff]
  %v1688 = vld [vmem:[%s3 + $0xb8] sm:$0xff]
  %v1689 = vld [vmem:[%s3 + $0xc0] sm:$0xff]
  %v1690 = vld [vmem:[%s3 + $0xc8] sm:$0xff]
  %v1691 = vld [vmem:[%s3 + $0xd0] sm:$0xff]
  %v1692 = vld [vmem:[%s3 + $0xd8] sm:$0xff]
  %v1693 = vld [vmem:[%s3 + $0xe0] sm:$0xff]
  %v1694 = vld [vmem:[%s3 + $0xe8] sm:$0xff]
  %v1695 = vld [vmem:[%s3 + $0xf0] sm:$0xff]
  %v1696 = vld [vmem:[%s3 + $0xf8] sm:$0xff]
  %v1697 = vld [vmem:[%s3 + $0x100] sm:$0xff]
  %v1698 = vld [vmem:[%s3 + $0x108] sm:$0xff]
  %v1699 = vld [vmem:[%s3 + $0x110] sm:$0xff]
  %v1700 = vld [vmem:[%s3 + $0x118] sm:$0xff]
  %v1701 = vld [vmem:[%s3 + $0x120] sm:$0xff]
  %v1702 = vld [vmem:[%s3 + $0x128] sm:$0xff]
  %v1703 = vld [vmem:[%s3 + $0x130] sm:$0xff]
  %v1704 = vld [vmem:[%s3 + $0x138] sm:$0xff]
  %v1705 = vld [vmem:[%s3 + $0x140] sm:$0xff]
  %v1706 = vld [vmem:[%s3 + $0x148] sm:$0xff]
  %v1707 = vld [vmem:[%s3 + $0x150] sm:$0xff]
  %v1708 = vld [vmem:[%s3 + $0x158] sm:$0xff]
  %v1709 = vld [vmem:[%s3 + $0x160] sm:$0xff]
  %v1710 = vld [vmem:[%s3 + $0x168] sm:$0xff]
  %v1711 = vld [vmem:[%s3 + $0x170] sm:$0xff]
  %v1712 = vld [vmem:[%s3 + $0x178] sm:$0xff]
  %v1713 = vld [vmem:[%s3 + $0x180] sm:$0xff]
  %v1714 = vld [vmem:[%s3 + $0x188] sm:$0xff]
  %v1715 = vld [vmem:[%s3 + $0x190] sm:$0xff]
  %v1716 = vld [vmem:[%s3 + $0x198] sm:$0xff]
  %v1717 = vld [vmem:[%s3 + $0x1a0] sm:$0xff]
  %v1718 = vld [vmem:[%s3 + $0x1a8] sm:$0xff]
  %v1719 = vld [vmem:[%s3 + $0x1b0] sm:$0xff]
  %v1720 = vld [vmem:[%s3 + $0x1b8] sm:$0xff]
  %v1721 = vld [vmem:[%s3 + $0x1c0] sm:$0xff]
  %v1722 = vld [vmem:[%s3 + $0x1c8] sm:$0xff]
  %v1723 = vld [vmem:[%s3 + $0x1d0] sm:$0xff]
  %v1724 = vld [vmem:[%s3 + $0x1d8] sm:$0xff]
  %v1725 = vld [vmem:[%s3 + $0x1e0] sm:$0xff]
  %v1726 = vld [vmem:[%s3 + $0x1e8] sm:$0xff]
  %v1727 = vld [vmem:[%s3 + $0x1f0] sm:$0xff]
  %v1728 = vld [vmem:[%s3 + $0x1f8] sm:$0xff]
  %1729 = vmatprep.subr.mxu0 %v1666
  %1730 = vmatpush1.msra.mxu0 %v1665
  %1731 = vmatprep.subr.mxu0 %v1670
  %1732 = vmatpush1.msra.mxu0 %v1669
  %1733 = vmatprep.subr.mxu0 %v1674
  %1734 = vmatpush1.msra.mxu0 %v1673
  %1735 = vmatprep.subr.mxu0 %v1678
  %1736 = vmatpush1.msra.mxu0 %v1677
  %1737 = vmatprep.subr.mxu0 %v1682
  %1738 = vmatpush1.msra.mxu0 %v1681
  %1739 = vmatprep.subr.mxu0 %v1686
  %1740 = vmatpush1.msra.mxu0 %v1685
  %1741 = vmatprep.subr.mxu0 %v1690
  %1742 = vmatpush1.msra.mxu0 %v1689
  %1743 = vmatprep.subr.mxu0 %v1694
  %1744 = vmatpush1.msra.mxu0 %v1693
  %1745 = vmatprep.subr.mxu0 %v1698
  %1746 = vmatpush1.msra.mxu0 %v1697
  %1747 = vmatprep.subr.mxu0 %v1702
  %1748 = vmatpush1.msra.mxu0 %v1701
  %1749 = vmatprep.subr.mxu0 %v1706
  %1750 = vmatpush1.msra.mxu0 %v1705
  %1751 = vmatprep.subr.mxu0 %v1710
  %1752 = vmatpush1.msra.mxu0 %v1709
  %1753 = vmatprep.subr.mxu0 %v1714
  %1754 = vmatpush1.msra.mxu0 %v1713
  %1755 = vmatprep.subr.mxu0 %v1718
  %1756 = vmatpush1.msra.mxu0 %v1717
  %1757 = vmatprep.subr.mxu0 %v1722
  %1758 = vmatpush1.msra.mxu0 %v1721
  %1759 = vmatprep.subr.mxu0 %v1726
  %1760 = vmatpush1.msra.mxu0 %v1725
  %1761 = vmatprep.subr.mxu0 0.0
  %1762 = vmatpush1.msra.mxu0 0.0
  %1763 = vmatprep.subr.mxu0 0.0
  %1764 = vmatpush1.msra.mxu0 0.0
  %1765 = vmatprep.subr.mxu0 0.0
  %1766 = vmatpush1.msra.mxu0 0.0
  %1767 = vmatprep.subr.mxu0 0.0
  %1768 = vmatpush1.msra.mxu0 0.0
  %1769 = vmatprep.subr.mxu0 0.0
  %1770 = vmatpush1.msra.mxu0 0.0
  %1771 = vmatprep.subr.mxu0 0.0
  %1772 = vmatpush1.msra.mxu0 0.0
  %1773 = vmatprep.subr.mxu0 0.0
  %1774 = vmatpush1.msra.mxu0 0.0
  %1775 = vmatprep.subr.mxu0 0.0
  %1776 = vmatpush1.msra.mxu0 0.0
  %1777 = vmatprep.subr.mxu0 0.0
  %1778 = vmatpush1.msra.mxu0 0.0
  %1779 = vmatprep.subr.mxu0 0.0
  %1780 = vmatpush1.msra.mxu0 0.0
  %1781 = vmatprep.subr.mxu0 0.0
  %1782 = vmatpush1.msra.mxu0 0.0
  %1783 = vmatprep.subr.mxu0 0.0
  %1784 = vmatpush1.msra.mxu0 0.0
  %1785 = vmatprep.subr.mxu0 0.0
  %1786 = vmatpush1.msra.mxu0 0.0
  %1787 = vmatprep.subr.mxu0 0.0
  %1788 = vmatpush1.msra.mxu0 0.0
  %1789 = vmatprep.subr.mxu0 0.0
  %1790 = vmatpush1.msra.mxu0 0.0
  %1791 = vmatprep.subr.mxu0 0.0
  %1792 = vmatpush1.msra.mxu0 0.0
  %1793 = vmatprep.mubr.f32.mxu0 0.0
  %1794 = vmatmul.mubr.f32.gmra.mrb[0].mxu0 %v1657
  %v1795 = vpop.f32.mrb[0].mxu0
  %v1796 = vadd.f32 0.0, %v1795
  %v1797 = vpop.f32.mrb[0].mxu0
  %v1798 = vadd.f32 0.0, %v1797
  %1799 = vdwg.mxu0
  %1800 = vmatprep.subr.mxu0 %v1668
  %1801 = vmatpush1.msra.mxu0 %v1667
  %1802 = vmatprep.subr.mxu0 %v1672
  %1803 = vmatpush1.msra.mxu0 %v1671
  %1804 = vmatprep.subr.mxu0 %v1676
  %1805 = vmatpush1.msra.mxu0 %v1675
  %1806 = vmatprep.subr.mxu0 %v1680
  %1807 = vmatpush1.msra.mxu0 %v1679
  %1808 = vmatprep.subr.mxu0 %v1684
  %1809 = vmatpush1.msra.mxu0 %v1683
  %1810 = vmatprep.subr.mxu0 %v1688
  %1811 = vmatpush1.msra.mxu0 %v1687
  %1812 = vmatprep.subr.mxu0 %v1692
  %1813 = vmatpush1.msra.mxu0 %v1691
  %1814 = vmatprep.subr.mxu0 %v1696
  %1815 = vmatpush1.msra.mxu0 %v1695
  %1816 = vmatprep.subr.mxu0 %v1700
  %1817 = vmatpush1.msra.mxu0 %v1699
  %1818 = vmatprep.subr.mxu0 %v1704
  %1819 = vmatpush1.msra.mxu0 %v1703
  %1820 = vmatprep.subr.mxu0 %v1708
  %1821 = vmatpush1.msra.mxu0 %v1707
  %1822 = vmatprep.subr.mxu0 %v1712
  %1823 = vmatpush1.msra.mxu0 %v1711
  %1824 = vmatprep.subr.mxu0 %v1716
  %1825 = vmatpush1.msra.mxu0 %v1715
  %1826 = vmatprep.subr.mxu0 %v1720
  %1827 = vmatpush1.msra.mxu0 %v1719
  %1828 = vmatprep.subr.mxu0 %v1724
  %1829 = vmatpush1.msra.mxu0 %v1723
  %1830 = vmatprep.subr.mxu0 %v1728
  %1831 = vmatpush1.msra.mxu0 %v1727
  %1832 = vmatprep.subr.mxu0 0.0
  %1833 = vmatpush1.msra.mxu0 0.0
  %1834 = vmatprep.subr.mxu0 0.0
  %1835 = vmatpush1.msra.mxu0 0.0
  %1836 = vmatprep.subr.mxu0 0.0
  %1837 = vmatpush1.msra.mxu0 0.0
  %1838 = vmatprep.subr.mxu0 0.0
  %1839 = vmatpush1.msra.mxu0 0.0
  %1840 = vmatprep.subr.mxu0 0.0
  %1841 = vmatpush1.msra.mxu0 0.0
  %1842 = vmatprep.subr.mxu0 0.0
  %1843 = vmatpush1.msra.mxu0 0.0
  %1844 = vmatprep.subr.mxu0 0.0
  %1845 = vmatpush1.msra.mxu0 0.0
  %1846 = vmatprep.subr.mxu0 0.0
  %1847 = vmatpush1.msra.mxu0 0.0
  %1848 = vmatprep.subr.mxu0 0.0
  %1849 = vmatpush1.msra.mxu0 0.0
  %1850 = vmatprep.subr.mxu0 0.0
  %1851 = vmatpush1.msra.mxu0 0.0
  %1852 = vmatprep.subr.mxu0 0.0
  %1853 = vmatpush1.msra.mxu0 0.0
  %1854 = vmatprep.subr.mxu0 0.0
  %1855 = vmatpush1.msra.mxu0 0.0
  %1856 = vmatprep.subr.mxu0 0.0
  %1857 = vmatpush1.msra.mxu0 0.0
  %1858 = vmatprep.subr.mxu0 0.0
  %1859 = vmatpush1.msra.mxu0 0.0
  %1860 = vmatprep.subr.mxu0 0.0
  %1861 = vmatpush1.msra.mxu0 0.0
  %1862 = vmatprep.subr.mxu0 0.0
  %1863 = vmatpush1.msra.mxu0 0.0
  %1864 = vmatprep.mubr.f32.mxu0 0.0
  %1865 = vmatmul.mubr.f32.gmra.mrb[0].mxu0 %v1657
  %v1866 = vpop.f32.mrb[0].mxu0
  %v1867 = vadd.f32 0.0, %v1866
  %v1868 = vpop.f32.mrb[0].mxu0
  %v1869 = vadd.f32 0.0, %v1868
  %1870 = vdwg.mxu0
  %v1871 = vadd.f32 %v1661, %v1796
  %v1872 = vadd.f32 %v1662, %v1798
  %v1873 = vadd.f32 %v1663, %v1867
  %v1874 = vadd.f32 %v1664, %v1869
  %v1875 = vmul.f32 %v1871, 0.5
  %v1876 = vmul.f32 %v1872, 0.5
  %v1877 = vmul.f32 %v1873, 0.5
  %v1878 = vtanh.pop %v1875
  %v1879 = vtanh.pop %v1876
  %v1880 = vtanh.pop %v1877
  %v1881 = vmul.f32 %v1878, 0.5
  %v1882 = vmul.f32 %v1879, 0.5
  %v1883 = vmul.f32 %v1880, 0.5
  %v1884 = vadd.f32 %v1881, 0.5
  %v1885 = vadd.f32 %v1882, 0.5
  %v1886 = vadd.f32 %v1883, 0.5
  %v1887 = vtanh.pop %v1874
  %v1888 = vmul.f32 %v1885, %v1655
  %v1889 = vmul.f32 %v1884, %v1887
  %v1890 = vadd.f32 %v1888, %v1889
  %v1891 = vtanh.pop %v1890
  %v1892 = vmul.f32 %v1886, %v1891
  %s1893 = scalar_lea.vmem [#allocation2], 56
  %1894 = vst [vmem:[%s1893] sm:$0xff] %v1892
  %1895 = vst [vmem:[%s4] sm:$0xff] %v1892
  %v1896 = vld [vmem:[#allocation2] sm:$0xff]
  %v1897 = vld [vmem:[#allocation2 + $0x8] sm:$0xff]
  %v1898 = vld [vmem:[#allocation2 + $0x10] sm:$0xff]
  %v1899 = vld [vmem:[#allocation2 + $0x18] sm:$0xff]
  %v1900 = vld [vmem:[#allocation2 + $0x20] sm:$0xff]
  %v1901 = vld [vmem:[#allocation2 + $0x28] sm:$0xff]
  %v1902 = vld [vmem:[#allocation2 + $0x30] sm:$0xff]
  %v1903 = vld [vmem:[#allocation2 + $0x38] sm:$0xff]
  %v1904 = vld [vmem:[%s1] sm:$0xff]
  %v1905 = vld [vmem:[%s1 + $0x8] sm:$0xff]
  %v1906 = vld [vmem:[%s1 + $0x10] sm:$0xff]
  %v1907 = vld [vmem:[%s1 + $0x18] sm:$0xff]
  %v1908 = vld [vmem:[%s1 + $0x20] sm:$0xff]
  %v1909 = vld [vmem:[%s1 + $0x28] sm:$0xff]
  %v1910 = vld [vmem:[%s1 + $0x30] sm:$0xff]
  %v1911 = vld [vmem:[%s1 + $0x38] sm:$0xff]
  %v1912 = vld [vmem:[%s1 + $0x40] sm:$0xff]
  %v1913 = vld [vmem:[%s1 + $0x48] sm:$0xff]
  %v1914 = vld [vmem:[%s1 + $0x50] sm:$0xff]
  %v1915 = vld [vmem:[%s1 + $0x58] sm:$0xff]
  %v1916 = vld [vmem:[%s1 + $0x60] sm:$0xff]
  %v1917 = vld [vmem:[%s1 + $0x68] sm:$0xff]
  %v1918 = vld [vmem:[%s1 + $0x70] sm:$0xff]
  %v1919 = vld [vmem:[%s1 + $0x78] sm:$0xff]
  %v1920 = vld [vmem:[%s1 + $0x80] sm:$0xff]
  %v1921 = vld [vmem:[%s1 + $0x88] sm:$0xff]
  %v1922 = vld [vmem:[%s1 + $0x90] sm:$0xff]
  %v1923 = vld [vmem:[%s1 + $0x98] sm:$0xff]
  %v1924 = vld [vmem:[%s1 + $0xa0] sm:$0xff]
  %v1925 = vld [vmem:[%s1 + $0xa8] sm:$0xff]
  %v1926 = vld [vmem:[%s1 + $0xb0] sm:$0xff]
  %v1927 = vld [vmem:[%s1 + $0xb8] sm:$0xff]
  %v1928 = vld [vmem:[%s1 + $0xc0] sm:$0xff]
  %v1929 = vld [vmem:[%s1 + $0xc8] sm:$0xff]
  %v1930 = vld [vmem:[%s1 + $0xd0] sm:$0xff]
  %v1931 = vld [vmem:[%s1 + $0xd8] sm:$0xff]
  %v1932 = vld [vmem:[%s1 + $0xe0] sm:$0xff]
  %v1933 = vld [vmem:[%s1 + $0xe8] sm:$0xff]
  %v1934 = vld [vmem:[%s1 + $0xf0] sm:$0xff]
  %v1935 = vld [vmem:[%s1 + $0xf8] sm:$0xff]
  %v1936 = vld [vmem:[%s1 + $0x100] sm:$0xff]
  %v1937 = vld [vmem:[%s1 + $0x108] sm:$0xff]
  %v1938 = vld [vmem:[%s1 + $0x110] sm:$0xff]
  %v1939 = vld [vmem:[%s1 + $0x118] sm:$0xff]
  %v1940 = vld [vmem:[%s1 + $0x120] sm:$0xff]
  %v1941 = vld [vmem:[%s1 + $0x128] sm:$0xff]
  %v1942 = vld [vmem:[%s1 + $0x130] sm:$0xff]
  %v1943 = vld [vmem:[%s1 + $0x138] sm:$0xff]
  %v1944 = vld [vmem:[%s1 + $0x140] sm:$0xff]
  %v1945 = vld [vmem:[%s1 + $0x148] sm:$0xff]
  %v1946 = vld [vmem:[%s1 + $0x150] sm:$0xff]
  %v1947 = vld [vmem:[%s1 + $0x158] sm:$0xff]
  %v1948 = vld [vmem:[%s1 + $0x160] sm:$0xff]
  %v1949 = vld [vmem:[%s1 + $0x168] sm:$0xff]
  %v1950 = vld [vmem:[%s1 + $0x170] sm:$0xff]
  %v1951 = vld [vmem:[%s1 + $0x178] sm:$0xff]
  %v1952 = vld [vmem:[%s1 + $0x180] sm:$0xff]
  %v1953 = vld [vmem:[%s1 + $0x188] sm:$0xff]
  %v1954 = vld [vmem:[%s1 + $0x190] sm:$0xff]
  %v1955 = vld [vmem:[%s1 + $0x198] sm:$0xff]
  %v1956 = vld [vmem:[%s1 + $0x1a0] sm:$0xff]
  %v1957 = vld [vmem:[%s1 + $0x1a8] sm:$0xff]
  %v1958 = vld [vmem:[%s1 + $0x1b0] sm:$0xff]
  %v1959 = vld [vmem:[%s1 + $0x1b8] sm:$0xff]
  %v1960 = vld [vmem:[%s1 + $0x1c0] sm:$0xff]
  %v1961 = vld [vmem:[%s1 + $0x1c8] sm:$0xff]
  %v1962 = vld [vmem:[%s1 + $0x1d0] sm:$0xff]
  %v1963 = vld [vmem:[%s1 + $0x1d8] sm:$0xff]
  %v1964 = vld [vmem:[%s1 + $0x1e0] sm:$0xff]
  %v1965 = vld [vmem:[%s1 + $0x1e8] sm:$0xff]
  %v1966 = vld [vmem:[%s1 + $0x1f0] sm:$0xff]
  %v1967 = vld [vmem:[%s1 + $0x1f8] sm:$0xff]
  %v1968 = vld [vmem:[%s2] sm:$0xf]
  %v1970 = vlaneseq
  %v1971 = vshrl.u32 %v1970, 7
  %v1972 = vsub.s32 0, %v1971
  %v1973 = vrot.slane %v1968, %v1972
  %v1974 = vlaneseq
  %v1975 = vshrl.u32 %v1974, 7
  %v1976 = vsub.s32 1, %v1975
  %v1977 = vrot.slane %v1968, %v1976
  %v1978 = vlaneseq
  %v1979 = vshrl.u32 %v1978, 7
  %v1980 = vsub.s32 2, %v1979
  %v1981 = vrot.slane %v1968, %v1980
  %v1982 = vlaneseq
  %v1983 = vshrl.u32 %v1982, 7
  %v1984 = vsub.s32 3, %v1983
  %v1985 = vrot.slane %v1968, %v1984
  %1990 = vmatprep.subr.mxu0 %v1905
  %1991 = vmatpush1.msra.mxu0 %v1904
  %1992 = vmatprep.subr.mxu0 %v1909
  %1993 = vmatpush1.msra.mxu0 %v1908
  %1994 = vmatprep.subr.mxu0 %v1913
  %1995 = vmatpush1.msra.mxu0 %v1912
  %1996 = vmatprep.subr.mxu0 %v1917
  %1997 = vmatpush1.msra.mxu0 %v1916
  %1998 = vmatprep.subr.mxu0 %v1921
  %1999 = vmatpush1.msra.mxu0 %v1920
  %2000 = vmatprep.subr.mxu0 %v1925
  %2001 = vmatpush1.msra.mxu0 %v1924
  %2002 = vmatprep.subr.mxu0 %v1929
  %2003 = vmatpush1.msra.mxu0 %v1928
  %2004 = vmatprep.subr.mxu0 %v1933
  %2005 = vmatpush1.msra.mxu0 %v1932
  %2006 = vmatprep.subr.mxu0 %v1937
  %2007 = vmatpush1.msra.mxu0 %v1936
  %2008 = vmatprep.subr.mxu0 %v1941
  %2009 = vmatpush1.msra.mxu0 %v1940
  %2010 = vmatprep.subr.mxu0 %v1945
  %2011 = vmatpush1.msra.mxu0 %v1944
  %2012 = vmatprep.subr.mxu0 %v1949
  %2013 = vmatpush1.msra.mxu0 %v1948
  %2014 = vmatprep.subr.mxu0 %v1953
  %2015 = vmatpush1.msra.mxu0 %v1952
  %2016 = vmatprep.subr.mxu0 %v1957
  %2017 = vmatpush1.msra.mxu0 %v1956
  %2018 = vmatprep.subr.mxu0 %v1961
  %2019 = vmatpush1.msra.mxu0 %v1960
  %2020 = vmatprep.subr.mxu0 %v1965
  %2021 = vmatpush1.msra.mxu0 %v1964
  %2022 = vmatprep.subr.mxu0 0.0
  %2023 = vmatpush1.msra.mxu0 0.0
  %2024 = vmatprep.subr.mxu0 0.0
  %2025 = vmatpush1.msra.mxu0 0.0
  %2026 = vmatprep.subr.mxu0 0.0
  %2027 = vmatpush1.msra.mxu0 0.0
  %2028 = vmatprep.subr.mxu0 0.0
  %2029 = vmatpush1.msra.mxu0 0.0
  %2030 = vmatprep.subr.mxu0 0.0
  %2031 = vmatpush1.msra.mxu0 0.0
  %2032 = vmatprep.subr.mxu0 0.0
  %2033 = vmatpush1.msra.mxu0 0.0
  %2034 = vmatprep.subr.mxu0 0.0
  %2035 = vmatpush1.msra.mxu0 0.0
  %2036 = vmatprep.subr.mxu0 0.0
  %2037 = vmatpush1.msra.mxu0 0.0
  %2038 = vmatprep.subr.mxu0 0.0
  %2039 = vmatpush1.msra.mxu0 0.0
  %2040 = vmatprep.subr.mxu0 0.0
  %2041 = vmatpush1.msra.mxu0 0.0
  %2042 = vmatprep.subr.mxu0 0.0
  %2043 = vmatpush1.msra.mxu0 0.0
  %2044 = vmatprep.subr.mxu0 0.0
  %2045 = vmatpush1.msra.mxu0 0.0
  %2046 = vmatprep.subr.mxu0 0.0
  %2047 = vmatpush1.msra.mxu0 0.0
  %2048 = vmatprep.subr.mxu0 0.0
  %2049 = vmatpush1.msra.mxu0 0.0
  %2050 = vmatprep.subr.mxu0 0.0
  %2051 = vmatpush1.msra.mxu0 0.0
  %2052 = vmatprep.subr.mxu0 0.0
  %2053 = vmatpush1.msra.mxu0 0.0
  %2054 = vmatprep.mubr.f32.mxu0 0.0
  %2055 = vmatmul.mubr.f32.gmra.mrb[0].mxu0 %v1896
  %v2056 = vpop.f32.mrb[0].mxu0
  %v2057 = vadd.f32 %v1973, %v2056
  %v2058 = vpop.f32.mrb[0].mxu0
  %v2059 = vadd.f32 %v1977, %v2058
  %2060 = vmatprep.mubr.f32.mxu0 0.0
  %2061 = vmatmul.mubr.f32.gmra.mrb[0].mxu0 %v1897
  %v2062 = vpop.f32.mrb[0].mxu0
  %v2063 = vadd.f32 %v1973, %v2062
  %v2064 = vpop.f32.mrb[0].mxu0
  %v2065 = vadd.f32 %v1977, %v2064
  %2066 = vmatprep.mubr.f32.mxu0 0.0
  %2067 = vmatmul.mubr.f32.gmra.mrb[0].mxu0 %v1898
  %v2068 = vpop.f32.mrb[0].mxu0
  %v2069 = vadd.f32 %v1973, %v2068
  %v2070 = vpop.f32.mrb[0].mxu0
  %v2071 = vadd.f32 %v1977, %v2070
  %2072 = vmatprep.mubr.f32.mxu0 0.0
  %2073 = vmatmul.mubr.f32.gmra.mrb[0].mxu0 %v1899
  %v2074 = vpop.f32.mrb[0].mxu0
  %v2075 = vadd.f32 %v1973, %v2074
  %v2076 = vpop.f32.mrb[0].mxu0
  %v2077 = vadd.f32 %v1977, %v2076
  %2078 = vmatprep.mubr.f32.mxu0 0.0
  %2079 = vmatmul.mubr.f32.gmra.mrb[0].mxu0 %v1900
  %v2080 = vpop.f32.mrb[0].mxu0
  %v2081 = vadd.f32 %v1973, %v2080
  %v2082 = vpop.f32.mrb[0].mxu0
  %v2083 = vadd.f32 %v1977, %v2082
  %2084 = vmatprep.mubr.f32.mxu0 0.0
  %2085 = vmatmul.mubr.f32.gmra.mrb[0].mxu0 %v1901
  %v2086 = vpop.f32.mrb[0].mxu0
  %v2087 = vadd.f32 %v1973, %v2086
  %v2088 = vpop.f32.mrb[0].mxu0
  %v2089 = vadd.f32 %v1977, %v2088
  %2090 = vmatprep.mubr.f32.mxu0 0.0
  %2091 = vmatmul.mubr.f32.gmra.mrb[0].mxu0 %v1902
  %v2092 = vpop.f32.mrb[0].mxu0
  %v2093 = vadd.f32 %v1973, %v2092
  %v2094 = vpop.f32.mrb[0].mxu0
  %v2095 = vadd.f32 %v1977, %v2094
  %2096 = vmatprep.mubr.f32.mxu0 0.0
  %2097 = vmatmul.mubr.f32.gmra.mrb[0].mxu0 %v1903
  %v2098 = vpop.f32.mrb[0].mxu0
  %v2099 = vadd.f32 %v1973, %v2098
  %v2100 = vpop.f32.mrb[0].mxu0
  %v2101 = vadd.f32 %v1977, %v2100
  %2102 = vdwg.mxu0
  %2103 = vmatprep.subr.mxu0 %v1907
  %2104 = vmatpush1.msra.mxu0 %v1906
  %2105 = vmatprep.subr.mxu0 %v1911
  %2106 = vmatpush1.msra.mxu0 %v1910
  %2107 = vmatprep.subr.mxu0 %v1915
  %2108 = vmatpush1.msra.mxu0 %v1914
  %2109 = vmatprep.subr.mxu0 %v1919
  %2110 = vmatpush1.msra.mxu0 %v1918
  %2111 = vmatprep.subr.mxu0 %v1923
  %2112 = vmatpush1.msra.mxu0 %v1922
  %2113 = vmatprep.subr.mxu0 %v1927
  %2114 = vmatpush1.msra.mxu0 %v1926
  %2115 = vmatprep.subr.mxu0 %v1931
  %2116 = vmatpush1.msra.mxu0 %v1930
  %2117 = vmatprep.subr.mxu0 %v1935
  %2118 = vmatpush1.msra.mxu0 %v1934
  %2119 = vmatprep.subr.mxu0 %v1939
  %2120 = vmatpush1.msra.mxu0 %v1938
  %2121 = vmatprep.subr.mxu0 %v1943
  %2122 = vmatpush1.msra.mxu0 %v1942
  %2123 = vmatprep.subr.mxu0 %v1947
  %2124 = vmatpush1.msra.mxu0 %v1946
  %2125 = vmatprep.subr.mxu0 %v1951
  %2126 = vmatpush1.msra.mxu0 %v1950
  %2127 = vmatprep.subr.mxu0 %v1955
  %2128 = vmatpush1.msra.mxu0 %v1954
  %2129 = vmatprep.subr.mxu0 %v1959
  %2130 = vmatpush1.msra.mxu0 %v1958
  %2131 = vmatprep.subr.mxu0 %v1963
  %2132 = vmatpush1.msra.mxu0 %v1962
  %2133 = vmatprep.subr.mxu0 %v1967
  %2134 = vmatpush1.msra.mxu0 %v1966
  %2135 = vmatprep.subr.mxu0 0.0
  %2136 = vmatpush1.msra.mxu0 0.0
  %2137 = vmatprep.subr.mxu0 0.0
  %2138 = vmatpush1.msra.mxu0 0.0
  %2139 = vmatprep.subr.mxu0 0.0
  %2140 = vmatpush1.msra.mxu0 0.0
  %2141 = vmatprep.subr.mxu0 0.0
  %2142 = vmatpush1.msra.mxu0 0.0
  %2143 = vmatprep.subr.mxu0 0.0
  %2144 = vmatpush1.msra.mxu0 0.0
  %2145 = vmatprep.subr.mxu0 0.0
  %2146 = vmatpush1.msra.mxu0 0.0
  %2147 = vmatprep.subr.mxu0 0.0
  %2148 = vmatpush1.msra.mxu0 0.0
  %2149 = vmatprep.subr.mxu0 0.0
  %2150 = vmatpush1.msra.mxu0 0.0
  %2151 = vmatprep.subr.mxu0 0.0
  %2152 = vmatpush1.msra.mxu0 0.0
  %2153 = vmatprep.subr.mxu0 0.0
  %2154 = vmatpush1.msra.mxu0 0.0
  %2155 = vmatprep.subr.mxu0 0.0
  %2156 = vmatpush1.msra.mxu0 0.0
  %2157 = vmatprep.subr.mxu0 0.0
  %2158 = vmatpush1.msra.mxu0 0.0
  %2159 = vmatprep.subr.mxu0 0.0
  %2160 = vmatpush1.msra.mxu0 0.0
  %2161 = vmatprep.subr.mxu0 0.0
  %2162 = vmatpush1.msra.mxu0 0.0
  %2163 = vmatprep.subr.mxu0 0.0
  %2164 = vmatpush1.msra.mxu0 0.0
  %2165 = vmatprep.subr.mxu0 0.0
  %2166 = vmatpush1.msra.mxu0 0.0
  %2167 = vmatprep.mubr.f32.mxu0 0.0
  %2168 = vmatmul.mubr.f32.gmra.mrb[0].mxu0 %v1896
  %v2169 = vpop.f32.mrb[0].mxu0
  %v2170 = vadd.f32 %v1981, %v2169
  %v2171 = vpop.f32.mrb[0].mxu0
  %v2172 = vadd.f32 %v1985, %v2171
  %2173 = vmatprep.mubr.f32.mxu0 0.0
  %2174 = vmatmul.mubr.f32.gmra.mrb[0].mxu0 %v1897
  %v2175 = vpop.f32.mrb[0].mxu0
  %v2176 = vadd.f32 %v1981, %v2175
  %v2177 = vpop.f32.mrb[0].mxu0
  %v2178 = vadd.f32 %v1985, %v2177
  %2179 = vmatprep.mubr.f32.mxu0 0.0
  %2180 = vmatmul.mubr.f32.gmra.mrb[0].mxu0 %v1898
  %v2181 = vpop.f32.mrb[0].mxu0
  %v2182 = vadd.f32 %v1981, %v2181
  %v2183 = vpop.f32.mrb[0].mxu0
  %v2184 = vadd.f32 %v1985, %v2183
  %2185 = vmatprep.mubr.f32.mxu0 0.0
  %2186 = vmatmul.mubr.f32.gmra.mrb[0].mxu0 %v1899
  %v2187 = vpop.f32.mrb[0].mxu0
  %v2188 = vadd.f32 %v1981, %v2187
  %v2189 = vpop.f32.mrb[0].mxu0
  %v2190 = vadd.f32 %v1985, %v2189
  %2191 = vmatprep.mubr.f32.mxu0 0.0
  %2192 = vmatmul.mubr.f32.gmra.mrb[0].mxu0 %v1900
  %v2193 = vpop.f32.mrb[0].mxu0
  %v2194 = vadd.f32 %v1981, %v2193
  %v2195 = vpop.f32.mrb[0].mxu0
  %v2196 = vadd.f32 %v1985, %v2195
  %2197 = vmatprep.mubr.f32.mxu0 0.0
  %2198 = vmatmul.mubr.f32.gmra.mrb[0].mxu0 %v1901
  %v2199 = vpop.f32.mrb[0].mxu0
  %v2200 = vadd.f32 %v1981, %v2199
  %v2201 = vpop.f32.mrb[0].mxu0
  %v2202 = vadd.f32 %v1985, %v2201
  %2203 = vmatprep.mubr.f32.mxu0 0.0
  %2204 = vmatmul.mubr.f32.gmra.mrb[0].mxu0 %v1902
  %v2205 = vpop.f32.mrb[0].mxu0
  %v2206 = vadd.f32 %v1981, %v2205
  %v2207 = vpop.f32.mrb[0].mxu0
  %v2208 = vadd.f32 %v1985, %v2207
  %2209 = vmatprep.mubr.f32.mxu0 0.0
  %2210 = vmatmul.mubr.f32.gmra.mrb[0].mxu0 %v1903
  %v2211 = vpop.f32.mrb[0].mxu0
  %v2212 = vadd.f32 %v1981, %v2211
  %v2213 = vpop.f32.mrb[0].mxu0
  %v2214 = vadd.f32 %v1985, %v2213
  %2215 = vdwg.mxu0
  %2216 = vst [vmem:[#allocation3] sm:$0xff] %v2057
  %2217 = vst [vmem:[#allocation3 + $0x8] sm:$0xff] %v2059
  %2218 = vst [vmem:[#allocation3 + $0x10] sm:$0xff] %v2170
  %2219 = vst [vmem:[#allocation3 + $0x18] sm:$0xff] %v2172
  %2220 = vst [vmem:[#allocation3 + $0x20] sm:$0xff] %v2063
  %2221 = vst [vmem:[#allocation3 + $0x28] sm:$0xff] %v2065
  %2222 = vst [vmem:[#allocation3 + $0x30] sm:$0xff] %v2176
  %2223 = vst [vmem:[#allocation3 + $0x38] sm:$0xff] %v2178
  %2224 = vst [vmem:[#allocation3 + $0x40] sm:$0xff] %v2069
  %2225 = vst [vmem:[#allocation3 + $0x48] sm:$0xff] %v2071
  %2226 = vst [vmem:[#allocation3 + $0x50] sm:$0xff] %v2182
  %2227 = vst [vmem:[#allocation3 + $0x58] sm:$0xff] %v2184
  %2228 = vst [vmem:[#allocation3 + $0x60] sm:$0xff] %v2075
  %2229 = vst [vmem:[#allocation3 + $0x68] sm:$0xff] %v2077
  %2230 = vst [vmem:[#allocation3 + $0x70] sm:$0xff] %v2188
  %2231 = vst [vmem:[#allocation3 + $0x78] sm:$0xff] %v2190
  %2232 = vst [vmem:[#allocation3 + $0x80] sm:$0xff] %v2081
  %2233 = vst [vmem:[#allocation3 + $0x88] sm:$0xff] %v2083
  %2234 = vst [vmem:[#allocation3 + $0x90] sm:$0xff] %v2194
  %2235 = vst [vmem:[#allocation3 + $0x98] sm:$0xff] %v2196
  %2236 = vst [vmem:[#allocation3 + $0xa0] sm:$0xff] %v2087
  %2237 = vst [vmem:[#allocation3 + $0xa8] sm:$0xff] %v2089
  %2238 = vst [vmem:[#allocation3 + $0xb0] sm:$0xff] %v2200
  %2239 = vst [vmem:[#allocation3 + $0xb8] sm:$0xff] %v2202
  %2240 = vst [vmem:[#allocation3 + $0xc0] sm:$0xff] %v2093
  %2241 = vst [vmem:[#allocation3 + $0xc8] sm:$0xff] %v2095
  %2242 = vst [vmem:[#allocation3 + $0xd0] sm:$0xff] %v2206
  %2243 = vst [vmem:[#allocation3 + $0xd8] sm:$0xff] %v2208
  %2244 = vst [vmem:[#allocation3 + $0xe0] sm:$0xff] %v2099
  %2245 = vst [vmem:[#allocation3 + $0xe8] sm:$0xff] %v2101
  %2246 = vst [vmem:[#allocation3 + $0xf0] sm:$0xff] %v2212
  %2247 = vst [vmem:[#allocation3 + $0xf8] sm:$0xff] %v2214
  %v2248 = vld [vmem:[#allocation3] sm:$0xff]
  %v2249 = vld [vmem:[#allocation3 + $0x8] sm:$0xff]
  %v2250 = vld [vmem:[#allocation3 + $0x10] sm:$0xff]
  %v2251 = vld [vmem:[#allocation3 + $0x18] sm:$0xff]
  %s2252 = scalar_lea.vmem %s3, 512
  %v2253 = vld [vmem:[%s2252] sm:$0xff]
  %v2254 = vld [vmem:[%s2252 + $0x8] sm:$0xff]
  %v2255 = vld [vmem:[%s2252 + $0x10] sm:$0xff]
  %v2256 = vld [vmem:[%s2252 + $0x18] sm:$0xff]
  %v2257 = vld [vmem:[%s2252 + $0x20] sm:$0xff]
  %v2258 = vld [vmem:[%s2252 + $0x28] sm:$0xff]
  %v2259 = vld [vmem:[%s2252 + $0x30] sm:$0xff]
  %v2260 = vld [vmem:[%s2252 + $0x38] sm:$0xff]
  %v2261 = vld [vmem:[%s2252 + $0x40] sm:$0xff]
  %v2262 = vld [vmem:[%s2252 + $0x48] sm:$0xff]
  %v2263 = vld [vmem:[%s2252 + $0x50] sm:$0xff]
  %v2264 = vld [vmem:[%s2252 + $0x58] sm:$0xff]
  %v2265 = vld [vmem:[%s2252 + $0x60] sm:$0xff]
  %v2266 = vld [vmem:[%s2252 + $0x68] sm:$0xff]
  %v2267 = vld [vmem:[%s2252 + $0x70] sm:$0xff]
  %v2268 = vld [vmem:[%s2252 + $0x78] sm:$0xff]
  %v2269 = vld [vmem:[%s2252 + $0x80] sm:$0xff]
  %v2270 = vld [vmem:[%s2252 + $0x88] sm:$0xff]
  %v2271 = vld [vmem:[%s2252 + $0x90] sm:$0xff]
  %v2272 = vld [vmem:[%s2252 + $0x98] sm:$0xff]
  %v2273 = vld [vmem:[%s2252 + $0xa0] sm:$0xff]
  %v2274 = vld [vmem:[%s2252 + $0xa8] sm:$0xff]
  %v2275 = vld [vmem:[%s2252 + $0xb0] sm:$0xff]
  %v2276 = vld [vmem:[%s2252 + $0xb8] sm:$0xff]
  %v2277 = vld [vmem:[%s2252 + $0xc0] sm:$0xff]
  %v2278 = vld [vmem:[%s2252 + $0xc8] sm:$0xff]
  %v2279 = vld [vmem:[%s2252 + $0xd0] sm:$0xff]
  %v2280 = vld [vmem:[%s2252 + $0xd8] sm:$0xff]
  %v2281 = vld [vmem:[%s2252 + $0xe0] sm:$0xff]
  %v2282 = vld [vmem:[%s2252 + $0xe8] sm:$0xff]
  %v2283 = vld [vmem:[%s2252 + $0xf0] sm:$0xff]
  %v2284 = vld [vmem:[%s2252 + $0xf8] sm:$0xff]
  %v2285 = vld [vmem:[%s2252 + $0x100] sm:$0xff]
  %v2286 = vld [vmem:[%s2252 + $0x108] sm:$0xff]
  %v2287 = vld [vmem:[%s2252 + $0x110] sm:$0xff]
  %v2288 = vld [vmem:[%s2252 + $0x118] sm:$0xff]
  %v2289 = vld [vmem:[%s2252 + $0x120] sm:$0xff]
  %v2290 = vld [vmem:[%s2252 + $0x128] sm:$0xff]
  %v2291 = vld [vmem:[%s2252 + $0x130] sm:$0xff]
  %v2292 = vld [vmem:[%s2252 + $0x138] sm:$0xff]
  %v2293 = vld [vmem:[%s2252 + $0x140] sm:$0xff]
  %v2294 = vld [vmem:[%s2252 + $0x148] sm:$0xff]
  %v2295 = vld [vmem:[%s2252 + $0x150] sm:$0xff]
  %v2296 = vld [vmem:[%s2252 + $0x158] sm:$0xff]
  %v2297 = vld [vmem:[%s2252 + $0x160] sm:$0xff]
  %v2298 = vld [vmem:[%s2252 + $0x168] sm:$0xff]
  %v2299 = vld [vmem:[%s2252 + $0x170] sm:$0xff]
  %v2300 = vld [vmem:[%s2252 + $0x178] sm:$0xff]
  %v2301 = vld [vmem:[%s2252 + $0x180] sm:$0xff]
  %v2302 = vld [vmem:[%s2252 + $0x188] sm:$0xff]
  %v2303 = vld [vmem:[%s2252 + $0x190] sm:$0xff]
  %v2304 = vld [vmem:[%s2252 + $0x198] sm:$0xff]
  %v2305 = vld [vmem:[%s2252 + $0x1a0] sm:$0xff]
  %v2306 = vld [vmem:[%s2252 + $0x1a8] sm:$0xff]
  %v2307 = vld [vmem:[%s2252 + $0x1b0] sm:$0xff]
  %v2308 = vld [vmem:[%s2252 + $0x1b8] sm:$0xff]
  %v2309 = vld [vmem:[%s2252 + $0x1c0] sm:$0xff]
  %v2310 = vld [vmem:[%s2252 + $0x1c8] sm:$0xff]
  %v2311 = vld [vmem:[%s2252 + $0x1d0] sm:$0xff]
  %v2312 = vld [vmem:[%s2252 + $0x1d8] sm:$0xff]
  %v2313 = vld [vmem:[%s2252 + $0x1e0] sm:$0xff]
  %v2314 = vld [vmem:[%s2252 + $0x1e8] sm:$0xff]
  %v2315 = vld [vmem:[%s2252 + $0x1f0] sm:$0xff]
  %v2316 = vld [vmem:[%s2252 + $0x1f8] sm:$0xff]
  %2317 = vmatprep.subr.mxu0 %v2254
  %2318 = vmatpush1.msra.mxu0 %v2253
  %2319 = vmatprep.subr.mxu0 %v2258
  %2320 = vmatpush1.msra.mxu0 %v2257
  %2321 = vmatprep.subr.mxu0 %v2262
  %2322 = vmatpush1.msra.mxu0 %v2261
  %2323 = vmatprep.subr.mxu0 %v2266
  %2324 = vmatpush1.msra.mxu0 %v2265
  %2325 = vmatprep.subr.mxu0 %v2270
  %2326 = vmatpush1.msra.mxu0 %v2269
  %2327 = vmatprep.subr.mxu0 %v2274
  %2328 = vmatpush1.msra.mxu0 %v2273
  %2329 = vmatprep.subr.mxu0 %v2278
  %2330 = vmatpush1.msra.mxu0 %v2277
  %2331 = vmatprep.subr.mxu0 %v2282
  %2332 = vmatpush1.msra.mxu0 %v2281
  %2333 = vmatprep.subr.mxu0 %v2286
  %2334 = vmatpush1.msra.mxu0 %v2285
  %2335 = vmatprep.subr.mxu0 %v2290
  %2336 = vmatpush1.msra.mxu0 %v2289
  %2337 = vmatprep.subr.mxu0 %v2294
  %2338 = vmatpush1.msra.mxu0 %v2293
  %2339 = vmatprep.subr.mxu0 %v2298
  %2340 = vmatpush1.msra.mxu0 %v2297
  %2341 = vmatprep.subr.mxu0 %v2302
  %2342 = vmatpush1.msra.mxu0 %v2301
  %2343 = vmatprep.subr.mxu0 %v2306
  %2344 = vmatpush1.msra.mxu0 %v2305
  %2345 = vmatprep.subr.mxu0 %v2310
  %2346 = vmatpush1.msra.mxu0 %v2309
  %2347 = vmatprep.subr.mxu0 %v2314
  %2348 = vmatpush1.msra.mxu0 %v2313
  %2349 = vmatprep.subr.mxu0 0.0
  %2350 = vmatpush1.msra.mxu0 0.0
  %2351 = vmatprep.subr.mxu0 0.0
  %2352 = vmatpush1.msra.mxu0 0.0
  %2353 = vmatprep.subr.mxu0 0.0
  %2354 = vmatpush1.msra.mxu0 0.0
  %2355 = vmatprep.subr.mxu0 0.0
  %2356 = vmatpush1.msra.mxu0 0.0
  %2357 = vmatprep.subr.mxu0 0.0
  %2358 = vmatpush1.msra.mxu0 0.0
  %2359 = vmatprep.subr.mxu0 0.0
  %2360 = vmatpush1.msra.mxu0 0.0
  %2361 = vmatprep.subr.mxu0 0.0
  %2362 = vmatpush1.msra.mxu0 0.0
  %2363 = vmatprep.subr.mxu0 0.0
  %2364 = vmatpush1.msra.mxu0 0.0
  %2365 = vmatprep.subr.mxu0 0.0
  %2366 = vmatpush1.msra.mxu0 0.0
  %2367 = vmatprep.subr.mxu0 0.0
  %2368 = vmatpush1.msra.mxu0 0.0
  %2369 = vmatprep.subr.mxu0 0.0
  %2370 = vmatpush1.msra.mxu0 0.0
  %2371 = vmatprep.subr.mxu0 0.0
  %2372 = vmatpush1.msra.mxu0 0.0
  %2373 = vmatprep.subr.mxu0 0.0
  %2374 = vmatpush1.msra.mxu0 0.0
  %2375 = vmatprep.subr.mxu0 0.0
  %2376 = vmatpush1.msra.mxu0 0.0
  %2377 = vmatprep.subr.mxu0 0.0
  %2378 = vmatpush1.msra.mxu0 0.0
  %2379 = vmatprep.subr.mxu0 0.0
  %2380 = vmatpush1.msra.mxu0 0.0
  %2381 = vmatprep.mubr.f32.mxu0 0.0
  %2382 = vmatmul.mubr.f32.gmra.mrb[0].mxu0 0.0
  %v2383 = vpop.f32.mrb[0].mxu0
  %v2384 = vadd.f32 0.0, %v2383
  %v2385 = vpop.f32.mrb[0].mxu0
  %v2386 = vadd.f32 0.0, %v2385
  %2387 = vdwg.mxu0
  %2388 = vmatprep.subr.mxu0 %v2256
  %2389 = vmatpush1.msra.mxu0 %v2255
  %2390 = vmatprep.subr.mxu0 %v2260
  %2391 = vmatpush1.msra.mxu0 %v2259
  %2392 = vmatprep.subr.mxu0 %v2264
  %2393 = vmatpush1.msra.mxu0 %v2263
  %2394 = vmatprep.subr.mxu0 %v2268
  %2395 = vmatpush1.msra.mxu0 %v2267
  %2396 = vmatprep.subr.mxu0 %v2272
  %2397 = vmatpush1.msra.mxu0 %v2271
  %2398 = vmatprep.subr.mxu0 %v2276
  %2399 = vmatpush1.msra.mxu0 %v2275
  %2400 = vmatprep.subr.mxu0 %v2280
  %2401 = vmatpush1.msra.mxu0 %v2279
  %2402 = vmatprep.subr.mxu0 %v2284
  %2403 = vmatpush1.msra.mxu0 %v2283
  %2404 = vmatprep.subr.mxu0 %v2288
  %2405 = vmatpush1.msra.mxu0 %v2287
  %2406 = vmatprep.subr.mxu0 %v2292
  %2407 = vmatpush1.msra.mxu0 %v2291
  %2408 = vmatprep.subr.mxu0 %v2296
  %2409 = vmatpush1.msra.mxu0 %v2295
  %2410 = vmatprep.subr.mxu0 %v2300
  %2411 = vmatpush1.msra.mxu0 %v2299
  %2412 = vmatprep.subr.mxu0 %v2304
  %2413 = vmatpush1.msra.mxu0 %v2303
  %2414 = vmatprep.subr.mxu0 %v2308
  %2415 = vmatpush1.msra.mxu0 %v2307
  %2416 = vmatprep.subr.mxu0 %v2312
  %2417 = vmatpush1.msra.mxu0 %v2311
  %2418 = vmatprep.subr.mxu0 %v2316
  %2419 = vmatpush1.msra.mxu0 %v2315
  %2420 = vmatprep.subr.mxu0 0.0
  %2421 = vmatpush1.msra.mxu0 0.0
  %2422 = vmatprep.subr.mxu0 0.0
  %2423 = vmatpush1.msra.mxu0 0.0
  %2424 = vmatprep.subr.mxu0 0.0
  %2425 = vmatpush1.msra.mxu0 0.0
  %2426 = vmatprep.subr.mxu0 0.0
  %2427 = vmatpush1.msra.mxu0 0.0
  %2428 = vmatprep.subr.mxu0 0.0
  %2429 = vmatpush1.msra.mxu0 0.0
  %2430 = vmatprep.subr.mxu0 0.0
  %2431 = vmatpush1.msra.mxu0 0.0
  %2432 = vmatprep.subr.mxu0 0.0
  %2433 = vmatpush1.msra.mxu0 0.0
  %2434 = vmatprep.subr.mxu0 0.0
  %2435 = vmatpush1.msra.mxu0 0.0
  %2436 = vmatprep.subr.mxu0 0.0
  %2437 = vmatpush1.msra.mxu0 0.0
  %2438 = vmatprep.subr.mxu0 0.0
  %2439 = vmatpush1.msra.mxu0 0.0
  %2440 = vmatprep.subr.mxu0 0.0
  %2441 = vmatpush1.msra.mxu0 0.0
  %2442 = vmatprep.subr.mxu0 0.0
  %2443 = vmatpush1.msra.mxu0 0.0
  %2444 = vmatprep.subr.mxu0 0.0
  %2445 = vmatpush1.msra.mxu0 0.0
  %2446 = vmatprep.subr.mxu0 0.0
  %2447 = vmatpush1.msra.mxu0 0.0
  %2448 = vmatprep.subr.mxu0 0.0
  %2449 = vmatpush1.msra.mxu0 0.0
  %2450 = vmatprep.subr.mxu0 0.0
  %2451 = vmatpush1.msra.mxu0 0.0
  %2452 = vmatprep.mubr.f32.mxu0 0.0
  %2453 = vmatmul.mubr.f32.gmra.mrb[0].mxu0 0.0
  %v2454 = vpop.f32.mrb[0].mxu0
  %v2455 = vadd.f32 0.0, %v2454
  %v2456 = vpop.f32.mrb[0].mxu0
  %v2457 = vadd.f32 0.0, %v2456
  %2458 = vdwg.mxu0
  %v2459 = vadd.f32 %v2248, %v2384
  %v2460 = vadd.f32 %v2249, %v2386
  %v2461 = vadd.f32 %v2250, %v2455
  %v2462 = vadd.f32 %v2251, %v2457
  %v2463 = vmul.f32 %v2459, 0.5
  %v2464 = vmul.f32 %v2460, 0.5
  %v2465 = vmul.f32 %v2461, 0.5
  %v2466 = vtanh.pop %v2463
  %v2467 = vtanh.pop %v2464
  %v2468 = vtanh.pop %v2465
  %v2469 = vmul.f32 %v2466, 0.5
  %v2470 = vmul.f32 %v2467, 0.5
  %v2471 = vmul.f32 %v2468, 0.5
  %v2472 = vadd.f32 %v2469, 0.5
  %v2473 = vadd.f32 %v2470, 0.5
  %v2474 = vadd.f32 %v2471, 0.5
  %v2475 = vtanh.pop %v2462
  %v2476 = vmul.f32 %v2473, 0.0
  %v2477 = vmul.f32 %v2472, %v2475
  %v2478 = vadd.f32 %v2476, %v2477
  %v2479 = vtanh.pop %v2478
  %v2480 = vmul.f32 %v2474, %v2479
  %s2481 = scalar_lea.vmem [#allocation3], 32
  %v2482 = vld [vmem:[%s2481] sm:$0xff]
  %v2483 = vld [vmem:[%s2481 + $0x8] sm:$0xff]
  %v2484 = vld [vmem:[%s2481 + $0x10] sm:$0xff]
  %v2485 = vld [vmem:[%s2481 + $0x18] sm:$0xff]
  %2486 = vmatprep.subr.mxu0 %v2254
  %2487 = vmatpush1.msra.mxu0 %v2253
  %2488 = vmatprep.subr.mxu0 %v2258
  %2489 = vmatpush1.msra.mxu0 %v2257
  %2490 = vmatprep.subr.mxu0 %v2262
  %2491 = vmatpush1.msra.mxu0 %v2261
  %2492 = vmatprep.subr.mxu0 %v2266
  %2493 = vmatpush1.msra.mxu0 %v2265
  %2494 = vmatprep.subr.mxu0 %v2270
  %2495 = vmatpush1.msra.mxu0 %v2269
  %2496 = vmatprep.subr.mxu0 %v2274
  %2497 = vmatpush1.msra.mxu0 %v2273
  %2498 = vmatprep.subr.mxu0 %v2278
  %2499 = vmatpush1.msra.mxu0 %v2277
  %2500 = vmatprep.subr.mxu0 %v2282
  %2501 = vmatpush1.msra.mxu0 %v2281
  %2502 = vmatprep.subr.mxu0 %v2286
  %2503 = vmatpush1.msra.mxu0 %v2285
  %2504 = vmatprep.subr.mxu0 %v2290
  %2505 = vmatpush1.msra.mxu0 %v2289
  %2506 = vmatprep.subr.mxu0 %v2294
  %2507 = vmatpush1.msra.mxu0 %v2293
  %2508 = vmatprep.subr.mxu0 %v2298
  %2509 = vmatpush1.msra.mxu0 %v2297
  %2510 = vmatprep.subr.mxu0 %v2302
  %2511 = vmatpush1.msra.mxu0 %v2301
  %2512 = vmatprep.subr.mxu0 %v2306
  %2513 = vmatpush1.msra.mxu0 %v2305
  %2514 = vmatprep.subr.mxu0 %v2310
  %2515 = vmatpush1.msra.mxu0 %v2309
  %2516 = vmatprep.subr.mxu0 %v2314
  %2517 = vmatpush1.msra.mxu0 %v2313
  %2518 = vmatprep.subr.mxu0 0.0
  %2519 = vmatpush1.msra.mxu0 0.0
  %2520 = vmatprep.subr.mxu0 0.0
  %2521 = vmatpush1.msra.mxu0 0.0
  %2522 = vmatprep.subr.mxu0 0.0
  %2523 = vmatpush1.msra.mxu0 0.0
  %2524 = vmatprep.subr.mxu0 0.0
  %2525 = vmatpush1.msra.mxu0 0.0
  %2526 = vmatprep.subr.mxu0 0.0
  %2527 = vmatpush1.msra.mxu0 0.0
  %2528 = vmatprep.subr.mxu0 0.0
  %2529 = vmatpush1.msra.mxu0 0.0
  %2530 = vmatprep.subr.mxu0 0.0
  %2531 = vmatpush1.msra.mxu0 0.0
  %2532 = vmatprep.subr.mxu0 0.0
  %2533 = vmatpush1.msra.mxu0 0.0
  %2534 = vmatprep.subr.mxu0 0.0
  %2535 = vmatpush1.msra.mxu0 0.0
  %2536 = vmatprep.subr.mxu0 0.0
  %2537 = vmatpush1.msra.mxu0 0.0
  %2538 = vmatprep.subr.mxu0 0.0
  %2539 = vmatpush1.msra.mxu0 0.0
  %2540 = vmatprep.subr.mxu0 0.0
  %2541 = vmatpush1.msra.mxu0 0.0
  %2542 = vmatprep.subr.mxu0 0.0
  %2543 = vmatpush1.msra.mxu0 0.0
  %2544 = vmatprep.subr.mxu0 0.0
  %2545 = vmatpush1.msra.mxu0 0.0
  %2546 = vmatprep.subr.mxu0 0.0
  %2547 = vmatpush1.msra.mxu0 0.0
  %2548 = vmatprep.subr.mxu0 0.0
  %2549 = vmatpush1.msra.mxu0 0.0
  %2550 = vmatprep.mubr.f32.mxu0 0.0
  %2551 = vmatmul.mubr.f32.gmra.mrb[0].mxu0 %v2480
  %v2552 = vpop.f32.mrb[0].mxu0
  %v2553 = vadd.f32 0.0, %v2552
  %v2554 = vpop.f32.mrb[0].mxu0
  %v2555 = vadd.f32 0.0, %v2554
  %2556 = vdwg.mxu0
  %2557 = vmatprep.subr.mxu0 %v2256
  %2558 = vmatpush1.msra.mxu0 %v2255
  %2559 = vmatprep.subr.mxu0 %v2260
  %2560 = vmatpush1.msra.mxu0 %v2259
  %2561 = vmatprep.subr.mxu0 %v2264
  %2562 = vmatpush1.msra.mxu0 %v2263
  %2563 = vmatprep.subr.mxu0 %v2268
  %2564 = vmatpush1.msra.mxu0 %v2267
  %2565 = vmatprep.subr.mxu0 %v2272
  %2566 = vmatpush1.msra.mxu0 %v2271
  %2567 = vmatprep.subr.mxu0 %v2276
  %2568 = vmatpush1.msra.mxu0 %v2275
  %2569 = vmatprep.subr.mxu0 %v2280
  %2570 = vmatpush1.msra.mxu0 %v2279
  %2571 = vmatprep.subr.mxu0 %v2284
  %2572 = vmatpush1.msra.mxu0 %v2283
  %2573 = vmatprep.subr.mxu0 %v2288
  %2574 = vmatpush1.msra.mxu0 %v2287
  %2575 = vmatprep.subr.mxu0 %v2292
  %2576 = vmatpush1.msra.mxu0 %v2291
  %2577 = vmatprep.subr.mxu0 %v2296
  %2578 = vmatpush1.msra.mxu0 %v2295
  %2579 = vmatprep.subr.mxu0 %v2300
  %2580 = vmatpush1.msra.mxu0 %v2299
  %2581 = vmatprep.subr.mxu0 %v2304
  %2582 = vmatpush1.msra.mxu0 %v2303
  %2583 = vmatprep.subr.mxu0 %v2308
  %2584 = vmatpush1.msra.mxu0 %v2307
  %2585 = vmatprep.subr.mxu0 %v2312
  %2586 = vmatpush1.msra.mxu0 %v2311
  %2587 = vmatprep.subr.mxu0 %v2316
  %2588 = vmatpush1.msra.mxu0 %v2315
  %2589 = vmatprep.subr.mxu0 0.0
  %2590 = vmatpush1.msra.mxu0 0.0
  %2591 = vmatprep.subr.mxu0 0.0
  %2592 = vmatpush1.msra.mxu0 0.0
  %2593 = vmatprep.subr.mxu0 0.0
  %2594 = vmatpush1.msra.mxu0 0.0
  %2595 = vmatprep.subr.mxu0 0.0
  %2596 = vmatpush1.msra.mxu0 0.0
  %2597 = vmatprep.subr.mxu0 0.0
  %2598 = vmatpush1.msra.mxu0 0.0
  %2599 = vmatprep.subr.mxu0 0.0
  %2600 = vmatpush1.msra.mxu0 0.0
  %2601 = vmatprep.subr.mxu0 0.0
  %2602 = vmatpush1.msra.mxu0 0.0
  %2603 = vmatprep.subr.mxu0 0.0
  %2604 = vmatpush1.msra.mxu0 0.0
  %2605 = vmatprep.subr.mxu0 0.0
  %2606 = vmatpush1.msra.mxu0 0.0
  %2607 = vmatprep.subr.mxu0 0.0
  %2608 = vmatpush1.msra.mxu0 0.0
  %2609 = vmatprep.subr.mxu0 0.0
  %2610 = vmatpush1.msra.mxu0 0.0
  %2611 = vmatprep.subr.mxu0 0.0
  %2612 = vmatpush1.msra.mxu0 0.0
  %2613 = vmatprep.subr.mxu0 0.0
  %2614 = vmatpush1.msra.mxu0 0.0
  %2615 = vmatprep.subr.mxu0 0.0
  %2616 = vmatpush1.msra.mxu0 0.0
  %2617 = vmatprep.subr.mxu0 0.0
  %2618 = vmatpush1.msra.mxu0 0.0
  %2619 = vmatprep.subr.mxu0 0.0
  %2620 = vmatpush1.msra.mxu0 0.0
  %2621 = vmatprep.mubr.f32.mxu0 0.0
  %2622 = vmatmul.mubr.f32.gmra.mrb[0].mxu0 %v2480
  %v2623 = vpop.f32.mrb[0].mxu0
  %v2624 = vadd.f32 0.0, %v2623
  %v2625 = vpop.f32.mrb[0].mxu0
  %v2626 = vadd.f32 0.0, %v2625
  %2627 = vdwg.mxu0
  %v2628 = vadd.f32 %v2482, %v2553
  %v2629 = vadd.f32 %v2483, %v2555
  %v2630 = vadd.f32 %v2484, %v2624
  %v2631 = vadd.f32 %v2485, %v2626
  %v2632 = vmul.f32 %v2628, 0.5
  %v2633 = vmul.f32 %v2629, 0.5
  %v2634 = vmul.f32 %v2630, 0.5
  %v2635 = vtanh.pop %v2632
  %v2636 = vtanh.pop %v2633
  %v2637 = vtanh.pop %v2634
  %v2638 = vmul.f32 %v2635, 0.5
  %v2639 = vmul.f32 %v2636, 0.5
  %v2640 = vmul.f32 %v2637, 0.5
  %v2641 = vadd.f32 %v2638, 0.5
  %v2642 = vadd.f32 %v2639, 0.5
  %v2643 = vadd.f32 %v2640, 0.5
  %v2644 = vtanh.pop %v2631
  %v2645 = vmul.f32 %v2642, %v2478
  %v2646 = vmul.f32 %v2641, %v2644
  %v2647 = vadd.f32 %v2645, %v2646
  %v2648 = vtanh.pop %v2647
  %v2649 = vmul.f32 %v2643, %v2648
  %s2650 = scalar_lea.vmem [#allocation3], 64
  %v2651 = vld [vmem:[%s2650] sm:$0xff]
  %v2652 = vld [vmem:[%s2650 + $0x8] sm:$0xff]
  %v2653 = vld [vmem:[%s2650 + $0x10] sm:$0xff]
  %v2654 = vld [vmem:[%s2650 + $0x18] sm:$0xff]
  %2655 = vmatprep.subr.mxu0 %v2254
  %2656 = vmatpush1.msra.mxu0 %v2253
  %2657 = vmatprep.subr.mxu0 %v2258
  %2658 = vmatpush1.msra.mxu0 %v2257
  %2659 = vmatprep.subr.mxu0 %v2262
  %2660 = vmatpush1.msra.mxu0 %v2261
  %2661 = vmatprep.subr.mxu0 %v2266
  %2662 = vmatpush1.msra.mxu0 %v2265
  %2663 = vmatprep.subr.mxu0 %v2270
  %2664 = vmatpush1.msra.mxu0 %v2269
  %2665 = vmatprep.subr.mxu0 %v2274
  %2666 = vmatpush1.msra.mxu0 %v2273
  %2667 = vmatprep.subr.mxu0 %v2278
  %2668 = vmatpush1.msra.mxu0 %v2277
  %2669 = vmatprep.subr.mxu0 %v2282
  %2670 = vmatpush1.msra.mxu0 %v2281
  %2671 = vmatprep.subr.mxu0 %v2286
  %2672 = vmatpush1.msra.mxu0 %v2285
  %2673 = vmatprep.subr.mxu0 %v2290
  %2674 = vmatpush1.msra.mxu0 %v2289
  %2675 = vmatprep.subr.mxu0 %v2294
  %2676 = vmatpush1.msra.mxu0 %v2293
  %2677 = vmatprep.subr.mxu0 %v2298
  %2678 = vmatpush1.msra.mxu0 %v2297
  %2679 = vmatprep.subr.mxu0 %v2302
  %2680 = vmatpush1.msra.mxu0 %v2301
  %2681 = vmatprep.subr.mxu0 %v2306
  %2682 = vmatpush1.msra.mxu0 %v2305
  %2683 = vmatprep.subr.mxu0 %v2310
  %2684 = vmatpush1.msra.mxu0 %v2309
  %2685 = vmatprep.subr.mxu0 %v2314
  %2686 = vmatpush1.msra.mxu0 %v2313
  %2687 = vmatprep.subr.mxu0 0.0
  %2688 = vmatpush1.msra.mxu0 0.0
  %2689 = vmatprep.subr.mxu0 0.0
  %2690 = vmatpush1.msra.mxu0 0.0
  %2691 = vmatprep.subr.mxu0 0.0
  %2692 = vmatpush1.msra.mxu0 0.0
  %2693 = vmatprep.subr.mxu0 0.0
  %2694 = vmatpush1.msra.mxu0 0.0
  %2695 = vmatprep.subr.mxu0 0.0
  %2696 = vmatpush1.msra.mxu0 0.0
  %2697 = vmatprep.subr.mxu0 0.0
  %2698 = vmatpush1.msra.mxu0 0.0
  %2699 = vmatprep.subr.mxu0 0.0
  %2700 = vmatpush1.msra.mxu0 0.0
  %2701 = vmatprep.subr.mxu0 0.0
  %2702 = vmatpush1.msra.mxu0 0.0
  %2703 = vmatprep.subr.mxu0 0.0
  %2704 = vmatpush1.msra.mxu0 0.0
  %2705 = vmatprep.subr.mxu0 0.0
  %2706 = vmatpush1.msra.mxu0 0.0
  %2707 = vmatprep.subr.mxu0 0.0
  %2708 = vmatpush1.msra.mxu0 0.0
  %2709 = vmatprep.subr.mxu0 0.0
  %2710 = vmatpush1.msra.mxu0 0.0
  %2711 = vmatprep.subr.mxu0 0.0
  %2712 = vmatpush1.msra.mxu0 0.0
  %2713 = vmatprep.subr.mxu0 0.0
  %2714 = vmatpush1.msra.mxu0 0.0
  %2715 = vmatprep.subr.mxu0 0.0
  %2716 = vmatpush1.msra.mxu0 0.0
  %2717 = vmatprep.subr.mxu0 0.0
  %2718 = vmatpush1.msra.mxu0 0.0
  %2719 = vmatprep.mubr.f32.mxu0 0.0
  %2720 = vmatmul.mubr.f32.gmra.mrb[0].mxu0 %v2649
  %v2721 = vpop.f32.mrb[0].mxu0
  %v2722 = vadd.f32 0.0, %v2721
  %v2723 = vpop.f32.mrb[0].mxu0
  %v2724 = vadd.f32 0.0, %v2723
  %2725 = vdwg.mxu0
  %2726 = vmatprep.subr.mxu0 %v2256
  %2727 = vmatpush1.msra.mxu0 %v2255
  %2728 = vmatprep.subr.mxu0 %v2260
  %2729 = vmatpush1.msra.mxu0 %v2259
  %2730 = vmatprep.subr.mxu0 %v2264
  %2731 = vmatpush1.msra.mxu0 %v2263
  %2732 = vmatprep.subr.mxu0 %v2268
  %2733 = vmatpush1.msra.mxu0 %v2267
  %2734 = vmatprep.subr.mxu0 %v2272
  %2735 = vmatpush1.msra.mxu0 %v2271
  %2736 = vmatprep.subr.mxu0 %v2276
  %2737 = vmatpush1.msra.mxu0 %v2275
  %2738 = vmatprep.subr.mxu0 %v2280
  %2739 = vmatpush1.msra.mxu0 %v2279
  %2740 = vmatprep.subr.mxu0 %v2284
  %2741 = vmatpush1.msra.mxu0 %v2283
  %2742 = vmatprep.subr.mxu0 %v2288
  %2743 = vmatpush1.msra.mxu0 %v2287
  %2744 = vmatprep.subr.mxu0 %v2292
  %2745 = vmatpush1.msra.mxu0 %v2291
  %2746 = vmatprep.subr.mxu0 %v2296
  %2747 = vmatpush1.msra.mxu0 %v2295
  %2748 = vmatprep.subr.mxu0 %v2300
  %2749 = vmatpush1.msra.mxu0 %v2299
  %2750 = vmatprep.subr.mxu0 %v2304
  %2751 = vmatpush1.msra.mxu0 %v2303
  %2752 = vmatprep.subr.mxu0 %v2308
  %2753 = vmatpush1.msra.mxu0 %v2307
  %2754 = vmatprep.subr.mxu0 %v2312
  %2755 = vmatpush1.msra.mxu0 %v2311
  %2756 = vmatprep.subr.mxu0 %v2316
  %2757 = vmatpush1.msra.mxu0 %v2315
  %2758 = vmatprep.subr.mxu0 0.0
  %2759 = vmatpush1.msra.mxu0 0.0
  %2760 = vmatprep.subr.mxu0 0.0
  %2761 = vmatpush1.msra.mxu0 0.0
  %2762 = vmatprep.subr.mxu0 0.0
  %2763 = vmatpush1.msra.mxu0 0.0
  %2764 = vmatprep.subr.mxu0 0.0
  %2765 = vmatpush1.msra.mxu0 0.0
  %2766 = vmatprep.subr.mxu0 0.0
  %2767 = vmatpush1.msra.mxu0 0.0
  %2768 = vmatprep.subr.mxu0 0.0
  %2769 = vmatpush1.msra.mxu0 0.0
  %2770 = vmatprep.subr.mxu0 0.0
  %2771 = vmatpush1.msra.mxu0 0.0
  %2772 = vmatprep.subr.mxu0 0.0
  %2773 = vmatpush1.msra.mxu0 0.0
  %2774 = vmatprep.subr.mxu0 0.0
  %2775 = vmatpush1.msra.mxu0 0.0
  %2776 = vmatprep.subr.mxu0 0.0
  %2777 = vmatpush1.msra.mxu0 0.0
  %2778 = vmatprep.subr.mxu0 0.0
  %2779 = vmatpush1.msra.mxu0 0.0
  %2780 = vmatprep.subr.mxu0 0.0
  %2781 = vmatpush1.msra.mxu0 0.0
  %2782 = vmatprep.subr.mxu0 0.0
  %2783 = vmatpush1.msra.mxu0 0.0
  %2784 = vmatprep.subr.mxu0 0.0
  %2785 = vmatpush1.msra.mxu0 0.0
  %2786 = vmatprep.subr.mxu0 0.0
  %2787 = vmatpush1.msra.mxu0 0.0
  %2788 = vmatprep.subr.mxu0 0.0
  %2789 = vmatpush1.msra.mxu0 0.0
  %2790 = vmatprep.mubr.f32.mxu0 0.0
  %2791 = vmatmul.mubr.f32.gmra.mrb[0].mxu0 %v2649
  %v2792 = vpop.f32.mrb[0].mxu0
  %v2793 = vadd.f32 0.0, %v2792
  %v2794 = vpop.f32.mrb[0].mxu0
  %v2795 = vadd.f32 0.0, %v2794
  %2796 = vdwg.mxu0
  %v2797 = vadd.f32 %v2651, %v2722
  %v2798 = vadd.f32 %v2652, %v2724
  %v2799 = vadd.f32 %v2653, %v2793
  %v2800 = vadd.f32 %v2654, %v2795
  %v2801 = vmul.f32 %v2797, 0.5
  %v2802 = vmul.f32 %v2798, 0.5
  %v2803 = vmul.f32 %v2799, 0.5
  %v2804 = vtanh.pop %v2801
  %v2805 = vtanh.pop %v2802
  %v2806 = vtanh.pop %v2803
  %v2807 = vmul.f32 %v2804, 0.5
  %v2808 = vmul.f32 %v2805, 0.5
  %v2809 = vmul.f32 %v2806, 0.5
  %v2810 = vadd.f32 %v2807, 0.5
  %v2811 = vadd.f32 %v2808, 0.5
  %v2812 = vadd.f32 %v2809, 0.5
  %v2813 = vtanh.pop %v2800
  %v2814 = vmul.f32 %v2811, %v2647
  %v2815 = vmul.f32 %v2810, %v2813
  %v2816 = vadd.f32 %v2814, %v2815
  %v2817 = vtanh.pop %v2816
  %v2818 = vmul.f32 %v2812, %v2817
  %s2819 = scalar_lea.vmem [#allocation3], 96
  %v2820 = vld [vmem:[%s2819] sm:$0xff]
  %v2821 = vld [vmem:[%s2819 + $0x8] sm:$0xff]
  %v2822 = vld [vmem:[%s2819 + $0x10] sm:$0xff]
  %v2823 = vld [vmem:[%s2819 + $0x18] sm:$0xff]
  %2824 = vmatprep.subr.mxu0 %v2254
  %2825 = vmatpush1.msra.mxu0 %v2253
  %2826 = vmatprep.subr.mxu0 %v2258
  %2827 = vmatpush1.msra.mxu0 %v2257
  %2828 = vmatprep.subr.mxu0 %v2262
  %2829 = vmatpush1.msra.mxu0 %v2261
  %2830 = vmatprep.subr.mxu0 %v2266
  %2831 = vmatpush1.msra.mxu0 %v2265
  %2832 = vmatprep.subr.mxu0 %v2270
  %2833 = vmatpush1.msra.mxu0 %v2269
  %2834 = vmatprep.subr.mxu0 %v2274
  %2835 = vmatpush1.msra.mxu0 %v2273
  %2836 = vmatprep.subr.mxu0 %v2278
  %2837 = vmatpush1.msra.mxu0 %v2277
  %2838 = vmatprep.subr.mxu0 %v2282
  %2839 = vmatpush1.msra.mxu0 %v2281
  %2840 = vmatprep.subr.mxu0 %v2286
  %2841 = vmatpush1.msra.mxu0 %v2285
  %2842 = vmatprep.subr.mxu0 %v2290
  %2843 = vmatpush1.msra.mxu0 %v2289
  %2844 = vmatprep.subr.mxu0 %v2294
  %2845 = vmatpush1.msra.mxu0 %v2293
  %2846 = vmatprep.subr.mxu0 %v2298
  %2847 = vmatpush1.msra.mxu0 %v2297
  %2848 = vmatprep.subr.mxu0 %v2302
  %2849 = vmatpush1.msra.mxu0 %v2301
  %2850 = vmatprep.subr.mxu0 %v2306
  %2851 = vmatpush1.msra.mxu0 %v2305
  %2852 = vmatprep.subr.mxu0 %v2310
  %2853 = vmatpush1.msra.mxu0 %v2309
  %2854 = vmatprep.subr.mxu0 %v2314
  %2855 = vmatpush1.msra.mxu0 %v2313
  %2856 = vmatprep.subr.mxu0 0.0
  %2857 = vmatpush1.msra.mxu0 0.0
  %2858 = vmatprep.subr.mxu0 0.0
  %2859 = vmatpush1.msra.mxu0 0.0
  %2860 = vmatprep.subr.mxu0 0.0
  %2861 = vmatpush1.msra.mxu0 0.0
  %2862 = vmatprep.subr.mxu0 0.0
  %2863 = vmatpush1.msra.mxu0 0.0
  %2864 = vmatprep.subr.mxu0 0.0
  %2865 = vmatpush1.msra.mxu0 0.0
  %2866 = vmatprep.subr.mxu0 0.0
  %2867 = vmatpush1.msra.mxu0 0.0
  %2868 = vmatprep.subr.mxu0 0.0
  %2869 = vmatpush1.msra.mxu0 0.0
  %2870 = vmatprep.subr.mxu0 0.0
  %2871 = vmatpush1.msra.mxu0 0.0
  %2872 = vmatprep.subr.mxu0 0.0
  %2873 = vmatpush1.msra.mxu0 0.0
  %2874 = vmatprep.subr.mxu0 0.0
  %2875 = vmatpush1.msra.mxu0 0.0
  %2876 = vmatprep.subr.mxu0 0.0
  %2877 = vmatpush1.msra.mxu0 0.0
  %2878 = vmatprep.subr.mxu0 0.0
  %2879 = vmatpush1.msra.mxu0 0.0
  %2880 = vmatprep.subr.mxu0 0.0
  %2881 = vmatpush1.msra.mxu0 0.0
  %2882 = vmatprep.subr.mxu0 0.0
  %2883 = vmatpush1.msra.mxu0 0.0
  %2884 = vmatprep.subr.mxu0 0.0
  %2885 = vmatpush1.msra.mxu0 0.0
  %2886 = vmatprep.subr.mxu0 0.0
  %2887 = vmatpush1.msra.mxu0 0.0
  %2888 = vmatprep.mubr.f32.mxu0 0.0
  %2889 = vmatmul.mubr.f32.gmra.mrb[0].mxu0 %v2818
  %v2890 = vpop.f32.mrb[0].mxu0
  %v2891 = vadd.f32 0.0, %v2890
  %v2892 = vpop.f32.mrb[0].mxu0
  %v2893 = vadd.f32 0.0, %v2892
  %2894 = vdwg.mxu0
  %2895 = vmatprep.subr.mxu0 %v2256
  %2896 = vmatpush1.msra.mxu0 %v2255
  %2897 = vmatprep.subr.mxu0 %v2260
  %2898 = vmatpush1.msra.mxu0 %v2259
  %2899 = vmatprep.subr.mxu0 %v2264
  %2900 = vmatpush1.msra.mxu0 %v2263
  %2901 = vmatprep.subr.mxu0 %v2268
  %2902 = vmatpush1.msra.mxu0 %v2267
  %2903 = vmatprep.subr.mxu0 %v2272
  %2904 = vmatpush1.msra.mxu0 %v2271
  %2905 = vmatprep.subr.mxu0 %v2276
  %2906 = vmatpush1.msra.mxu0 %v2275
  %2907 = vmatprep.subr.mxu0 %v2280
  %2908 = vmatpush1.msra.mxu0 %v2279
  %2909 = vmatprep.subr.mxu0 %v2284
  %2910 = vmatpush1.msra.mxu0 %v2283
  %2911 = vmatprep.subr.mxu0 %v2288
  %2912 = vmatpush1.msra.mxu0 %v2287
  %2913 = vmatprep.subr.mxu0 %v2292
  %2914 = vmatpush1.msra.mxu0 %v2291
  %2915 = vmatprep.subr.mxu0 %v2296
  %2916 = vmatpush1.msra.mxu0 %v2295
  %2917 = vmatprep.subr.mxu0 %v2300
  %2918 = vmatpush1.msra.mxu0 %v2299
  %2919 = vmatprep.subr.mxu0 %v2304
  %2920 = vmatpush1.msra.mxu0 %v2303
  %2921 = vmatprep.subr.mxu0 %v2308
  %2922 = vmatpush1.msra.mxu0 %v2307
  %2923 = vmatprep.subr.mxu0 %v2312
  %2924 = vmatpush1.msra.mxu0 %v2311
  %2925 = vmatprep.subr.mxu0 %v2316
  %2926 = vmatpush1.msra.mxu0 %v2315
  %2927 = vmatprep.subr.mxu0 0.0
  %2928 = vmatpush1.msra.mxu0 0.0
  %2929 = vmatprep.subr.mxu0 0.0
  %2930 = vmatpush1.msra.mxu0 0.0
  %2931 = vmatprep.subr.mxu0 0.0
  %2932 = vmatpush1.msra.mxu0 0.0
  %2933 = vmatprep.subr.mxu0 0.0
  %2934 = vmatpush1.msra.mxu0 0.0
  %2935 = vmatprep.subr.mxu0 0.0
  %2936 = vmatpush1.msra.mxu0 0.0
  %2937 = vmatprep.subr.mxu0 0.0
  %2938 = vmatpush1.msra.mxu0 0.0
  %2939 = vmatprep.subr.mxu0 0.0
  %2940 = vmatpush1.msra.mxu0 0.0
  %2941 = vmatprep.subr.mxu0 0.0
  %2942 = vmatpush1.msra.mxu0 0.0
  %2943 = vmatprep.subr.mxu0 0.0
  %2944 = vmatpush1.msra.mxu0 0.0
  %2945 = vmatprep.subr.mxu0 0.0
  %2946 = vmatpush1.msra.mxu0 0.0
  %2947 = vmatprep.subr.mxu0 0.0
  %2948 = vmatpush1.msra.mxu0 0.0
  %2949 = vmatprep.subr.mxu0 0.0
  %2950 = vmatpush1.msra.mxu0 0.0
  %2951 = vmatprep.subr.mxu0 0.0
  %2952 = vmatpush1.msra.mxu0 0.0
  %2953 = vmatprep.subr.mxu0 0.0
  %2954 = vmatpush1.msra.mxu0 0.0
  %2955 = vmatprep.subr.mxu0 0.0
  %2956 = vmatpush1.msra.mxu0 0.0
  %2957 = vmatprep.subr.mxu0 0.0
  %2958 = vmatpush1.msra.mxu0 0.0
  %2959 = vmatprep.mubr.f32.mxu0 0.0
  %2960 = vmatmul.mubr.f32.gmra.mrb[0].mxu0 %v2818
  %v2961 = vpop.f32.mrb[0].mxu0
  %v2962 = vadd.f32 0.0, %v2961
  %v2963 = vpop.f32.mrb[0].mxu0
  %v2964 = vadd.f32 0.0, %v2963
  %2965 = vdwg.mxu0
  %v2966 = vadd.f32 %v2820, %v2891
  %v2967 = vadd.f32 %v2821, %v2893
  %v2968 = vadd.f32 %v2822, %v2962
  %v2969 = vadd.f32 %v2823, %v2964
  %v2970 = vmul.f32 %v2966, 0.5
  %v2971 = vmul.f32 %v2967, 0.5
  %v2972 = vmul.f32 %v2968, 0.5
  %v2973 = vtanh.pop %v2970
  %v2974 = vtanh.pop %v2971
  %v2975 = vtanh.pop %v2972
  %v2976 = vmul.f32 %v2973, 0.5
  %v2977 = vmul.f32 %v2974, 0.5
  %v2978 = vmul.f32 %v2975, 0.5
  %v2979 = vadd.f32 %v2976, 0.5
  %v2980 = vadd.f32 %v2977, 0.5
  %v2981 = vadd.f32 %v2978, 0.5
  %v2982 = vtanh.pop %v2969
  %v2983 = vmul.f32 %v2980, %v2816
  %v2984 = vmul.f32 %v2979, %v2982
  %v2985 = vadd.f32 %v2983, %v2984
  %v2986 = vtanh.pop %v2985
  %v2987 = vmul.f32 %v2981, %v2986
  %s2988 = scalar_lea.vmem [#allocation3], 128
  %v2989 = vld [vmem:[%s2988] sm:$0xff]
  %v2990 = vld [vmem:[%s2988 + $0x8] sm:$0xff]
  %v2991 = vld [vmem:[%s2988 + $0x10] sm:$0xff]
  %v2992 = vld [vmem:[%s2988 + $0x18] sm:$0xff]
  %2993 = vmatprep.subr.mxu0 %v2254
  %2994 = vmatpush1.msra.mxu0 %v2253
  %2995 = vmatprep.subr.mxu0 %v2258
  %2996 = vmatpush1.msra.mxu0 %v2257
  %2997 = vmatprep.subr.mxu0 %v2262
  %2998 = vmatpush1.msra.mxu0 %v2261
  %2999 = vmatprep.subr.mxu0 %v2266
  %3000 = vmatpush1.msra.mxu0 %v2265
  %3001 = vmatprep.subr.mxu0 %v2270
  %3002 = vmatpush1.msra.mxu0 %v2269
  %3003 = vmatprep.subr.mxu0 %v2274
  %3004 = vmatpush1.msra.mxu0 %v2273
  %3005 = vmatprep.subr.mxu0 %v2278
  %3006 = vmatpush1.msra.mxu0 %v2277
  %3007 = vmatprep.subr.mxu0 %v2282
  %3008 = vmatpush1.msra.mxu0 %v2281
  %3009 = vmatprep.subr.mxu0 %v2286
  %3010 = vmatpush1.msra.mxu0 %v2285
  %3011 = vmatprep.subr.mxu0 %v2290
  %3012 = vmatpush1.msra.mxu0 %v2289
  %3013 = vmatprep.subr.mxu0 %v2294
  %3014 = vmatpush1.msra.mxu0 %v2293
  %3015 = vmatprep.subr.mxu0 %v2298
  %3016 = vmatpush1.msra.mxu0 %v2297
  %3017 = vmatprep.subr.mxu0 %v2302
  %3018 = vmatpush1.msra.mxu0 %v2301
  %3019 = vmatprep.subr.mxu0 %v2306
  %3020 = vmatpush1.msra.mxu0 %v2305
  %3021 = vmatprep.subr.mxu0 %v2310
  %3022 = vmatpush1.msra.mxu0 %v2309
  %3023 = vmatprep.subr.mxu0 %v2314
  %3024 = vmatpush1.msra.mxu0 %v2313
  %3025 = vmatprep.subr.mxu0 0.0
  %3026 = vmatpush1.msra.mxu0 0.0
  %3027 = vmatprep.subr.mxu0 0.0
  %3028 = vmatpush1.msra.mxu0 0.0
  %3029 = vmatprep.subr.mxu0 0.0
  %3030 = vmatpush1.msra.mxu0 0.0
  %3031 = vmatprep.subr.mxu0 0.0
  %3032 = vmatpush1.msra.mxu0 0.0
  %3033 = vmatprep.subr.mxu0 0.0
  %3034 = vmatpush1.msra.mxu0 0.0
  %3035 = vmatprep.subr.mxu0 0.0
  %3036 = vmatpush1.msra.mxu0 0.0
  %3037 = vmatprep.subr.mxu0 0.0
  %3038 = vmatpush1.msra.mxu0 0.0
  %3039 = vmatprep.subr.mxu0 0.0
  %3040 = vmatpush1.msra.mxu0 0.0
  %3041 = vmatprep.subr.mxu0 0.0
  %3042 = vmatpush1.msra.mxu0 0.0
  %3043 = vmatprep.subr.mxu0 0.0
  %3044 = vmatpush1.msra.mxu0 0.0
  %3045 = vmatprep.subr.mxu0 0.0
  %3046 = vmatpush1.msra.mxu0 0.0
  %3047 = vmatprep.subr.mxu0 0.0
  %3048 = vmatpush1.msra.mxu0 0.0
  %3049 = vmatprep.subr.mxu0 0.0
  %3050 = vmatpush1.msra.mxu0 0.0
  %3051 = vmatprep.subr.mxu0 0.0
  %3052 = vmatpush1.msra.mxu0 0.0
  %3053 = vmatprep.subr.mxu0 0.0
  %3054 = vmatpush1.msra.mxu0 0.0
  %3055 = vmatprep.subr.mxu0 0.0
  %3056 = vmatpush1.msra.mxu0 0.0
  %3057 = vmatprep.mubr.f32.mxu0 0.0
  %3058 = vmatmul.mubr.f32.gmra.mrb[0].mxu0 %v2987
  %v3059 = vpop.f32.mrb[0].mxu0
  %v3060 = vadd.f32 0.0, %v3059
  %v3061 = vpop.f32.mrb[0].mxu0
  %v3062 = vadd.f32 0.0, %v3061
  %3063 = vdwg.mxu0
  %3064 = vmatprep.subr.mxu0 %v2256
  %3065 = vmatpush1.msra.mxu0 %v2255
  %3066 = vmatprep.subr.mxu0 %v2260
  %3067 = vmatpush1.msra.mxu0 %v2259
  %3068 = vmatprep.subr.mxu0 %v2264
  %3069 = vmatpush1.msra.mxu0 %v2263
  %3070 = vmatprep.subr.mxu0 %v2268
  %3071 = vmatpush1.msra.mxu0 %v2267
  %3072 = vmatprep.subr.mxu0 %v2272
  %3073 = vmatpush1.msra.mxu0 %v2271
  %3074 = vmatprep.subr.mxu0 %v2276
  %3075 = vmatpush1.msra.mxu0 %v2275
  %3076 = vmatprep.subr.mxu0 %v2280
  %3077 = vmatpush1.msra.mxu0 %v2279
  %3078 = vmatprep.subr.mxu0 %v2284
  %3079 = vmatpush1.msra.mxu0 %v2283
  %3080 = vmatprep.subr.mxu0 %v2288
  %3081 = vmatpush1.msra.mxu0 %v2287
  %3082 = vmatprep.subr.mxu0 %v2292
  %3083 = vmatpush1.msra.mxu0 %v2291
  %3084 = vmatprep.subr.mxu0 %v2296
  %3085 = vmatpush1.msra.mxu0 %v2295
  %3086 = vmatprep.subr.mxu0 %v2300
  %3087 = vmatpush1.msra.mxu0 %v2299
  %3088 = vmatprep.subr.mxu0 %v2304
  %3089 = vmatpush1.msra.mxu0 %v2303
  %3090 = vmatprep.subr.mxu0 %v2308
  %3091 = vmatpush1.msra.mxu0 %v2307
  %3092 = vmatprep.subr.mxu0 %v2312
  %3093 = vmatpush1.msra.mxu0 %v2311
  %3094 = vmatprep.subr.mxu0 %v2316
  %3095 = vmatpush1.msra.mxu0 %v2315
  %3096 = vmatprep.subr.mxu0 0.0
  %3097 = vmatpush1.msra.mxu0 0.0
  %3098 = vmatprep.subr.mxu0 0.0
  %3099 = vmatpush1.msra.mxu0 0.0
  %3100 = vmatprep.subr.mxu0 0.0
  %3101 = vmatpush1.msra.mxu0 0.0
  %3102 = vmatprep.subr.mxu0 0.0
  %3103 = vmatpush1.msra.mxu0 0.0
  %3104 = vmatprep.subr.mxu0 0.0
  %3105 = vmatpush1.msra.mxu0 0.0
  %3106 = vmatprep.subr.mxu0 0.0
  %3107 = vmatpush1.msra.mxu0 0.0
  %3108 = vmatprep.subr.mxu0 0.0
  %3109 = vmatpush1.msra.mxu0 0.0
  %3110 = vmatprep.subr.mxu0 0.0
  %3111 = vmatpush1.msra.mxu0 0.0
  %3112 = vmatprep.subr.mxu0 0.0
  %3113 = vmatpush1.msra.mxu0 0.0
  %3114 = vmatprep.subr.mxu0 0.0
  %3115 = vmatpush1.msra.mxu0 0.0
  %3116 = vmatprep.subr.mxu0 0.0
  %3117 = vmatpush1.msra.mxu0 0.0
  %3118 = vmatprep.subr.mxu0 0.0
  %3119 = vmatpush1.msra.mxu0 0.0
  %3120 = vmatprep.subr.mxu0 0.0
  %3121 = vmatpush1.msra.mxu0 0.0
  %3122 = vmatprep.subr.mxu0 0.0
  %3123 = vmatpush1.msra.mxu0 0.0
  %3124 = vmatprep.subr.mxu0 0.0
  %3125 = vmatpush1.msra.mxu0 0.0
  %3126 = vmatprep.subr.mxu0 0.0
  %3127 = vmatpush1.msra.mxu0 0.0
  %3128 = vmatprep.mubr.f32.mxu0 0.0
  %3129 = vmatmul.mubr.f32.gmra.mrb[0].mxu0 %v2987
  %v3130 = vpop.f32.mrb[0].mxu0
  %v3131 = vadd.f32 0.0, %v3130
  %v3132 = vpop.f32.mrb[0].mxu0
  %v3133 = vadd.f32 0.0, %v3132
  %3134 = vdwg.mxu0
  %v3135 = vadd.f32 %v2989, %v3060
  %v3136 = vadd.f32 %v2990, %v3062
  %v3137 = vadd.f32 %v2991, %v3131
  %v3138 = vadd.f32 %v2992, %v3133
  %v3139 = vmul.f32 %v3135, 0.5
  %v3140 = vmul.f32 %v3136, 0.5
  %v3141 = vmul.f32 %v3137, 0.5
  %v3142 = vtanh.pop %v3139
  %v3143 = vtanh.pop %v3140
  %v3144 = vtanh.pop %v3141
  %v3145 = vmul.f32 %v3142, 0.5
  %v3146 = vmul.f32 %v3143, 0.5
  %v3147 = vmul.f32 %v3144, 0.5
  %v3148 = vadd.f32 %v3145, 0.5
  %v3149 = vadd.f32 %v3146, 0.5
  %v3150 = vadd.f32 %v3147, 0.5
  %v3151 = vtanh.pop %v3138
  %v3152 = vmul.f32 %v3149, %v2985
  %v3153 = vmul.f32 %v3148, %v3151
  %v3154 = vadd.f32 %v3152, %v3153
  %v3155 = vtanh.pop %v3154
  %v3156 = vmul.f32 %v3150, %v3155
  %s3157 = scalar_lea.vmem [#allocation3], 160
  %v3158 = vld [vmem:[%s3157] sm:$0xff]
  %v3159 = vld [vmem:[%s3157 + $0x8] sm:$0xff]
  %v3160 = vld [vmem:[%s3157 + $0x10] sm:$0xff]
  %v3161 = vld [vmem:[%s3157 + $0x18] sm:$0xff]
  %3162 = vmatprep.subr.mxu0 %v2254
  %3163 = vmatpush1.msra.mxu0 %v2253
  %3164 = vmatprep.subr.mxu0 %v2258
  %3165 = vmatpush1.msra.mxu0 %v2257
  %3166 = vmatprep.subr.mxu0 %v2262
  %3167 = vmatpush1.msra.mxu0 %v2261
  %3168 = vmatprep.subr.mxu0 %v2266
  %3169 = vmatpush1.msra.mxu0 %v2265
  %3170 = vmatprep.subr.mxu0 %v2270
  %3171 = vmatpush1.msra.mxu0 %v2269
  %3172 = vmatprep.subr.mxu0 %v2274
  %3173 = vmatpush1.msra.mxu0 %v2273
  %3174 = vmatprep.subr.mxu0 %v2278
  %3175 = vmatpush1.msra.mxu0 %v2277
  %3176 = vmatprep.subr.mxu0 %v2282
  %3177 = vmatpush1.msra.mxu0 %v2281
  %3178 = vmatprep.subr.mxu0 %v2286
  %3179 = vmatpush1.msra.mxu0 %v2285
  %3180 = vmatprep.subr.mxu0 %v2290
  %3181 = vmatpush1.msra.mxu0 %v2289
  %3182 = vmatprep.subr.mxu0 %v2294
  %3183 = vmatpush1.msra.mxu0 %v2293
  %3184 = vmatprep.subr.mxu0 %v2298
  %3185 = vmatpush1.msra.mxu0 %v2297
  %3186 = vmatprep.subr.mxu0 %v2302
  %3187 = vmatpush1.msra.mxu0 %v2301
  %3188 = vmatprep.subr.mxu0 %v2306
  %3189 = vmatpush1.msra.mxu0 %v2305
  %3190 = vmatprep.subr.mxu0 %v2310
  %3191 = vmatpush1.msra.mxu0 %v2309
  %3192 = vmatprep.subr.mxu0 %v2314
  %3193 = vmatpush1.msra.mxu0 %v2313
  %3194 = vmatprep.subr.mxu0 0.0
  %3195 = vmatpush1.msra.mxu0 0.0
  %3196 = vmatprep.subr.mxu0 0.0
  %3197 = vmatpush1.msra.mxu0 0.0
  %3198 = vmatprep.subr.mxu0 0.0
  %3199 = vmatpush1.msra.mxu0 0.0
  %3200 = vmatprep.subr.mxu0 0.0
  %3201 = vmatpush1.msra.mxu0 0.0
  %3202 = vmatprep.subr.mxu0 0.0
  %3203 = vmatpush1.msra.mxu0 0.0
  %3204 = vmatprep.subr.mxu0 0.0
  %3205 = vmatpush1.msra.mxu0 0.0
  %3206 = vmatprep.subr.mxu0 0.0
  %3207 = vmatpush1.msra.mxu0 0.0
  %3208 = vmatprep.subr.mxu0 0.0
  %3209 = vmatpush1.msra.mxu0 0.0
  %3210 = vmatprep.subr.mxu0 0.0
  %3211 = vmatpush1.msra.mxu0 0.0
  %3212 = vmatprep.subr.mxu0 0.0
  %3213 = vmatpush1.msra.mxu0 0.0
  %3214 = vmatprep.subr.mxu0 0.0
  %3215 = vmatpush1.msra.mxu0 0.0
  %3216 = vmatprep.subr.mxu0 0.0
  %3217 = vmatpush1.msra.mxu0 0.0
  %3218 = vmatprep.subr.mxu0 0.0
  %3219 = vmatpush1.msra.mxu0 0.0
  %3220 = vmatprep.subr.mxu0 0.0
  %3221 = vmatpush1.msra.mxu0 0.0
  %3222 = vmatprep.subr.mxu0 0.0
  %3223 = vmatpush1.msra.mxu0 0.0
  %3224 = vmatprep.subr.mxu0 0.0
  %3225 = vmatpush1.msra.mxu0 0.0
  %3226 = vmatprep.mubr.f32.mxu0 0.0
  %3227 = vmatmul.mubr.f32.gmra.mrb[0].mxu0 %v3156
  %v3228 = vpop.f32.mrb[0].mxu0
  %v3229 = vadd.f32 0.0, %v3228
  %v3230 = vpop.f32.mrb[0].mxu0
  %v3231 = vadd.f32 0.0, %v3230
  %3232 = vdwg.mxu0
  %3233 = vmatprep.subr.mxu0 %v2256
  %3234 = vmatpush1.msra.mxu0 %v2255
  %3235 = vmatprep.subr.mxu0 %v2260
  %3236 = vmatpush1.msra.mxu0 %v2259
  %3237 = vmatprep.subr.mxu0 %v2264
  %3238 = vmatpush1.msra.mxu0 %v2263
  %3239 = vmatprep.subr.mxu0 %v2268
  %3240 = vmatpush1.msra.mxu0 %v2267
  %3241 = vmatprep.subr.mxu0 %v2272
  %3242 = vmatpush1.msra.mxu0 %v2271
  %3243 = vmatprep.subr.mxu0 %v2276
  %3244 = vmatpush1.msra.mxu0 %v2275
  %3245 = vmatprep.subr.mxu0 %v2280
  %3246 = vmatpush1.msra.mxu0 %v2279
  %3247 = vmatprep.subr.mxu0 %v2284
  %3248 = vmatpush1.msra.mxu0 %v2283
  %3249 = vmatprep.subr.mxu0 %v2288
  %3250 = vmatpush1.msra.mxu0 %v2287
  %3251 = vmatprep.subr.mxu0 %v2292
  %3252 = vmatpush1.msra.mxu0 %v2291
  %3253 = vmatprep.subr.mxu0 %v2296
  %3254 = vmatpush1.msra.mxu0 %v2295
  %3255 = vmatprep.subr.mxu0 %v2300
  %3256 = vmatpush1.msra.mxu0 %v2299
  %3257 = vmatprep.subr.mxu0 %v2304
  %3258 = vmatpush1.msra.mxu0 %v2303
  %3259 = vmatprep.subr.mxu0 %v2308
  %3260 = vmatpush1.msra.mxu0 %v2307
  %3261 = vmatprep.subr.mxu0 %v2312
  %3262 = vmatpush1.msra.mxu0 %v2311
  %3263 = vmatprep.subr.mxu0 %v2316
  %3264 = vmatpush1.msra.mxu0 %v2315
  %3265 = vmatprep.subr.mxu0 0.0
  %3266 = vmatpush1.msra.mxu0 0.0
  %3267 = vmatprep.subr.mxu0 0.0
  %3268 = vmatpush1.msra.mxu0 0.0
  %3269 = vmatprep.subr.mxu0 0.0
  %3270 = vmatpush1.msra.mxu0 0.0
  %3271 = vmatprep.subr.mxu0 0.0
  %3272 = vmatpush1.msra.mxu0 0.0
  %3273 = vmatprep.subr.mxu0 0.0
  %3274 = vmatpush1.msra.mxu0 0.0
  %3275 = vmatprep.subr.mxu0 0.0
  %3276 = vmatpush1.msra.mxu0 0.0
  %3277 = vmatprep.subr.mxu0 0.0
  %3278 = vmatpush1.msra.mxu0 0.0
  %3279 = vmatprep.subr.mxu0 0.0
  %3280 = vmatpush1.msra.mxu0 0.0
  %3281 = vmatprep.subr.mxu0 0.0
  %3282 = vmatpush1.msra.mxu0 0.0
  %3283 = vmatprep.subr.mxu0 0.0
  %3284 = vmatpush1.msra.mxu0 0.0
  %3285 = vmatprep.subr.mxu0 0.0
  %3286 = vmatpush1.msra.mxu0 0.0
  %3287 = vmatprep.subr.mxu0 0.0
  %3288 = vmatpush1.msra.mxu0 0.0
  %3289 = vmatprep.subr.mxu0 0.0
  %3290 = vmatpush1.msra.mxu0 0.0
  %3291 = vmatprep.subr.mxu0 0.0
  %3292 = vmatpush1.msra.mxu0 0.0
  %3293 = vmatprep.subr.mxu0 0.0
  %3294 = vmatpush1.msra.mxu0 0.0
  %3295 = vmatprep.subr.mxu0 0.0
  %3296 = vmatpush1.msra.mxu0 0.0
  %3297 = vmatprep.mubr.f32.mxu0 0.0
  %3298 = vmatmul.mubr.f32.gmra.mrb[0].mxu0 %v3156
  %v3299 = vpop.f32.mrb[0].mxu0
  %v3300 = vadd.f32 0.0, %v3299
  %v3301 = vpop.f32.mrb[0].mxu0
  %v3302 = vadd.f32 0.0, %v3301
  %3303 = vdwg.mxu0
  %v3304 = vadd.f32 %v3158, %v3229
  %v3305 = vadd.f32 %v3159, %v3231
  %v3306 = vadd.f32 %v3160, %v3300
  %v3307 = vadd.f32 %v3161, %v3302
  %v3308 = vmul.f32 %v3304, 0.5
  %v3309 = vmul.f32 %v3305, 0.5
  %v3310 = vmul.f32 %v3306, 0.5
  %v3311 = vtanh.pop %v3308
  %v3312 = vtanh.pop %v3309
  %v3313 = vtanh.pop %v3310
  %v3314 = vmul.f32 %v3311, 0.5
  %v3315 = vmul.f32 %v3312, 0.5
  %v3316 = vmul.f32 %v3313, 0.5
  %v3317 = vadd.f32 %v3314, 0.5
  %v3318 = vadd.f32 %v3315, 0.5
  %v3319 = vadd.f32 %v3316, 0.5
  %v3320 = vtanh.pop %v3307
  %v3321 = vmul.f32 %v3318, %v3154
  %v3322 = vmul.f32 %v3317, %v3320
  %v3323 = vadd.f32 %v3321, %v3322
  %v3324 = vtanh.pop %v3323
  %v3325 = vmul.f32 %v3319, %v3324
  %s3326 = scalar_lea.vmem [#allocation3], 192
  %v3327 = vld [vmem:[%s3326] sm:$0xff]
  %v3328 = vld [vmem:[%s3326 + $0x8] sm:$0xff]
  %v3329 = vld [vmem:[%s3326 + $0x10] sm:$0xff]
  %v3330 = vld [vmem:[%s3326 + $0x18] sm:$0xff]
  %3331 = vmatprep.subr.mxu0 %v2254
  %3332 = vmatpush1.msra.mxu0 %v2253
  %3333 = vmatprep.subr.mxu0 %v2258
  %3334 = vmatpush1.msra.mxu0 %v2257
  %3335 = vmatprep.subr.mxu0 %v2262
  %3336 = vmatpush1.msra.mxu0 %v2261
  %3337 = vmatprep.subr.mxu0 %v2266
  %3338 = vmatpush1.msra.mxu0 %v2265
  %3339 = vmatprep.subr.mxu0 %v2270
  %3340 = vmatpush1.msra.mxu0 %v2269
  %3341 = vmatprep.subr.mxu0 %v2274
  %3342 = vmatpush1.msra.mxu0 %v2273
  %3343 = vmatprep.subr.mxu0 %v2278
  %3344 = vmatpush1.msra.mxu0 %v2277
  %3345 = vmatprep.subr.mxu0 %v2282
  %3346 = vmatpush1.msra.mxu0 %v2281
  %3347 = vmatprep.subr.mxu0 %v2286
  %3348 = vmatpush1.msra.mxu0 %v2285
  %3349 = vmatprep.subr.mxu0 %v2290
  %3350 = vmatpush1.msra.mxu0 %v2289
  %3351 = vmatprep.subr.mxu0 %v2294
  %3352 = vmatpush1.msra.mxu0 %v2293
  %3353 = vmatprep.subr.mxu0 %v2298
  %3354 = vmatpush1.msra.mxu0 %v2297
  %3355 = vmatprep.subr.mxu0 %v2302
  %3356 = vmatpush1.msra.mxu0 %v2301
  %3357 = vmatprep.subr.mxu0 %v2306
  %3358 = vmatpush1.msra.mxu0 %v2305
  %3359 = vmatprep.subr.mxu0 %v2310
  %3360 = vmatpush1.msra.mxu0 %v2309
  %3361 = vmatprep.subr.mxu0 %v2314
  %3362 = vmatpush1.msra.mxu0 %v2313
  %3363 = vmatprep.subr.mxu0 0.0
  %3364 = vmatpush1.msra.mxu0 0.0
  %3365 = vmatprep.subr.mxu0 0.0
  %3366 = vmatpush1.msra.mxu0 0.0
  %3367 = vmatprep.subr.mxu0 0.0
  %3368 = vmatpush1.msra.mxu0 0.0
  %3369 = vmatprep.subr.mxu0 0.0
  %3370 = vmatpush1.msra.mxu0 0.0
  %3371 = vmatprep.subr.mxu0 0.0
  %3372 = vmatpush1.msra.mxu0 0.0
  %3373 = vmatprep.subr.mxu0 0.0
  %3374 = vmatpush1.msra.mxu0 0.0
  %3375 = vmatprep.subr.mxu0 0.0
  %3376 = vmatpush1.msra.mxu0 0.0
  %3377 = vmatprep.subr.mxu0 0.0
  %3378 = vmatpush1.msra.mxu0 0.0
  %3379 = vmatprep.subr.mxu0 0.0
  %3380 = vmatpush1.msra.mxu0 0.0
  %3381 = vmatprep.subr.mxu0 0.0
  %3382 = vmatpush1.msra.mxu0 0.0
  %3383 = vmatprep.subr.mxu0 0.0
  %3384 = vmatpush1.msra.mxu0 0.0
  %3385 = vmatprep.subr.mxu0 0.0
  %3386 = vmatpush1.msra.mxu0 0.0
  %3387 = vmatprep.subr.mxu0 0.0
  %3388 = vmatpush1.msra.mxu0 0.0
  %3389 = vmatprep.subr.mxu0 0.0
  %3390 = vmatpush1.msra.mxu0 0.0
  %3391 = vmatprep.subr.mxu0 0.0
  %3392 = vmatpush1.msra.mxu0 0.0
  %3393 = vmatprep.subr.mxu0 0.0
  %3394 = vmatpush1.msra.mxu0 0.0
  %3395 = vmatprep.mubr.f32.mxu0 0.0
  %3396 = vmatmul.mubr.f32.gmra.mrb[0].mxu0 %v3325
  %v3397 = vpop.f32.mrb[0].mxu0
  %v3398 = vadd.f32 0.0, %v3397
  %v3399 = vpop.f32.mrb[0].mxu0
  %v3400 = vadd.f32 0.0, %v3399
  %3401 = vdwg.mxu0
  %3402 = vmatprep.subr.mxu0 %v2256
  %3403 = vmatpush1.msra.mxu0 %v2255
  %3404 = vmatprep.subr.mxu0 %v2260
  %3405 = vmatpush1.msra.mxu0 %v2259
  %3406 = vmatprep.subr.mxu0 %v2264
  %3407 = vmatpush1.msra.mxu0 %v2263
  %3408 = vmatprep.subr.mxu0 %v2268
  %3409 = vmatpush1.msra.mxu0 %v2267
  %3410 = vmatprep.subr.mxu0 %v2272
  %3411 = vmatpush1.msra.mxu0 %v2271
  %3412 = vmatprep.subr.mxu0 %v2276
  %3413 = vmatpush1.msra.mxu0 %v2275
  %3414 = vmatprep.subr.mxu0 %v2280
  %3415 = vmatpush1.msra.mxu0 %v2279
  %3416 = vmatprep.subr.mxu0 %v2284
  %3417 = vmatpush1.msra.mxu0 %v2283
  %3418 = vmatprep.subr.mxu0 %v2288
  %3419 = vmatpush1.msra.mxu0 %v2287
  %3420 = vmatprep.subr.mxu0 %v2292
  %3421 = vmatpush1.msra.mxu0 %v2291
  %3422 = vmatprep.subr.mxu0 %v2296
  %3423 = vmatpush1.msra.mxu0 %v2295
  %3424 = vmatprep.subr.mxu0 %v2300
  %3425 = vmatpush1.msra.mxu0 %v2299
  %3426 = vmatprep.subr.mxu0 %v2304
  %3427 = vmatpush1.msra.mxu0 %v2303
  %3428 = vmatprep.subr.mxu0 %v2308
  %3429 = vmatpush1.msra.mxu0 %v2307
  %3430 = vmatprep.subr.mxu0 %v2312
  %3431 = vmatpush1.msra.mxu0 %v2311
  %3432 = vmatprep.subr.mxu0 %v2316
  %3433 = vmatpush1.msra.mxu0 %v2315
  %3434 = vmatprep.subr.mxu0 0.0
  %3435 = vmatpush1.msra.mxu0 0.0
  %3436 = vmatprep.subr.mxu0 0.0
  %3437 = vmatpush1.msra.mxu0 0.0
  %3438 = vmatprep.subr.mxu0 0.0
  %3439 = vmatpush1.msra.mxu0 0.0
  %3440 = vmatprep.subr.mxu0 0.0
  %3441 = vmatpush1.msra.mxu0 0.0
  %3442 = vmatprep.subr.mxu0 0.0
  %3443 = vmatpush1.msra.mxu0 0.0
  %3444 = vmatprep.subr.mxu0 0.0
  %3445 = vmatpush1.msra.mxu0 0.0
  %3446 = vmatprep.subr.mxu0 0.0
  %3447 = vmatpush1.msra.mxu0 0.0
  %3448 = vmatprep.subr.mxu0 0.0
  %3449 = vmatpush1.msra.mxu0 0.0
  %3450 = vmatprep.subr.mxu0 0.0
  %3451 = vmatpush1.msra.mxu0 0.0
  %3452 = vmatprep.subr.mxu0 0.0
  %3453 = vmatpush1.msra.mxu0 0.0
  %3454 = vmatprep.subr.mxu0 0.0
  %3455 = vmatpush1.msra.mxu0 0.0
  %3456 = vmatprep.subr.mxu0 0.0
  %3457 = vmatpush1.msra.mxu0 0.0
  %3458 = vmatprep.subr.mxu0 0.0
  %3459 = vmatpush1.msra.mxu0 0.0
  %3460 = vmatprep.subr.mxu0 0.0
  %3461 = vmatpush1.msra.mxu0 0.0
  %3462 = vmatprep.subr.mxu0 0.0
  %3463 = vmatpush1.msra.mxu0 0.0
  %3464 = vmatprep.subr.mxu0 0.0
  %3465 = vmatpush1.msra.mxu0 0.0
  %3466 = vmatprep.mubr.f32.mxu0 0.0
  %3467 = vmatmul.mubr.f32.gmra.mrb[0].mxu0 %v3325
  %v3468 = vpop.f32.mrb[0].mxu0
  %v3469 = vadd.f32 0.0, %v3468
  %v3470 = vpop.f32.mrb[0].mxu0
  %v3471 = vadd.f32 0.0, %v3470
  %3472 = vdwg.mxu0
  %v3473 = vadd.f32 %v3327, %v3398
  %v3474 = vadd.f32 %v3328, %v3400
  %v3475 = vadd.f32 %v3329, %v3469
  %v3476 = vadd.f32 %v3330, %v3471
  %v3477 = vmul.f32 %v3473, 0.5
  %v3478 = vmul.f32 %v3474, 0.5
  %v3479 = vmul.f32 %v3475, 0.5
  %v3480 = vtanh.pop %v3477
  %v3481 = vtanh.pop %v3478
  %v3482 = vtanh.pop %v3479
  %v3483 = vmul.f32 %v3480, 0.5
  %v3484 = vmul.f32 %v3481, 0.5
  %v3485 = vmul.f32 %v3482, 0.5
  %v3486 = vadd.f32 %v3483, 0.5
  %v3487 = vadd.f32 %v3484, 0.5
  %v3488 = vadd.f32 %v3485, 0.5
  %v3489 = vtanh.pop %v3476
  %v3490 = vmul.f32 %v3487, %v3323
  %v3491 = vmul.f32 %v3486, %v3489
  %v3492 = vadd.f32 %v3490, %v3491
  %v3493 = vtanh.pop %v3492
  %v3494 = vmul.f32 %v3488, %v3493
  %s3495 = scalar_lea.vmem [#allocation3], 224
  %v3496 = vld [vmem:[%s3495] sm:$0xff]
  %v3497 = vld [vmem:[%s3495 + $0x8] sm:$0xff]
  %v3498 = vld [vmem:[%s3495 + $0x10] sm:$0xff]
  %v3499 = vld [vmem:[%s3495 + $0x18] sm:$0xff]
  %3500 = vmatprep.subr.mxu0 %v2254
  %3501 = vmatpush1.msra.mxu0 %v2253
  %3502 = vmatprep.subr.mxu0 %v2258
  %3503 = vmatpush1.msra.mxu0 %v2257
  %3504 = vmatprep.subr.mxu0 %v2262
  %3505 = vmatpush1.msra.mxu0 %v2261
  %3506 = vmatprep.subr.mxu0 %v2266
  %3507 = vmatpush1.msra.mxu0 %v2265
  %3508 = vmatprep.subr.mxu0 %v2270
  %3509 = vmatpush1.msra.mxu0 %v2269
  %3510 = vmatprep.subr.mxu0 %v2274
  %3511 = vmatpush1.msra.mxu0 %v2273
  %3512 = vmatprep.subr.mxu0 %v2278
  %3513 = vmatpush1.msra.mxu0 %v2277
  %3514 = vmatprep.subr.mxu0 %v2282
  %3515 = vmatpush1.msra.mxu0 %v2281
  %3516 = vmatprep.subr.mxu0 %v2286
  %3517 = vmatpush1.msra.mxu0 %v2285
  %3518 = vmatprep.subr.mxu0 %v2290
  %3519 = vmatpush1.msra.mxu0 %v2289
  %3520 = vmatprep.subr.mxu0 %v2294
  %3521 = vmatpush1.msra.mxu0 %v2293
  %3522 = vmatprep.subr.mxu0 %v2298
  %3523 = vmatpush1.msra.mxu0 %v2297
  %3524 = vmatprep.subr.mxu0 %v2302
  %3525 = vmatpush1.msra.mxu0 %v2301
  %3526 = vmatprep.subr.mxu0 %v2306
  %3527 = vmatpush1.msra.mxu0 %v2305
  %3528 = vmatprep.subr.mxu0 %v2310
  %3529 = vmatpush1.msra.mxu0 %v2309
  %3530 = vmatprep.subr.mxu0 %v2314
  %3531 = vmatpush1.msra.mxu0 %v2313
  %3532 = vmatprep.subr.mxu0 0.0
  %3533 = vmatpush1.msra.mxu0 0.0
  %3534 = vmatprep.subr.mxu0 0.0
  %3535 = vmatpush1.msra.mxu0 0.0
  %3536 = vmatprep.subr.mxu0 0.0
  %3537 = vmatpush1.msra.mxu0 0.0
  %3538 = vmatprep.subr.mxu0 0.0
  %3539 = vmatpush1.msra.mxu0 0.0
  %3540 = vmatprep.subr.mxu0 0.0
  %3541 = vmatpush1.msra.mxu0 0.0
  %3542 = vmatprep.subr.mxu0 0.0
  %3543 = vmatpush1.msra.mxu0 0.0
  %3544 = vmatprep.subr.mxu0 0.0
  %3545 = vmatpush1.msra.mxu0 0.0
  %3546 = vmatprep.subr.mxu0 0.0
  %3547 = vmatpush1.msra.mxu0 0.0
  %3548 = vmatprep.subr.mxu0 0.0
  %3549 = vmatpush1.msra.mxu0 0.0
  %3550 = vmatprep.subr.mxu0 0.0
  %3551 = vmatpush1.msra.mxu0 0.0
  %3552 = vmatprep.subr.mxu0 0.0
  %3553 = vmatpush1.msra.mxu0 0.0
  %3554 = vmatprep.subr.mxu0 0.0
  %3555 = vmatpush1.msra.mxu0 0.0
  %3556 = vmatprep.subr.mxu0 0.0
  %3557 = vmatpush1.msra.mxu0 0.0
  %3558 = vmatprep.subr.mxu0 0.0
  %3559 = vmatpush1.msra.mxu0 0.0
  %3560 = vmatprep.subr.mxu0 0.0
  %3561 = vmatpush1.msra.mxu0 0.0
  %3562 = vmatprep.subr.mxu0 0.0
  %3563 = vmatpush1.msra.mxu0 0.0
  %3564 = vmatprep.mubr.f32.mxu0 0.0
  %3565 = vmatmul.mubr.f32.gmra.mrb[0].mxu0 %v3494
  %v3566 = vpop.f32.mrb[0].mxu0
  %v3567 = vadd.f32 0.0, %v3566
  %v3568 = vpop.f32.mrb[0].mxu0
  %v3569 = vadd.f32 0.0, %v3568
  %3570 = vdwg.mxu0
  %3571 = vmatprep.subr.mxu0 %v2256
  %3572 = vmatpush1.msra.mxu0 %v2255
  %3573 = vmatprep.subr.mxu0 %v2260
  %3574 = vmatpush1.msra.mxu0 %v2259
  %3575 = vmatprep.subr.mxu0 %v2264
  %3576 = vmatpush1.msra.mxu0 %v2263
  %3577 = vmatprep.subr.mxu0 %v2268
  %3578 = vmatpush1.msra.mxu0 %v2267
  %3579 = vmatprep.subr.mxu0 %v2272
  %3580 = vmatpush1.msra.mxu0 %v2271
  %3581 = vmatprep.subr.mxu0 %v2276
  %3582 = vmatpush1.msra.mxu0 %v2275
  %3583 = vmatprep.subr.mxu0 %v2280
  %3584 = vmatpush1.msra.mxu0 %v2279
  %3585 = vmatprep.subr.mxu0 %v2284
  %3586 = vmatpush1.msra.mxu0 %v2283
  %3587 = vmatprep.subr.mxu0 %v2288
  %3588 = vmatpush1.msra.mxu0 %v2287
  %3589 = vmatprep.subr.mxu0 %v2292
  %3590 = vmatpush1.msra.mxu0 %v2291
  %3591 = vmatprep.subr.mxu0 %v2296
  %3592 = vmatpush1.msra.mxu0 %v2295
  %3593 = vmatprep.subr.mxu0 %v2300
  %3594 = vmatpush1.msra.mxu0 %v2299
  %3595 = vmatprep.subr.mxu0 %v2304
  %3596 = vmatpush1.msra.mxu0 %v2303
  %3597 = vmatprep.subr.mxu0 %v2308
  %3598 = vmatpush1.msra.mxu0 %v2307
  %3599 = vmatprep.subr.mxu0 %v2312
  %3600 = vmatpush1.msra.mxu0 %v2311
  %3601 = vmatprep.subr.mxu0 %v2316
  %3602 = vmatpush1.msra.mxu0 %v2315
  %3603 = vmatprep.subr.mxu0 0.0
  %3604 = vmatpush1.msra.mxu0 0.0
  %3605 = vmatprep.subr.mxu0 0.0
  %3606 = vmatpush1.msra.mxu0 0.0
  %3607 = vmatprep.subr.mxu0 0.0
  %3608 = vmatpush1.msra.mxu0 0.0
  %3609 = vmatprep.subr.mxu0 0.0
  %3610 = vmatpush1.msra.mxu0 0.0
  %3611 = vmatprep.subr.mxu0 0.0
  %3612 = vmatpush1.msra.mxu0 0.0
  %3613 = vmatprep.subr.mxu0 0.0
  %3614 = vmatpush1.msra.mxu0 0.0
  %3615 = vmatprep.subr.mxu0 0.0
  %3616 = vmatpush1.msra.mxu0 0.0
  %3617 = vmatprep.subr.mxu0 0.0
  %3618 = vmatpush1.msra.mxu0 0.0
  %3619 = vmatprep.subr.mxu0 0.0
  %3620 = vmatpush1.msra.mxu0 0.0
  %3621 = vmatprep.subr.mxu0 0.0
  %3622 = vmatpush1.msra.mxu0 0.0
  %3623 = vmatprep.subr.mxu0 0.0
  %3624 = vmatpush1.msra.mxu0 0.0
  %3625 = vmatprep.subr.mxu0 0.0
  %3626 = vmatpush1.msra.mxu0 0.0
  %3627 = vmatprep.subr.mxu0 0.0
  %3628 = vmatpush1.msra.mxu0 0.0
  %3629 = vmatprep.subr.mxu0 0.0
  %3630 = vmatpush1.msra.mxu0 0.0
  %3631 = vmatprep.subr.mxu0 0.0
  %3632 = vmatpush1.msra.mxu0 0.0
  %3633 = vmatprep.subr.mxu0 0.0
  %3634 = vmatpush1.msra.mxu0 0.0
  %3635 = vmatprep.mubr.f32.mxu0 0.0
  %3636 = vmatmul.mubr.f32.gmra.mrb[0].mxu0 %v3494
  %v3637 = vpop.f32.mrb[0].mxu0
  %v3638 = vadd.f32 0.0, %v3637
  %v3639 = vpop.f32.mrb[0].mxu0
  %v3640 = vadd.f32 0.0, %v3639
  %3641 = vdwg.mxu0
  %v3642 = vadd.f32 %v3496, %v3567
  %v3643 = vadd.f32 %v3497, %v3569
  %v3644 = vadd.f32 %v3498, %v3638
  %v3645 = vadd.f32 %v3499, %v3640
  %v3646 = vmul.f32 %v3642, 0.5
  %v3647 = vmul.f32 %v3643, 0.5
  %v3648 = vmul.f32 %v3644, 0.5
  %v3649 = vtanh.pop %v3646
  %v3650 = vtanh.pop %v3647
  %v3651 = vtanh.pop %v3648
  %v3652 = vmul.f32 %v3649, 0.5
  %v3653 = vmul.f32 %v3650, 0.5
  %v3654 = vmul.f32 %v3651, 0.5
  %v3655 = vadd.f32 %v3652, 0.5
  %v3656 = vadd.f32 %v3653, 0.5
  %v3657 = vadd.f32 %v3654, 0.5
  %v3658 = vtanh.pop %v3645
  %v3659 = vmul.f32 %v3656, %v3492
  %v3660 = vmul.f32 %v3655, %v3658
  %v3661 = vadd.f32 %v3659, %v3660
  %v3662 = vtanh.pop %v3661
  %v3663 = vmul.f32 %v3657, %v3662
  %s3664 = scalar_lea.vmem %s4, 8
  %3665 = vst [vmem:[%s3664] sm:$0xff] %v3663
  // Predicated region
  $region18: #{_lambda_.1} parent=0 // pred_check
    _
  $region19: #{_lambda_.1} parent=0 // pred_check_branch
    %3667 = sbr.rel (0) target = $region21
  $region20: #{_lambda_.1} parent=0 // pred_region
    _
  $region21: #{_lambda_.1} parent=0 // pred_fallthru
    _
  // Predicated region
  $region22: #{_lambda_.1} parent=0 // pred_check
    _
  $region23: #{_lambda_.1} parent=0 // pred_check_branch
    %3669 = sbr.rel (0) target = $region25
  $region24: #{_lambda_.1} parent=0 // pred_region
    _
  $region25: #{_lambda_.1} parent=0 // pred_fallthru
    _

</llo_original>
